<compile_context>
chip_gen: v7x
topology: tpu7x:2x2x1
jax: 0.10.0
libtpu: 0.0.40
codegen_flags: <defaults>
</compile_context>

<pallas_src>
import functools

import jax
import jax.numpy as jnp
from jax.experimental import pallas as pl
from jax.experimental.pallas import tpu as pltpu

EPS = 1e-5


def _round_up(n, m):
    return ((n + m - 1) // m) * m


# --------------------------------------------------------------------------
# In-kernel BatchNorm (training mode, biased variance) — one-pass statistics.
# --------------------------------------------------------------------------
def _bn_train(h, gamma, beta):
    m = jnp.mean(h, axis=0, keepdims=True)
    m2 = jnp.mean(h * h, axis=0, keepdims=True)
    var = jnp.maximum(m2 - m * m, 0.0)
    return gamma * (h - m) * jax.lax.rsqrt(var + EPS) + beta


# --------------------------------------------------------------------------
# Fused predictor kernel: cls head + all C loc heads, three MXU passes total
# for the loc heads (wide layer-1, block-diag layer-2, block-diag layer-3).
# --------------------------------------------------------------------------
def _predictor_kernel(x_ref, w1_ref, lv1_ref, w2_ref, b2_ref,
                      wb_ref, lv2_ref, wc_ref, bc_ref,
                      cls_ref, loc_ref, *, Hcp):
    # x already carries a constant-1 column that folds the layer-1 biases
    # into the matmul (remaining padded K columns are zero).
    x = x_ref[...].astype(jnp.bfloat16)                       # (B, Fp)

    # ---- layer 1 of cls head + all loc heads: one wide bf16 MXU pass -------
    h1 = jnp.dot(x, w1_ref[...], preferred_element_type=jnp.float32)  # (B, Wtot)
    h1 = jnp.maximum(h1, 0.0)                                  # bias already folded
    lv1 = lv1_ref[...]                                         # (2, Wtot): gamma; beta
    h1 = _bn_train(h1, lv1[0:1, :], lv1[1:2, :])               # whole-slab BN (exact)

    # ---- classification head (first Hcp columns: lane-aligned view) --------
    cls = jnp.dot(h1[:, :Hcp], w2_ref[...], preferred_element_type=jnp.float32)
    cls_ref[...] = (cls + b2_ref[...]).astype(cls_ref.dtype)

    # ---- localization heads: block-diagonal layer 2 then layer 3 -----------
    h1_loc = h1[:, Hcp:].astype(jnp.bfloat16)                  # (B, C*Hp) aligned view
    h2 = jnp.dot(h1_loc, wb_ref[...], preferred_element_type=jnp.float32)  # (B, C*H2p)
    lv2 = lv2_ref[...]                                         # (3, C*H2p): bias; gamma; beta
    h2 = jnp.maximum(h2 + lv2[0:1, :], 0.0)
    h2 = _bn_train(h2, lv2[1:2, :], lv2[2:3, :])               # whole-slab BN (exact)

    loc = jnp.dot(h2, wc_ref[...], preferred_element_type=jnp.float32) + bc_ref[...]
    loc_ref[...] = loc.astype(loc_ref.dtype)                   # one (B, C*L) slab store


# --------------------------------------------------------------------------
# One-time parameter repacking (NOT part of the jitted forward path).
# --------------------------------------------------------------------------
def pack_params(cls_params, loc_params):
    F, Hc = cls_params["w1"].shape
    C = cls_params["w2"].shape[1]
    H1 = loc_params["wa"].shape[2]
    H2 = loc_params["wb"].shape[2]
    L = loc_params["wc"].shape[2]

    Fp = _round_up(F + 1, 128)       # +1 for the bias row -> 384
    Hcp = _round_up(Hc, 128)         # 64  -> 128
    Hp = _round_up(H1, 128)          # 300 -> 384
    H2p = _round_up(H2, 128)         # 64  -> 128

    def pad2(a, rows, cols):
        return jnp.pad(a, ((0, rows - a.shape[0]), (0, cols - a.shape[1])))

    # Layer 1: [cls | loc_0 | ... | loc_{C-1}] lane-aligned column blocks,
    # biases stored in row F (picked up by the constant-1 column of x).
    blocks = [pad2(jnp.concatenate([cls_params["w1"], cls_params["b1"]], axis=0), Fp, Hcp)]
    for i in range(C):
        blocks.append(pad2(jnp.concatenate(
            [loc_params["wa"][i], loc_params["ba"][i][None, :]], axis=0), Fp, Hp))
    w1_all = jnp.concatenate(blocks, axis=1).astype(jnp.bfloat16)      # (Fp, Hcp + C*Hp)

    # Layer-1 BN gamma/beta in the same column layout (zeros in padded lanes
    # keep padded columns exactly 0 through ReLU+BN).
    def cat_row(cls_vec, loc_vecs):
        row = [pad2(cls_vec, 1, Hcp)]
        row += [pad2(loc_vecs[i][None, :], 1, Hp) for i in range(C)]
        return jnp.concatenate(row, axis=1)
    lv1 = jnp.concatenate([cat_row(cls_params["g1"], loc_params["ga"]),
                           cat_row(cls_params["be1"], loc_params["bea"])],
                          axis=0).astype(jnp.float32)                  # (2, Wtot)

    # cls layer 2 (tiny, keep f32; padded rows are zero).
    w2_p = pad2(cls_params["w2"], Hcp, C).astype(jnp.float32)          # (Hcp, C)
    b2 = cls_params["b2"].astype(jnp.float32)                          # (1, C)

    # loc layer 2: block-diagonal, bf16.
    wb_bd = jnp.zeros((C * Hp, C * H2p), jnp.float32)
    for i in range(C):
        wb_bd = wb_bd.at[i * Hp:i * Hp + H1, i * H2p:i * H2p + H2].set(loc_params["wb"][i])
    wb_bd = wb_bd.astype(jnp.bfloat16)                                 # (C*Hp, C*H2p)

    def cat_loc(vecs):            # (C, n) -> (1, C*H2p), zero-padded per block
        return jnp.concatenate([pad2(vecs[i][None, :], 1, H2p) for i in range(C)], axis=1)
    lv2 = jnp.concatenate([cat_loc(loc_params["bb"]), cat_loc(loc_params["gb"]),
                           cat_loc(loc_params["beb"])], axis=0).astype(jnp.float32)

    # loc layer 3: block-diagonal, tiny -> f32.
    wc_bd = jnp.zeros((C * H2p, C * L), jnp.float32)
    for i in range(C):
        wc_bd = wc_bd.at[i * H2p:i * H2p + H2, i * L:(i + 1) * L].set(loc_params["wc"][i])
    bc = loc_params["bc"].reshape(1, C * L).astype(jnp.float32)

    return dict(w1_all=w1_all, lv1=lv1, w2_p=w2_p, b2=b2,
                wb_bd=wb_bd, lv2=lv2, wc_bd=wc_bd, bc=bc)


# --------------------------------------------------------------------------
# Jitted forward: only pads the activation and launches one pallas_call.
# --------------------------------------------------------------------------
def predictor_pallas(feature, packed):
    B, F = feature.shape
    Fp, _ = packed["w1_all"].shape
    Hcp, C = packed["w2_p"].shape
    CL = packed["bc"].shape[1]
    L = CL // C

    # Pad features to the aligned K dim; column F carries the folded biases.
    x_p = jnp.concatenate(
        [feature.astype(jnp.float32),
         jnp.ones((B, 1), jnp.float32),
         jnp.zeros((B, Fp - F - 1), jnp.float32)], axis=1)

    full = lambda shape: pl.BlockSpec(shape, lambda: (0,) * len(shape))
    kernel = functools.partial(_predictor_kernel, Hcp=Hcp)

    cls_out, loc_flat = pl.pallas_call(
        kernel,
        out_shape=(jax.ShapeDtypeStruct((B, C), jnp.float32),
                   jax.ShapeDtypeStruct((B, CL), jnp.float32)),
        grid_spec=pltpu.PrefetchScalarGridSpec(
            num_scalar_prefetch=0,
            grid=(),
            in_specs=[full(x_p.shape),
                      full(packed["w1_all"].shape),
                      full(packed["lv1"].shape),
                      full(packed["w2_p"].shape),
                      full(packed["b2"].shape),
                      full(packed["wb_bd"].shape),
                      full(packed["lv2"].shape),
                      full(packed["wc_bd"].shape),
                      full(packed["bc"].shape)],
            out_specs=(full((B, C)), full((B, CL))),
        ),
    )(x_p, packed["w1_all"], packed["lv1"], packed["w2_p"], packed["b2"],
      packed["wb_bd"], packed["lv2"], packed["wc_bd"], packed["bc"])

    return cls_out, loc_flat.reshape(B, C, L)


predictor_forward = jax.jit(predictor_pallas)


# --------------------------------------------------------------------------
# Parameter init (deterministic, synthetic) + pure-JAX reference
# --------------------------------------------------------------------------
def init_params(key, pred_cls_num, pred_loc_len,
                cls_layers=(300, 64), loc_layers=(300, 300, 64)):
    ks = iter(jax.random.split(key, 32))
    s = lambda fan_in: 1.0 / jnp.sqrt(jnp.float32(fan_in))

    F, H = cls_layers
    C, L = pred_cls_num, pred_loc_len
    Fa, Ha, Hb = loc_layers

    cls = dict(
        w1=jax.random.normal(next(ks), (F, H), jnp.float32) * s(F),
        b1=jax.random.normal(next(ks), (1, H), jnp.float32) * 0.1,
        g1=1.0 + 0.05 * jax.random.normal(next(ks), (1, H), jnp.float32),
        be1=0.05 * jax.random.normal(next(ks), (1, H), jnp.float32),
        w2=jax.random.normal(next(ks), (H, C), jnp.float32) * s(H),
        b2=jax.random.normal(next(ks), (1, C), jnp.float32) * 0.1,
    )
    loc = dict(
        wa=jax.random.normal(next(ks), (C, Fa, Ha), jnp.float32) * s(Fa),
        ba=jax.random.normal(next(ks), (C, Ha), jnp.float32) * 0.1,
        ga=1.0 + 0.05 * jax.random.normal(next(ks), (C, Ha), jnp.float32),
        bea=0.05 * jax.random.normal(next(ks), (C, Ha), jnp.float32),
        wb=jax.random.normal(next(ks), (C, Ha, Hb), jnp.float32) * s(Ha),
        bb=jax.random.normal(next(ks), (C, Hb), jnp.float32) * 0.1,
        gb=1.0 + 0.05 * jax.random.normal(next(ks), (C, Hb), jnp.float32),
        beb=0.05 * jax.random.normal(next(ks), (C, Hb), jnp.float32),
        wc=jax.random.normal(next(ks), (C, Hb, L), jnp.float32) * s(Hb),
        bc=jax.random.normal(next(ks), (C, L), jnp.float32) * 0.1,
    )
    return cls, loc


def _bn_ref(h, gamma, beta):
    # PyTorch training-mode BN: two-pass batch stats, biased variance.
    mean = jnp.mean(h, axis=0, keepdims=True)
    var = jnp.mean((h - mean) ** 2, axis=0, keepdims=True)
    return gamma * (h - mean) * jax.lax.rsqrt(var + EPS) + beta


def _mxu_dot(a, b):
    # Same numerics as the kernel's hidden-layer matmuls: bf16 multiply with
    # f32 accumulation (native MXU path on v5e/v6e/v7x).
    return jnp.dot(a.astype(jnp.bfloat16), b.astype(jnp.bfloat16),
                   preferred_element_type=jnp.float32)


def predictor_reference(feature, cls_params, loc_params):
    # Pure-JAX mirror of the PyTorch forward; hidden-layer matmuls use the
    # same bf16-multiply / f32-accumulate numerics as the kernel so the check
    # isolates kernel correctness from the bf16 weight-storage policy.
    p = cls_params
    h = jnp.maximum(_mxu_dot(feature, p["w1"]) + p["b1"], 0.0)
    h = _bn_ref(h, p["g1"], p["be1"])
    pred_cls = h @ p["w2"] + p["b2"]

    q = loc_params
    C = q["wa"].shape[0]
    locs = []
    for i in range(C):
        h = jnp.maximum(_mxu_dot(feature, q["wa"][i]) + q["ba"][i][None, :], 0.0)
        h = _bn_ref(h, q["ga"][i][None, :], q["bea"][i][None, :])
        h = jnp.maximum(_mxu_dot(h, q["wb"][i]) + q["bb"][i][None, :], 0.0)
        h = _bn_ref(h, q["gb"][i][None, :], q["beb"][i][None, :])
        locs.append((h @ q["wc"][i] + q["bc"][i][None, :])[:, None, :])
    pred_loc = jnp.concatenate(locs, axis=1)
    return pred_cls, pred_loc


if __name__ == "__main__":
    B = 8              # batch (>=2 so BatchNorm batch-stats are well-defined)
    F = 300            # input feature dim from default layer lists
    PRED_CLS_NUM = 3
    PRED_LOC_LEN = 4

    key = jax.random.PRNGKey(0)
    k_feat, k_par = jax.random.split(key)
    feature = jax.random.normal(k_feat, (B, F), jnp.float32)
    cls_params, loc_params = init_params(k_par, PRED_CLS_NUM, PRED_LOC_LEN)

    # One-time weight repack/padding/bf16 cast — outside the jitted forward.
    packed = pack_params(cls_params, loc_params)
    jax.block_until_ready(packed)

    pred_cls, pred_loc = predictor_forward(feature, packed)
    jax.block_until_ready((pred_cls, pred_loc))

    # Reference uses the same bf16-rounded values for the weights the kernel
    # stores in bf16 (w1/b1, wa/ba, wb); everything else stays f32.
    rt = lambda a: a.astype(jnp.bfloat16).astype(jnp.float32)
    cls_ref_p = dict(cls_params, w1=rt(cls_params["w1"]), b1=rt(cls_params["b1"]))
    loc_ref_p = dict(loc_params, wa=rt(loc_params["wa"]), ba=rt(loc_params["ba"]),
                     wb=rt(loc_params["wb"]))
    ref_cls, ref_loc = predictor_reference(feature, cls_ref_p, loc_ref_p)

    assert pred_cls.shape == (B, PRED_CLS_NUM)
    assert pred_loc.shape == (B, PRED_CLS_NUM, PRED_LOC_LEN)
    assert jnp.allclose(pred_cls, ref_cls, rtol=1e-2, atol=1e-2)
    assert jnp.allclose(pred_loc, ref_loc, rtol=1e-2, atol=1e-2)

    print("KERNEL_OK")
</pallas_src>

<mosaic_0001>
module attributes {stable_mosaic.version = 11 : i64} {
  func.func @_predictor_kernel(%arg0: memref<8x384xf32, #tpu.memory_space<vmem>>, %arg1: memref<384x1280xbf16, #tpu.memory_space<vmem>>, %arg2: memref<2x1280xf32, #tpu.memory_space<vmem>>, %arg3: memref<128x3xf32, #tpu.memory_space<vmem>>, %arg4: memref<1x3xf32, #tpu.memory_space<vmem>>, %arg5: memref<1152x384xbf16, #tpu.memory_space<vmem>>, %arg6: memref<3x384xf32, #tpu.memory_space<vmem>>, %arg7: memref<384x12xf32, #tpu.memory_space<vmem>>, %arg8: memref<1x12xf32, #tpu.memory_space<vmem>>, %arg9: memref<8x3xf32, #tpu.memory_space<vmem>>, %arg10: memref<8x12xf32, #tpu.memory_space<vmem>>) attributes {dimension_semantics = [], scalar_prefetch = 0 : i64, scratch_operands = 0 : i64, tpu.core_type = #tpu.core_type<tc>} {
    %c0 = arith.constant 0 : index
    %c0_0 = arith.constant 0 : index
    %0 = vector.load %arg0[%c0, %c0_0] : memref<8x384xf32, #tpu.memory_space<vmem>>, vector<8x384xf32>
    %1 = arith.truncf %0 : vector<8x384xf32> to vector<8x384xbf16>
    %c0_1 = arith.constant 0 : index
    %c0_2 = arith.constant 0 : index
    %2 = vector.load %arg1[%c0_1, %c0_2] : memref<384x1280xbf16, #tpu.memory_space<vmem>>, vector<384x1280xbf16>
    %cst = arith.constant dense<0.000000e+00> : vector<8x1280xf32>
    %3 = tpu.matmul %1, %2, %cst {dimension_numbers = #tpu.dot_dimension_numbers<[1], [0], [0], [1], [0, 0, 1, 1], [], []>} : vector<8x384xbf16>, vector<384x1280xbf16>, vector<8x1280xf32> -> vector<8x1280xf32>
    %cst_3 = arith.constant 0.000000e+00 : f32
    %4 = vector.broadcast %cst_3 : f32 to vector<8x1280xf32>
    %5 = arith.maximumf %3, %4 : vector<8x1280xf32>
    %c0_4 = arith.constant 0 : index
    %c0_5 = arith.constant 0 : index
    %6 = vector.load %arg2[%c0_4, %c0_5] : memref<2x1280xf32, #tpu.memory_space<vmem>>, vector<2x1280xf32>
    %7 = vector.extract_strided_slice %6 {offsets = [0, 0], sizes = [1, 1280], strides = [1, 1]} : vector<2x1280xf32> to vector<1x1280xf32>
    %8 = vector.extract_strided_slice %6 {offsets = [1, 0], sizes = [1, 1280], strides = [1, 1]} : vector<2x1280xf32> to vector<1x1280xf32>
    %cst_6 = arith.constant dense<0.000000e+00> : vector<1280xf32>
    %9 = vector.multi_reduction <add>, %5, %cst_6 [0] : vector<8x1280xf32> to vector<1280xf32>
    %10 = vector.shape_cast %9 : vector<1280xf32> to vector<1x1280xf32>
    %cst_7 = arith.constant 8.000000e+00 : f32
    %11 = vector.broadcast %cst_7 : f32 to vector<1x1280xf32>
    %12 = arith.divf %10, %11 : vector<1x1280xf32>
    %13 = arith.mulf %5, %5 : vector<8x1280xf32>
    %cst_8 = arith.constant dense<0.000000e+00> : vector<1280xf32>
    %14 = vector.multi_reduction <add>, %13, %cst_8 [0] : vector<8x1280xf32> to vector<1280xf32>
    %15 = vector.shape_cast %14 : vector<1280xf32> to vector<1x1280xf32>
    %cst_9 = arith.constant 8.000000e+00 : f32
    %16 = vector.broadcast %cst_9 : f32 to vector<1x1280xf32>
    %17 = arith.divf %15, %16 : vector<1x1280xf32>
    %18 = arith.mulf %12, %12 : vector<1x1280xf32>
    %19 = arith.subf %17, %18 : vector<1x1280xf32>
    %cst_10 = arith.constant 0.000000e+00 : f32
    %20 = vector.broadcast %cst_10 : f32 to vector<1x1280xf32>
    %21 = arith.maximumf %19, %20 : vector<1x1280xf32>
    %22 = vector.broadcast %12 : vector<1x1280xf32> to vector<8x1280xf32>
    %23 = arith.subf %5, %22 : vector<8x1280xf32>
    %24 = vector.broadcast %7 : vector<1x1280xf32> to vector<8x1280xf32>
    %25 = arith.mulf %24, %23 : vector<8x1280xf32>
    %cst_11 = arith.constant 9.99999974E-6 : f32
    %26 = vector.broadcast %cst_11 : f32 to vector<1x1280xf32>
    %27 = arith.addf %21, %26 : vector<1x1280xf32>
    %28 = math.rsqrt %27 : vector<1x1280xf32>
    %29 = vector.broadcast %28 : vector<1x1280xf32> to vector<8x1280xf32>
    %30 = arith.mulf %25, %29 : vector<8x1280xf32>
    %31 = vector.broadcast %8 : vector<1x1280xf32> to vector<8x1280xf32>
    %32 = arith.addf %30, %31 : vector<8x1280xf32>
    %33 = vector.extract_strided_slice %32 {offsets = [0, 0], sizes = [8, 128], strides = [1, 1]} : vector<8x1280xf32> to vector<8x128xf32>
    %c0_12 = arith.constant 0 : index
    %c0_13 = arith.constant 0 : index
    %34 = vector.load %arg3[%c0_12, %c0_13] : memref<128x3xf32, #tpu.memory_space<vmem>>, vector<128x3xf32>
    %cst_14 = arith.constant dense<0.000000e+00> : vector<8x3xf32>
    %35 = tpu.matmul %33, %34, %cst_14 {dimension_numbers = #tpu.dot_dimension_numbers<[1], [0], [0], [1], [0, 0, 1, 1], [], []>} : vector<8x128xf32>, vector<128x3xf32>, vector<8x3xf32> -> vector<8x3xf32>
    %c0_15 = arith.constant 0 : index
    %c0_16 = arith.constant 0 : index
    %36 = vector.load %arg4[%c0_15, %c0_16] : memref<1x3xf32, #tpu.memory_space<vmem>>, vector<1x3xf32>
    %37 = vector.broadcast %36 : vector<1x3xf32> to vector<8x3xf32>
    %38 = arith.addf %35, %37 : vector<8x3xf32>
    %c0_17 = arith.constant 0 : index
    %c0_18 = arith.constant 0 : index
    %39 = vector.load %arg9[%c0_17, %c0_18] : memref<8x3xf32, #tpu.memory_space<vmem>>, vector<8x3xf32>
    tpu.vector_store %arg9[%c0_17, %c0_18], %38 {strides = array<i32>} : memref<8x3xf32, #tpu.memory_space<vmem>>, vector<8x3xf32>,
    %40 = vector.extract_strided_slice %32 {offsets = [0, 128], sizes = [8, 1152], strides = [1, 1]} : vector<8x1280xf32> to vector<8x1152xf32>
    %41 = arith.truncf %40 : vector<8x1152xf32> to vector<8x1152xbf16>
    %c0_19 = arith.constant 0 : index
    %c0_20 = arith.constant 0 : index
    %42 = vector.load %arg5[%c0_19, %c0_20] : memref<1152x384xbf16, #tpu.memory_space<vmem>>, vector<1152x384xbf16>
    %cst_21 = arith.constant dense<0.000000e+00> : vector<8x384xf32>
    %43 = tpu.matmul %41, %42, %cst_21 {dimension_numbers = #tpu.dot_dimension_numbers<[1], [0], [0], [1], [0, 0, 1, 1], [], []>} : vector<8x1152xbf16>, vector<1152x384xbf16>, vector<8x384xf32> -> vector<8x384xf32>
    %c0_22 = arith.constant 0 : index
    %c0_23 = arith.constant 0 : index
    %44 = vector.load %arg6[%c0_22, %c0_23] : memref<3x384xf32, #tpu.memory_space<vmem>>, vector<3x384xf32>
    %45 = vector.extract_strided_slice %44 {offsets = [0, 0], sizes = [1, 384], strides = [1, 1]} : vector<3x384xf32> to vector<1x384xf32>
    %46 = vector.broadcast %45 : vector<1x384xf32> to vector<8x384xf32>
    %47 = arith.addf %43, %46 : vector<8x384xf32>
    %cst_24 = arith.constant 0.000000e+00 : f32
    %48 = vector.broadcast %cst_24 : f32 to vector<8x384xf32>
    %49 = arith.maximumf %47, %48 : vector<8x384xf32>
    %50 = vector.extract_strided_slice %44 {offsets = [1, 0], sizes = [1, 384], strides = [1, 1]} : vector<3x384xf32> to vector<1x384xf32>
    %51 = vector.extract_strided_slice %44 {offsets = [2, 0], sizes = [1, 384], strides = [1, 1]} : vector<3x384xf32> to vector<1x384xf32>
    %cst_25 = arith.constant dense<0.000000e+00> : vector<384xf32>
    %52 = vector.multi_reduction <add>, %49, %cst_25 [0] : vector<8x384xf32> to vector<384xf32>
    %53 = vector.shape_cast %52 : vector<384xf32> to vector<1x384xf32>
    %cst_26 = arith.constant 8.000000e+00 : f32
    %54 = vector.broadcast %cst_26 : f32 to vector<1x384xf32>
    %55 = arith.divf %53, %54 : vector<1x384xf32>
    %56 = arith.mulf %49, %49 : vector<8x384xf32>
    %cst_27 = arith.constant dense<0.000000e+00> : vector<384xf32>
    %57 = vector.multi_reduction <add>, %56, %cst_27 [0] : vector<8x384xf32> to vector<384xf32>
    %58 = vector.shape_cast %57 : vector<384xf32> to vector<1x384xf32>
    %cst_28 = arith.constant 8.000000e+00 : f32
    %59 = vector.broadcast %cst_28 : f32 to vector<1x384xf32>
    %60 = arith.divf %58, %59 : vector<1x384xf32>
    %61 = arith.mulf %55, %55 : vector<1x384xf32>
    %62 = arith.subf %60, %61 : vector<1x384xf32>
    %cst_29 = arith.constant 0.000000e+00 : f32
    %63 = vector.broadcast %cst_29 : f32 to vector<1x384xf32>
    %64 = arith.maximumf %62, %63 : vector<1x384xf32>
    %65 = vector.broadcast %55 : vector<1x384xf32> to vector<8x384xf32>
    %66 = arith.subf %49, %65 : vector<8x384xf32>
    %67 = vector.broadcast %50 : vector<1x384xf32> to vector<8x384xf32>
    %68 = arith.mulf %67, %66 : vector<8x384xf32>
    %cst_30 = arith.constant 9.99999974E-6 : f32
    %69 = vector.broadcast %cst_30 : f32 to vector<1x384xf32>
    %70 = arith.addf %64, %69 : vector<1x384xf32>
    %71 = math.rsqrt %70 : vector<1x384xf32>
    %72 = vector.broadcast %71 : vector<1x384xf32> to vector<8x384xf32>
    %73 = arith.mulf %68, %72 : vector<8x384xf32>
    %74 = vector.broadcast %51 : vector<1x384xf32> to vector<8x384xf32>
    %75 = arith.addf %73, %74 : vector<8x384xf32>
    %c0_31 = arith.constant 0 : index
    %c0_32 = arith.constant 0 : index
    %76 = vector.load %arg7[%c0_31, %c0_32] : memref<384x12xf32, #tpu.memory_space<vmem>>, vector<384x12xf32>
    %cst_33 = arith.constant dense<0.000000e+00> : vector<8x12xf32>
    %77 = tpu.matmul %75, %76, %cst_33 {dimension_numbers = #tpu.dot_dimension_numbers<[1], [0], [0], [1], [0, 0, 1, 1], [], []>} : vector<8x384xf32>, vector<384x12xf32>, vector<8x12xf32> -> vector<8x12xf32>
    %c0_34 = arith.constant 0 : index
    %c0_35 = arith.constant 0 : index
    %78 = vector.load %arg8[%c0_34, %c0_35] : memref<1x12xf32, #tpu.memory_space<vmem>>, vector<1x12xf32>
    %79 = vector.broadcast %78 : vector<1x12xf32> to vector<8x12xf32>
    %80 = arith.addf %77, %79 : vector<8x12xf32>
    %c0_36 = arith.constant 0 : index
    %c0_37 = arith.constant 0 : index
    %81 = vector.load %arg10[%c0_36, %c0_37] : memref<8x12xf32, #tpu.memory_space<vmem>>, vector<8x12xf32>
    tpu.vector_store %arg10[%c0_36, %c0_37], %80 {strides = array<i32>} : memref<8x12xf32, #tpu.memory_space<vmem>>, vector<8x12xf32>,
    return
  }
}

</mosaic_0001>

<llo_original>
// kernel: predictor_pallas.1
$region0: #{predictor_pallas.1}
  #allocation0 [shape = 'u32[]', space=smem, size = 0x4, offset = 0x4, fixed_abs, tag = 'smem constant byte address 0x4 - core index']
  #allocation1 [shape = 'u32[144,128]{1,0:T(1,128)}', space=vmem, size = 0x12000, scoped, tag = 'internal scratch']
  %s0 = inlined_call_operand.vmem [shape: f32[8,384], index: 0, kind: input, shape index: {}]
  %s1 = inlined_call_operand.hbm [shape: bf16[384,1280], index: 1, kind: input, shape index: {}]
  %s2 = inlined_call_operand.vmem [shape: f32[2,1280], index: 2, kind: input, shape index: {}]
  %s3 = inlined_call_operand.vmem [shape: f32[128,3], index: 3, kind: input, shape index: {}]
  %s4 = inlined_call_operand.vmem [shape: f32[1,3], index: 4, kind: input, shape index: {}]
  %s5 = inlined_call_operand.hbm [shape: bf16[1152,384], index: 5, kind: input, shape index: {}]
  %s6 = inlined_call_operand.vmem [shape: f32[3,384], index: 6, kind: input, shape index: {}]
  %s7 = inlined_call_operand.vmem [shape: f32[384,12], index: 7, kind: input, shape index: {}]
  %s8 = inlined_call_operand.vmem [shape: f32[1,12], index: 8, kind: input, shape index: {}]
  %s9 = inlined_call_operand.vmem [shape: f32[8,3], index: 9, kind: output, shape index: {0}]
  %s10 = inlined_call_operand.vmem [shape: f32[8,12], index: 10, kind: output, shape index: {1}]
  %11 = xla_tuple %s9, %s10
  %s12 = sld [smem:[#allocation0]]
  $region62: #{predictor_pallas.1} parent=0
    _
  %s14 = ssub.s32 1, %s12
  %s15 = scalar_select 0, %s14, %s12
  $region1: #{predictor_pallas.1} parent=0
    #allocation2 [shape = 'u8[983040]{0}', space=vmem, size = 0xf0000, scoped, tag = 'input window, operand 1, single buffered']
    #allocation3 [shape = 's32[1]{0}', space=sflag, size = 0x4, scoped, tag = 'scoped memory for predictor_pallas.1']
    #allocation4 [shape = 'u8[884736]{0}', space=vmem, size = 0xd8000, scoped, tag = 'input window, operand 5, single buffered']
    #allocation5 [shape = 's32[1]{0}', space=sflag, size = 0x4, scoped, tag = 'scoped memory for predictor_pallas.1']
    %16 = vsyncpa [#allocation3], 0
    %17 = vsyncpa [#allocation5], 0
    // Predicated region
    $region2: #{predictor_pallas.1} parent=1 // pred_check
      _
    $region3: #{predictor_pallas.1} parent=1 // pred_check_branch
      %19 = sbr.rel (0) target = $region5
    $region4: #{predictor_pallas.1} parent=1 // pred_region
      _
    $region5: #{predictor_pallas.1} parent=1 // pred_fallthru
      _
    // Predicated region
    $region6: #{predictor_pallas.1} parent=1 // pred_check
      _
    $region7: #{predictor_pallas.1} parent=1 // pred_check_branch
      %21 = sbr.rel (0) target = $region9
    $region8: #{predictor_pallas.1} parent=1 // pred_region
      %s23 = ssub.s32 30720, 30720
      %24 = vsyncadd [#allocation3], %s23
      %s25 = sshll.u32 [#allocation2], 4
      %s26 = int_to_ptr.vmem [resolvable:$true] %s25
      %31 = dma.hbm_to_vmem [thread:$0]  %s1, 30720, %s26, [#allocation3], 640, 640, 40
    $region9: #{predictor_pallas.1} parent=1 // pred_fallthru
      _
    // Predicated region
    $region10: #{predictor_pallas.1} parent=1 // pred_check
      _
    $region11: #{predictor_pallas.1} parent=1 // pred_check_branch
      %33 = sbr.rel (0) target = $region13
    $region12: #{predictor_pallas.1} parent=1 // pred_region
      _
    $region13: #{predictor_pallas.1} parent=1 // pred_fallthru
      _
    // Predicated region
    $region14: #{predictor_pallas.1} parent=1 // pred_check
      _
    $region15: #{predictor_pallas.1} parent=1 // pred_check_branch
      %35 = sbr.rel (0) target = $region17
    $region16: #{predictor_pallas.1} parent=1 // pred_region
      _
    $region17: #{predictor_pallas.1} parent=1 // pred_fallthru
      _
    // Predicated region
    $region18: #{predictor_pallas.1} parent=1 // pred_check
      _
    $region19: #{predictor_pallas.1} parent=1 // pred_check_branch
      %37 = sbr.rel (0) target = $region21
    $region20: #{predictor_pallas.1} parent=1 // pred_region
      _
    $region21: #{predictor_pallas.1} parent=1 // pred_fallthru
      _
    // Predicated region
    $region22: #{predictor_pallas.1} parent=1 // pred_check
      _
    $region23: #{predictor_pallas.1} parent=1 // pred_check_branch
      %39 = sbr.rel (0) target = $region25
    $region24: #{predictor_pallas.1} parent=1 // pred_region
      %s41 = ssub.s32 27648, 27648
      %42 = vsyncadd [#allocation5], %s41
      %s43 = sshll.u32 [#allocation4], 4
      %s44 = int_to_ptr.vmem [resolvable:$true] %s43
      %49 = dma.hbm_to_vmem [thread:$0]  %s5, 27648, %s44, [#allocation5], 192, 192, 12
    $region25: #{predictor_pallas.1} parent=1 // pred_fallthru
      _
    // Predicated region
    $region26: #{predictor_pallas.1} parent=1 // pred_check
      _
    $region27: #{predictor_pallas.1} parent=1 // pred_check_branch
      %51 = sbr.rel (0) target = $region29
    $region28: #{predictor_pallas.1} parent=1 // pred_region
      _
    $region29: #{predictor_pallas.1} parent=1 // pred_fallthru
      _
    // Predicated region
    $region30: #{predictor_pallas.1} parent=1 // pred_check
      _
    $region31: #{predictor_pallas.1} parent=1 // pred_check_branch
      %53 = sbr.rel (0) target = $region33
    $region32: #{predictor_pallas.1} parent=1 // pred_region
      _
    $region33: #{predictor_pallas.1} parent=1 // pred_fallthru
      _
    // Predicated region
    $region34: #{predictor_pallas.1} parent=1 // pred_check
      _
    $region35: #{predictor_pallas.1} parent=1 // pred_check_branch
      %55 = sbr.rel (0) target = $region37
    $region36: #{predictor_pallas.1} parent=1 // pred_region
      _
    $region37: #{predictor_pallas.1} parent=1 // pred_fallthru
      _
    // Predicated region
    $region38: #{predictor_pallas.1} parent=1 // pred_check
      _
    $region39: #{predictor_pallas.1} parent=1 // pred_check_branch
      %57 = sbr.rel (0) target = $region41
    $region40: #{predictor_pallas.1} parent=1 // pred_region
      %58 = dma.done [#allocation3], 30720
    $region41: #{predictor_pallas.1} parent=1 // pred_fallthru
      _
    // Predicated region
    $region42: #{predictor_pallas.1} parent=1 // pred_check
      _
    $region43: #{predictor_pallas.1} parent=1 // pred_check_branch
      %60 = sbr.rel (0) target = $region45
    $region44: #{predictor_pallas.1} parent=1 // pred_region
      %61 = dma.done [#allocation5], 27648
    $region45: #{predictor_pallas.1} parent=1 // pred_fallthru
      _
    %v63 = vld [vmem:[%s0] sm:$0xff]
    %v64 = vld [vmem:[%s0 + $0x8] sm:$0xff]
    %v65 = vld [vmem:[%s0 + $0x10] sm:$0xff]
    %v66 = vpack.c.bf16 %v63, %v63
    %v67 = vpack.c.bf16 %v64, %v64
    %v68 = vpack.c.bf16 %v65, %v65
    %v69 = vld [vmem:[#allocation2] sm:$0xff]
    %v70 = vld [vmem:[#allocation2 + $0x8] sm:$0xff]
    %v71 = vld [vmem:[#allocation2 + $0x10] sm:$0xff]
    %v72 = vld [vmem:[#allocation2 + $0x18] sm:$0xff]
    %v73 = vld [vmem:[#allocation2 + $0x20] sm:$0xff]
    %v74 = vld [vmem:[#allocation2 + $0x28] sm:$0xff]
    %v75 = vld [vmem:[#allocation2 + $0x30] sm:$0xff]
    %v76 = vld [vmem:[#allocation2 + $0x38] sm:$0xff]
    %v77 = vld [vmem:[#allocation2 + $0x40] sm:$0xff]
    %v78 = vld [vmem:[#allocation2 + $0x48] sm:$0xff]
    %v79 = vld [vmem:[#allocation2 + $0x50] sm:$0xff]
    %v80 = vld [vmem:[#allocation2 + $0x58] sm:$0xff]
    %v81 = vld [vmem:[#allocation2 + $0x60] sm:$0xff]
    %v82 = vld [vmem:[#allocation2 + $0x68] sm:$0xff]
    %v83 = vld [vmem:[#allocation2 + $0x70] sm:$0xff]
    %v84 = vld [vmem:[#allocation2 + $0x78] sm:$0xff]
    %v85 = vld [vmem:[#allocation2 + $0x80] sm:$0xff]
    %v86 = vld [vmem:[#allocation2 + $0x88] sm:$0xff]
    %v87 = vld [vmem:[#allocation2 + $0x90] sm:$0xff]
    %v88 = vld [vmem:[#allocation2 + $0x98] sm:$0xff]
    %v89 = vld [vmem:[#allocation2 + $0xa0] sm:$0xff]
    %v90 = vld [vmem:[#allocation2 + $0xa8] sm:$0xff]
    %v91 = vld [vmem:[#allocation2 + $0xb0] sm:$0xff]
    %v92 = vld [vmem:[#allocation2 + $0xb8] sm:$0xff]
    %v93 = vld [vmem:[#allocation2 + $0xc0] sm:$0xff]
    %v94 = vld [vmem:[#allocation2 + $0xc8] sm:$0xff]
    %v95 = vld [vmem:[#allocation2 + $0xd0] sm:$0xff]
    %v96 = vld [vmem:[#allocation2 + $0xd8] sm:$0xff]
    %v97 = vld [vmem:[#allocation2 + $0xe0] sm:$0xff]
    %v98 = vld [vmem:[#allocation2 + $0xe8] sm:$0xff]
    %v99 = vld [vmem:[#allocation2 + $0xf0] sm:$0xff]
    %v100 = vld [vmem:[#allocation2 + $0xf8] sm:$0xff]
    %v101 = vld [vmem:[#allocation2 + $0x100] sm:$0xff]
    %v102 = vld [vmem:[#allocation2 + $0x108] sm:$0xff]
    %v103 = vld [vmem:[#allocation2 + $0x110] sm:$0xff]
    %v104 = vld [vmem:[#allocation2 + $0x118] sm:$0xff]
    %v105 = vld [vmem:[#allocation2 + $0x120] sm:$0xff]
    %v106 = vld [vmem:[#allocation2 + $0x128] sm:$0xff]
    %v107 = vld [vmem:[#allocation2 + $0x130] sm:$0xff]
    %v108 = vld [vmem:[#allocation2 + $0x138] sm:$0xff]
    %v109 = vld [vmem:[#allocation2 + $0x140] sm:$0xff]
    %v110 = vld [vmem:[#allocation2 + $0x148] sm:$0xff]
    %v111 = vld [vmem:[#allocation2 + $0x150] sm:$0xff]
    %v112 = vld [vmem:[#allocation2 + $0x158] sm:$0xff]
    %v113 = vld [vmem:[#allocation2 + $0x160] sm:$0xff]
    %v114 = vld [vmem:[#allocation2 + $0x168] sm:$0xff]
    %v115 = vld [vmem:[#allocation2 + $0x170] sm:$0xff]
    %v116 = vld [vmem:[#allocation2 + $0x178] sm:$0xff]
    %v117 = vld [vmem:[#allocation2 + $0x180] sm:$0xff]
    %v118 = vld [vmem:[#allocation2 + $0x188] sm:$0xff]
    %v119 = vld [vmem:[#allocation2 + $0x190] sm:$0xff]
    %v120 = vld [vmem:[#allocation2 + $0x198] sm:$0xff]
    %v121 = vld [vmem:[#allocation2 + $0x1a0] sm:$0xff]
    %v122 = vld [vmem:[#allocation2 + $0x1a8] sm:$0xff]
    %v123 = vld [vmem:[#allocation2 + $0x1b0] sm:$0xff]
    %v124 = vld [vmem:[#allocation2 + $0x1b8] sm:$0xff]
    %v125 = vld [vmem:[#allocation2 + $0x1c0] sm:$0xff]
    %v126 = vld [vmem:[#allocation2 + $0x1c8] sm:$0xff]
    %v127 = vld [vmem:[#allocation2 + $0x1d0] sm:$0xff]
    %v128 = vld [vmem:[#allocation2 + $0x1d8] sm:$0xff]
    %v129 = vld [vmem:[#allocation2 + $0x1e0] sm:$0xff]
    %v130 = vld [vmem:[#allocation2 + $0x1e8] sm:$0xff]
    %v131 = vld [vmem:[#allocation2 + $0x1f0] sm:$0xff]
    %v132 = vld [vmem:[#allocation2 + $0x1f8] sm:$0xff]
    %v133 = vld [vmem:[#allocation2 + $0x200] sm:$0xff]
    %v134 = vld [vmem:[#allocation2 + $0x208] sm:$0xff]
    %v135 = vld [vmem:[#allocation2 + $0x210] sm:$0xff]
    %v136 = vld [vmem:[#allocation2 + $0x218] sm:$0xff]
    %v137 = vld [vmem:[#allocation2 + $0x220] sm:$0xff]
    %v138 = vld [vmem:[#allocation2 + $0x228] sm:$0xff]
    %v139 = vld [vmem:[#allocation2 + $0x230] sm:$0xff]
    %v140 = vld [vmem:[#allocation2 + $0x238] sm:$0xff]
    %v141 = vld [vmem:[#allocation2 + $0x240] sm:$0xff]
    %v142 = vld [vmem:[#allocation2 + $0x248] sm:$0xff]
    %v143 = vld [vmem:[#allocation2 + $0x250] sm:$0xff]
    %v144 = vld [vmem:[#allocation2 + $0x258] sm:$0xff]
    %v145 = vld [vmem:[#allocation2 + $0x260] sm:$0xff]
    %v146 = vld [vmem:[#allocation2 + $0x268] sm:$0xff]
    %v147 = vld [vmem:[#allocation2 + $0x270] sm:$0xff]
    %v148 = vld [vmem:[#allocation2 + $0x278] sm:$0xff]
    %v149 = vld [vmem:[#allocation2 + $0x280] sm:$0xff]
    %v150 = vld [vmem:[#allocation2 + $0x288] sm:$0xff]
    %v151 = vld [vmem:[#allocation2 + $0x290] sm:$0xff]
    %v152 = vld [vmem:[#allocation2 + $0x298] sm:$0xff]
    %v153 = vld [vmem:[#allocation2 + $0x2a0] sm:$0xff]
    %v154 = vld [vmem:[#allocation2 + $0x2a8] sm:$0xff]
    %v155 = vld [vmem:[#allocation2 + $0x2b0] sm:$0xff]
    %v156 = vld [vmem:[#allocation2 + $0x2b8] sm:$0xff]
    %v157 = vld [vmem:[#allocation2 + $0x2c0] sm:$0xff]
    %v158 = vld [vmem:[#allocation2 + $0x2c8] sm:$0xff]
    %v159 = vld [vmem:[#allocation2 + $0x2d0] sm:$0xff]
    %v160 = vld [vmem:[#allocation2 + $0x2d8] sm:$0xff]
    %v161 = vld [vmem:[#allocation2 + $0x2e0] sm:$0xff]
    %v162 = vld [vmem:[#allocation2 + $0x2e8] sm:$0xff]
    %v163 = vld [vmem:[#allocation2 + $0x2f0] sm:$0xff]
    %v164 = vld [vmem:[#allocation2 + $0x2f8] sm:$0xff]
    %v165 = vld [vmem:[#allocation2 + $0x300] sm:$0xff]
    %v166 = vld [vmem:[#allocation2 + $0x308] sm:$0xff]
    %v167 = vld [vmem:[#allocation2 + $0x310] sm:$0xff]
    %v168 = vld [vmem:[#allocation2 + $0x318] sm:$0xff]
    %v169 = vld [vmem:[#allocation2 + $0x320] sm:$0xff]
    %v170 = vld [vmem:[#allocation2 + $0x328] sm:$0xff]
    %v171 = vld [vmem:[#allocation2 + $0x330] sm:$0xff]
    %v172 = vld [vmem:[#allocation2 + $0x338] sm:$0xff]
    %v173 = vld [vmem:[#allocation2 + $0x340] sm:$0xff]
    %v174 = vld [vmem:[#allocation2 + $0x348] sm:$0xff]
    %v175 = vld [vmem:[#allocation2 + $0x350] sm:$0xff]
    %v176 = vld [vmem:[#allocation2 + $0x358] sm:$0xff]
    %v177 = vld [vmem:[#allocation2 + $0x360] sm:$0xff]
    %v178 = vld [vmem:[#allocation2 + $0x368] sm:$0xff]
    %v179 = vld [vmem:[#allocation2 + $0x370] sm:$0xff]
    %v180 = vld [vmem:[#allocation2 + $0x378] sm:$0xff]
    %v181 = vld [vmem:[#allocation2 + $0x380] sm:$0xff]
    %v182 = vld [vmem:[#allocation2 + $0x388] sm:$0xff]
    %v183 = vld [vmem:[#allocation2 + $0x390] sm:$0xff]
    %v184 = vld [vmem:[#allocation2 + $0x398] sm:$0xff]
    %v185 = vld [vmem:[#allocation2 + $0x3a0] sm:$0xff]
    %v186 = vld [vmem:[#allocation2 + $0x3a8] sm:$0xff]
    %v187 = vld [vmem:[#allocation2 + $0x3b0] sm:$0xff]
    %v188 = vld [vmem:[#allocation2 + $0x3b8] sm:$0xff]
    %v189 = vld [vmem:[#allocation2 + $0x3c0] sm:$0xff]
    %v190 = vld [vmem:[#allocation2 + $0x3c8] sm:$0xff]
    %v191 = vld [vmem:[#allocation2 + $0x3d0] sm:$0xff]
    %v192 = vld [vmem:[#allocation2 + $0x3d8] sm:$0xff]
    %v193 = vld [vmem:[#allocation2 + $0x3e0] sm:$0xff]
    %v194 = vld [vmem:[#allocation2 + $0x3e8] sm:$0xff]
    %v195 = vld [vmem:[#allocation2 + $0x3f0] sm:$0xff]
    %v196 = vld [vmem:[#allocation2 + $0x3f8] sm:$0xff]
    %v197 = vld [vmem:[#allocation2 + $0x400] sm:$0xff]
    %v198 = vld [vmem:[#allocation2 + $0x408] sm:$0xff]
    %v199 = vld [vmem:[#allocation2 + $0x410] sm:$0xff]
    %v200 = vld [vmem:[#allocation2 + $0x418] sm:$0xff]
    %v201 = vld [vmem:[#allocation2 + $0x420] sm:$0xff]
    %v202 = vld [vmem:[#allocation2 + $0x428] sm:$0xff]
    %v203 = vld [vmem:[#allocation2 + $0x430] sm:$0xff]
    %v204 = vld [vmem:[#allocation2 + $0x438] sm:$0xff]
    %v205 = vld [vmem:[#allocation2 + $0x440] sm:$0xff]
    %v206 = vld [vmem:[#allocation2 + $0x448] sm:$0xff]
    %v207 = vld [vmem:[#allocation2 + $0x450] sm:$0xff]
    %v208 = vld [vmem:[#allocation2 + $0x458] sm:$0xff]
    %v209 = vld [vmem:[#allocation2 + $0x460] sm:$0xff]
    %v210 = vld [vmem:[#allocation2 + $0x468] sm:$0xff]
    %v211 = vld [vmem:[#allocation2 + $0x470] sm:$0xff]
    %v212 = vld [vmem:[#allocation2 + $0x478] sm:$0xff]
    %v213 = vld [vmem:[#allocation2 + $0x480] sm:$0xff]
    %v214 = vld [vmem:[#allocation2 + $0x488] sm:$0xff]
    %v215 = vld [vmem:[#allocation2 + $0x490] sm:$0xff]
    %v216 = vld [vmem:[#allocation2 + $0x498] sm:$0xff]
    %v217 = vld [vmem:[#allocation2 + $0x4a0] sm:$0xff]
    %v218 = vld [vmem:[#allocation2 + $0x4a8] sm:$0xff]
    %v219 = vld [vmem:[#allocation2 + $0x4b0] sm:$0xff]
    %v220 = vld [vmem:[#allocation2 + $0x4b8] sm:$0xff]
    %v221 = vld [vmem:[#allocation2 + $0x4c0] sm:$0xff]
    %v222 = vld [vmem:[#allocation2 + $0x4c8] sm:$0xff]
    %v223 = vld [vmem:[#allocation2 + $0x4d0] sm:$0xff]
    %v224 = vld [vmem:[#allocation2 + $0x4d8] sm:$0xff]
    %v225 = vld [vmem:[#allocation2 + $0x4e0] sm:$0xff]
    %v226 = vld [vmem:[#allocation2 + $0x4e8] sm:$0xff]
    %v227 = vld [vmem:[#allocation2 + $0x4f0] sm:$0xff]
    %v228 = vld [vmem:[#allocation2 + $0x4f8] sm:$0xff]
    %v229 = vld [vmem:[#allocation2 + $0x500] sm:$0xff]
    %v230 = vld [vmem:[#allocation2 + $0x508] sm:$0xff]
    %v231 = vld [vmem:[#allocation2 + $0x510] sm:$0xff]
    %v232 = vld [vmem:[#allocation2 + $0x518] sm:$0xff]
    %v233 = vld [vmem:[#allocation2 + $0x520] sm:$0xff]
    %v234 = vld [vmem:[#allocation2 + $0x528] sm:$0xff]
    %v235 = vld [vmem:[#allocation2 + $0x530] sm:$0xff]
    %v236 = vld [vmem:[#allocation2 + $0x538] sm:$0xff]
    %v237 = vld [vmem:[#allocation2 + $0x540] sm:$0xff]
    %v238 = vld [vmem:[#allocation2 + $0x548] sm:$0xff]
    %v239 = vld [vmem:[#allocation2 + $0x550] sm:$0xff]
    %v240 = vld [vmem:[#allocation2 + $0x558] sm:$0xff]
    %v241 = vld [vmem:[#allocation2 + $0x560] sm:$0xff]
    %v242 = vld [vmem:[#allocation2 + $0x568] sm:$0xff]
    %v243 = vld [vmem:[#allocation2 + $0x570] sm:$0xff]
    %v244 = vld [vmem:[#allocation2 + $0x578] sm:$0xff]
    %v245 = vld [vmem:[#allocation2 + $0x580] sm:$0xff]
    %v246 = vld [vmem:[#allocation2 + $0x588] sm:$0xff]
    %v247 = vld [vmem:[#allocation2 + $0x590] sm:$0xff]
    %v248 = vld [vmem:[#allocation2 + $0x598] sm:$0xff]
    %v249 = vld [vmem:[#allocation2 + $0x5a0] sm:$0xff]
    %v250 = vld [vmem:[#allocation2 + $0x5a8] sm:$0xff]
    %v251 = vld [vmem:[#allocation2 + $0x5b0] sm:$0xff]
    %v252 = vld [vmem:[#allocation2 + $0x5b8] sm:$0xff]
    %v253 = vld [vmem:[#allocation2 + $0x5c0] sm:$0xff]
    %v254 = vld [vmem:[#allocation2 + $0x5c8] sm:$0xff]
    %v255 = vld [vmem:[#allocation2 + $0x5d0] sm:$0xff]
    %v256 = vld [vmem:[#allocation2 + $0x5d8] sm:$0xff]
    %v257 = vld [vmem:[#allocation2 + $0x5e0] sm:$0xff]
    %v258 = vld [vmem:[#allocation2 + $0x5e8] sm:$0xff]
    %v259 = vld [vmem:[#allocation2 + $0x5f0] sm:$0xff]
    %v260 = vld [vmem:[#allocation2 + $0x5f8] sm:$0xff]
    %v261 = vld [vmem:[#allocation2 + $0x600] sm:$0xff]
    %v262 = vld [vmem:[#allocation2 + $0x608] sm:$0xff]
    %v263 = vld [vmem:[#allocation2 + $0x610] sm:$0xff]
    %v264 = vld [vmem:[#allocation2 + $0x618] sm:$0xff]
    %v265 = vld [vmem:[#allocation2 + $0x620] sm:$0xff]
    %v266 = vld [vmem:[#allocation2 + $0x628] sm:$0xff]
    %v267 = vld [vmem:[#allocation2 + $0x630] sm:$0xff]
    %v268 = vld [vmem:[#allocation2 + $0x638] sm:$0xff]
    %v269 = vld [vmem:[#allocation2 + $0x640] sm:$0xff]
    %v270 = vld [vmem:[#allocation2 + $0x648] sm:$0xff]
    %v271 = vld [vmem:[#allocation2 + $0x650] sm:$0xff]
    %v272 = vld [vmem:[#allocation2 + $0x658] sm:$0xff]
    %v273 = vld [vmem:[#allocation2 + $0x660] sm:$0xff]
    %v274 = vld [vmem:[#allocation2 + $0x668] sm:$0xff]
    %v275 = vld [vmem:[#allocation2 + $0x670] sm:$0xff]
    %v276 = vld [vmem:[#allocation2 + $0x678] sm:$0xff]
    %v277 = vld [vmem:[#allocation2 + $0x680] sm:$0xff]
    %v278 = vld [vmem:[#allocation2 + $0x688] sm:$0xff]
    %v279 = vld [vmem:[#allocation2 + $0x690] sm:$0xff]
    %v280 = vld [vmem:[#allocation2 + $0x698] sm:$0xff]
    %v281 = vld [vmem:[#allocation2 + $0x6a0] sm:$0xff]
    %v282 = vld [vmem:[#allocation2 + $0x6a8] sm:$0xff]
    %v283 = vld [vmem:[#allocation2 + $0x6b0] sm:$0xff]
    %v284 = vld [vmem:[#allocation2 + $0x6b8] sm:$0xff]
    %v285 = vld [vmem:[#allocation2 + $0x6c0] sm:$0xff]
    %v286 = vld [vmem:[#allocation2 + $0x6c8] sm:$0xff]
    %v287 = vld [vmem:[#allocation2 + $0x6d0] sm:$0xff]
    %v288 = vld [vmem:[#allocation2 + $0x6d8] sm:$0xff]
    %v289 = vld [vmem:[#allocation2 + $0x6e0] sm:$0xff]
    %v290 = vld [vmem:[#allocation2 + $0x6e8] sm:$0xff]
    %v291 = vld [vmem:[#allocation2 + $0x6f0] sm:$0xff]
    %v292 = vld [vmem:[#allocation2 + $0x6f8] sm:$0xff]
    %v293 = vld [vmem:[#allocation2 + $0x700] sm:$0xff]
    %v294 = vld [vmem:[#allocation2 + $0x708] sm:$0xff]
    %v295 = vld [vmem:[#allocation2 + $0x710] sm:$0xff]
    %v296 = vld [vmem:[#allocation2 + $0x718] sm:$0xff]
    %v297 = vld [vmem:[#allocation2 + $0x720] sm:$0xff]
    %v298 = vld [vmem:[#allocation2 + $0x728] sm:$0xff]
    %v299 = vld [vmem:[#allocation2 + $0x730] sm:$0xff]
    %v300 = vld [vmem:[#allocation2 + $0x738] sm:$0xff]
    %v301 = vld [vmem:[#allocation2 + $0x740] sm:$0xff]
    %v302 = vld [vmem:[#allocation2 + $0x748] sm:$0xff]
    %v303 = vld [vmem:[#allocation2 + $0x750] sm:$0xff]
    %v304 = vld [vmem:[#allocation2 + $0x758] sm:$0xff]
    %v305 = vld [vmem:[#allocation2 + $0x760] sm:$0xff]
    %v306 = vld [vmem:[#allocation2 + $0x768] sm:$0xff]
    %v307 = vld [vmem:[#allocation2 + $0x770] sm:$0xff]
    %v308 = vld [vmem:[#allocation2 + $0x778] sm:$0xff]
    %v549 = vunpack.c.l.b16 %v69
    %v550 = vunpack.c.h.b16 %v69
    %v551 = vunpack.c.l.b16 %v70
    %v552 = vunpack.c.h.b16 %v70
    %v553 = vunpack.c.l.b16 %v71
    %v554 = vunpack.c.h.b16 %v71
    %v555 = vunpack.c.l.b16 %v72
    %v556 = vunpack.c.h.b16 %v72
    %v557 = vunpack.c.l.b16 %v73
    %v558 = vunpack.c.h.b16 %v73
    %v559 = vunpack.c.l.b16 %v74
    %v560 = vunpack.c.h.b16 %v74
    %v561 = vunpack.c.l.b16 %v75
    %v562 = vunpack.c.h.b16 %v75
    %v563 = vunpack.c.l.b16 %v76
    %v564 = vunpack.c.h.b16 %v76
    %v565 = vunpack.c.l.b16 %v77
    %v566 = vunpack.c.h.b16 %v77
    %v567 = vunpack.c.l.b16 %v78
    %v568 = vunpack.c.h.b16 %v78
    %v569 = vunpack.c.l.b16 %v79
    %v570 = vunpack.c.h.b16 %v79
    %v571 = vunpack.c.l.b16 %v80
    %v572 = vunpack.c.h.b16 %v80
    %v573 = vunpack.c.l.b16 %v81
    %v574 = vunpack.c.h.b16 %v81
    %v575 = vunpack.c.l.b16 %v82
    %v576 = vunpack.c.h.b16 %v82
    %v577 = vunpack.c.l.b16 %v83
    %v578 = vunpack.c.h.b16 %v83
    %v579 = vunpack.c.l.b16 %v84
    %v580 = vunpack.c.h.b16 %v84
    %v581 = vunpack.c.l.b16 %v85
    %v582 = vunpack.c.h.b16 %v85
    %v583 = vunpack.c.l.b16 %v86
    %v584 = vunpack.c.h.b16 %v86
    %v585 = vunpack.c.l.b16 %v87
    %v586 = vunpack.c.h.b16 %v87
    %v587 = vunpack.c.l.b16 %v88
    %v588 = vunpack.c.h.b16 %v88
    %v589 = vunpack.c.l.b16 %v89
    %v590 = vunpack.c.h.b16 %v89
    %v591 = vunpack.c.l.b16 %v90
    %v592 = vunpack.c.h.b16 %v90
    %v593 = vunpack.c.l.b16 %v91
    %v594 = vunpack.c.h.b16 %v91
    %v595 = vunpack.c.l.b16 %v92
    %v596 = vunpack.c.h.b16 %v92
    %v597 = vunpack.c.l.b16 %v93
    %v598 = vunpack.c.h.b16 %v93
    %v599 = vunpack.c.l.b16 %v94
    %v600 = vunpack.c.h.b16 %v94
    %v601 = vunpack.c.l.b16 %v95
    %v602 = vunpack.c.h.b16 %v95
    %v603 = vunpack.c.l.b16 %v96
    %v604 = vunpack.c.h.b16 %v96
    %v605 = vunpack.c.l.b16 %v97
    %v606 = vunpack.c.h.b16 %v97
    %v607 = vunpack.c.l.b16 %v98
    %v608 = vunpack.c.h.b16 %v98
    %v609 = vunpack.c.l.b16 %v99
    %v610 = vunpack.c.h.b16 %v99
    %v611 = vunpack.c.l.b16 %v100
    %v612 = vunpack.c.h.b16 %v100
    %v613 = vunpack.c.l.b16 %v101
    %v614 = vunpack.c.h.b16 %v101
    %v615 = vunpack.c.l.b16 %v102
    %v616 = vunpack.c.h.b16 %v102
    %v617 = vunpack.c.l.b16 %v103
    %v618 = vunpack.c.h.b16 %v103
    %v619 = vunpack.c.l.b16 %v104
    %v620 = vunpack.c.h.b16 %v104
    %v621 = vunpack.c.l.b16 %v105
    %v622 = vunpack.c.h.b16 %v105
    %v623 = vunpack.c.l.b16 %v106
    %v624 = vunpack.c.h.b16 %v106
    %v625 = vunpack.c.l.b16 %v107
    %v626 = vunpack.c.h.b16 %v107
    %v627 = vunpack.c.l.b16 %v108
    %v628 = vunpack.c.h.b16 %v108
    %v629 = vunpack.c.l.b16 %v109
    %v630 = vunpack.c.h.b16 %v109
    %v631 = vunpack.c.l.b16 %v110
    %v632 = vunpack.c.h.b16 %v110
    %v633 = vunpack.c.l.b16 %v111
    %v634 = vunpack.c.h.b16 %v111
    %v635 = vunpack.c.l.b16 %v112
    %v636 = vunpack.c.h.b16 %v112
    %v637 = vunpack.c.l.b16 %v113
    %v638 = vunpack.c.h.b16 %v113
    %v639 = vunpack.c.l.b16 %v114
    %v640 = vunpack.c.h.b16 %v114
    %v641 = vunpack.c.l.b16 %v115
    %v642 = vunpack.c.h.b16 %v115
    %v643 = vunpack.c.l.b16 %v116
    %v644 = vunpack.c.h.b16 %v116
    %v645 = vunpack.c.l.b16 %v117
    %v646 = vunpack.c.h.b16 %v117
    %v647 = vunpack.c.l.b16 %v118
    %v648 = vunpack.c.h.b16 %v118
    %v649 = vunpack.c.l.b16 %v119
    %v650 = vunpack.c.h.b16 %v119
    %v651 = vunpack.c.l.b16 %v120
    %v652 = vunpack.c.h.b16 %v120
    %v653 = vunpack.c.l.b16 %v121
    %v654 = vunpack.c.h.b16 %v121
    %v655 = vunpack.c.l.b16 %v122
    %v656 = vunpack.c.h.b16 %v122
    %v657 = vunpack.c.l.b16 %v123
    %v658 = vunpack.c.h.b16 %v123
    %v659 = vunpack.c.l.b16 %v124
    %v660 = vunpack.c.h.b16 %v124
    %v661 = vunpack.c.l.b16 %v125
    %v662 = vunpack.c.h.b16 %v125
    %v663 = vunpack.c.l.b16 %v126
    %v664 = vunpack.c.h.b16 %v126
    %v665 = vunpack.c.l.b16 %v127
    %v666 = vunpack.c.h.b16 %v127
    %v667 = vunpack.c.l.b16 %v128
    %v668 = vunpack.c.h.b16 %v128
    %v669 = vunpack.c.l.b16 %v129
    %v670 = vunpack.c.h.b16 %v129
    %v671 = vunpack.c.l.b16 %v130
    %v672 = vunpack.c.h.b16 %v130
    %v673 = vunpack.c.l.b16 %v131
    %v674 = vunpack.c.h.b16 %v131
    %v675 = vunpack.c.l.b16 %v132
    %v676 = vunpack.c.h.b16 %v132
    %v677 = vunpack.c.l.b16 %v133
    %v678 = vunpack.c.h.b16 %v133
    %v679 = vunpack.c.l.b16 %v134
    %v680 = vunpack.c.h.b16 %v134
    %v681 = vunpack.c.l.b16 %v135
    %v682 = vunpack.c.h.b16 %v135
    %v683 = vunpack.c.l.b16 %v136
    %v684 = vunpack.c.h.b16 %v136
    %v685 = vunpack.c.l.b16 %v137
    %v686 = vunpack.c.h.b16 %v137
    %v687 = vunpack.c.l.b16 %v138
    %v688 = vunpack.c.h.b16 %v138
    %v689 = vunpack.c.l.b16 %v139
    %v690 = vunpack.c.h.b16 %v139
    %v691 = vunpack.c.l.b16 %v140
    %v692 = vunpack.c.h.b16 %v140
    %v693 = vunpack.c.l.b16 %v141
    %v694 = vunpack.c.h.b16 %v141
    %v695 = vunpack.c.l.b16 %v142
    %v696 = vunpack.c.h.b16 %v142
    %v697 = vunpack.c.l.b16 %v143
    %v698 = vunpack.c.h.b16 %v143
    %v699 = vunpack.c.l.b16 %v144
    %v700 = vunpack.c.h.b16 %v144
    %v701 = vunpack.c.l.b16 %v145
    %v702 = vunpack.c.h.b16 %v145
    %v703 = vunpack.c.l.b16 %v146
    %v704 = vunpack.c.h.b16 %v146
    %v705 = vunpack.c.l.b16 %v147
    %v706 = vunpack.c.h.b16 %v147
    %v707 = vunpack.c.l.b16 %v148
    %v708 = vunpack.c.h.b16 %v148
    %v709 = vunpack.c.l.b16 %v149
    %v710 = vunpack.c.h.b16 %v149
    %v711 = vunpack.c.l.b16 %v150
    %v712 = vunpack.c.h.b16 %v150
    %v713 = vunpack.c.l.b16 %v151
    %v714 = vunpack.c.h.b16 %v151
    %v715 = vunpack.c.l.b16 %v152
    %v716 = vunpack.c.h.b16 %v152
    %v717 = vunpack.c.l.b16 %v153
    %v718 = vunpack.c.h.b16 %v153
    %v719 = vunpack.c.l.b16 %v154
    %v720 = vunpack.c.h.b16 %v154
    %v721 = vunpack.c.l.b16 %v155
    %v722 = vunpack.c.h.b16 %v155
    %v723 = vunpack.c.l.b16 %v156
    %v724 = vunpack.c.h.b16 %v156
    %v725 = vunpack.c.l.b16 %v157
    %v726 = vunpack.c.h.b16 %v157
    %v727 = vunpack.c.l.b16 %v158
    %v728 = vunpack.c.h.b16 %v158
    %v729 = vunpack.c.l.b16 %v159
    %v730 = vunpack.c.h.b16 %v159
    %v731 = vunpack.c.l.b16 %v160
    %v732 = vunpack.c.h.b16 %v160
    %v733 = vunpack.c.l.b16 %v161
    %v734 = vunpack.c.h.b16 %v161
    %v735 = vunpack.c.l.b16 %v162
    %v736 = vunpack.c.h.b16 %v162
    %v737 = vunpack.c.l.b16 %v163
    %v738 = vunpack.c.h.b16 %v163
    %v739 = vunpack.c.l.b16 %v164
    %v740 = vunpack.c.h.b16 %v164
    %v741 = vunpack.c.l.b16 %v165
    %v742 = vunpack.c.h.b16 %v165
    %v743 = vunpack.c.l.b16 %v166
    %v744 = vunpack.c.h.b16 %v166
    %v745 = vunpack.c.l.b16 %v167
    %v746 = vunpack.c.h.b16 %v167
    %v747 = vunpack.c.l.b16 %v168
    %v748 = vunpack.c.h.b16 %v168
    %v749 = vunpack.c.l.b16 %v169
    %v750 = vunpack.c.h.b16 %v169
    %v751 = vunpack.c.l.b16 %v170
    %v752 = vunpack.c.h.b16 %v170
    %v753 = vunpack.c.l.b16 %v171
    %v754 = vunpack.c.h.b16 %v171
    %v755 = vunpack.c.l.b16 %v172
    %v756 = vunpack.c.h.b16 %v172
    %v757 = vunpack.c.l.b16 %v173
    %v758 = vunpack.c.h.b16 %v173
    %v759 = vunpack.c.l.b16 %v174
    %v760 = vunpack.c.h.b16 %v174
    %v761 = vunpack.c.l.b16 %v175
    %v762 = vunpack.c.h.b16 %v175
    %v763 = vunpack.c.l.b16 %v176
    %v764 = vunpack.c.h.b16 %v176
    %v765 = vunpack.c.l.b16 %v177
    %v766 = vunpack.c.h.b16 %v177
    %v767 = vunpack.c.l.b16 %v178
    %v768 = vunpack.c.h.b16 %v178
    %v769 = vunpack.c.l.b16 %v179
    %v770 = vunpack.c.h.b16 %v179
    %v771 = vunpack.c.l.b16 %v180
    %v772 = vunpack.c.h.b16 %v180
    %v773 = vunpack.c.l.b16 %v181
    %v774 = vunpack.c.h.b16 %v181
    %v775 = vunpack.c.l.b16 %v182
    %v776 = vunpack.c.h.b16 %v182
    %v777 = vunpack.c.l.b16 %v183
    %v778 = vunpack.c.h.b16 %v183
    %v779 = vunpack.c.l.b16 %v184
    %v780 = vunpack.c.h.b16 %v184
    %v781 = vunpack.c.l.b16 %v185
    %v782 = vunpack.c.h.b16 %v185
    %v783 = vunpack.c.l.b16 %v186
    %v784 = vunpack.c.h.b16 %v186
    %v785 = vunpack.c.l.b16 %v187
    %v786 = vunpack.c.h.b16 %v187
    %v787 = vunpack.c.l.b16 %v188
    %v788 = vunpack.c.h.b16 %v188
    %v789 = vunpack.c.l.b16 %v189
    %v790 = vunpack.c.h.b16 %v189
    %v791 = vunpack.c.l.b16 %v190
    %v792 = vunpack.c.h.b16 %v190
    %v793 = vunpack.c.l.b16 %v191
    %v794 = vunpack.c.h.b16 %v191
    %v795 = vunpack.c.l.b16 %v192
    %v796 = vunpack.c.h.b16 %v192
    %v797 = vunpack.c.l.b16 %v193
    %v798 = vunpack.c.h.b16 %v193
    %v799 = vunpack.c.l.b16 %v194
    %v800 = vunpack.c.h.b16 %v194
    %v801 = vunpack.c.l.b16 %v195
    %v802 = vunpack.c.h.b16 %v195
    %v803 = vunpack.c.l.b16 %v196
    %v804 = vunpack.c.h.b16 %v196
    %v805 = vunpack.c.l.b16 %v197
    %v806 = vunpack.c.h.b16 %v197
    %v807 = vunpack.c.l.b16 %v198
    %v808 = vunpack.c.h.b16 %v198
    %v809 = vunpack.c.l.b16 %v199
    %v810 = vunpack.c.h.b16 %v199
    %v811 = vunpack.c.l.b16 %v200
    %v812 = vunpack.c.h.b16 %v200
    %v813 = vunpack.c.l.b16 %v201
    %v814 = vunpack.c.h.b16 %v201
    %v815 = vunpack.c.l.b16 %v202
    %v816 = vunpack.c.h.b16 %v202
    %v817 = vunpack.c.l.b16 %v203
    %v818 = vunpack.c.h.b16 %v203
    %v819 = vunpack.c.l.b16 %v204
    %v820 = vunpack.c.h.b16 %v204
    %v821 = vunpack.c.l.b16 %v205
    %v822 = vunpack.c.h.b16 %v205
    %v823 = vunpack.c.l.b16 %v206
    %v824 = vunpack.c.h.b16 %v206
    %v825 = vunpack.c.l.b16 %v207
    %v826 = vunpack.c.h.b16 %v207
    %v827 = vunpack.c.l.b16 %v208
    %v828 = vunpack.c.h.b16 %v208
    %v829 = vunpack.c.l.b16 %v209
    %v830 = vunpack.c.h.b16 %v209
    %v831 = vunpack.c.l.b16 %v210
    %v832 = vunpack.c.h.b16 %v210
    %v833 = vunpack.c.l.b16 %v211
    %v834 = vunpack.c.h.b16 %v211
    %v835 = vunpack.c.l.b16 %v212
    %v836 = vunpack.c.h.b16 %v212
    %v837 = vunpack.c.l.b16 %v213
    %v838 = vunpack.c.h.b16 %v213
    %v839 = vunpack.c.l.b16 %v214
    %v840 = vunpack.c.h.b16 %v214
    %v841 = vunpack.c.l.b16 %v215
    %v842 = vunpack.c.h.b16 %v215
    %v843 = vunpack.c.l.b16 %v216
    %v844 = vunpack.c.h.b16 %v216
    %v845 = vunpack.c.l.b16 %v217
    %v846 = vunpack.c.h.b16 %v217
    %v847 = vunpack.c.l.b16 %v218
    %v848 = vunpack.c.h.b16 %v218
    %v849 = vunpack.c.l.b16 %v219
    %v850 = vunpack.c.h.b16 %v219
    %v851 = vunpack.c.l.b16 %v220
    %v852 = vunpack.c.h.b16 %v220
    %v853 = vunpack.c.l.b16 %v221
    %v854 = vunpack.c.h.b16 %v221
    %v855 = vunpack.c.l.b16 %v222
    %v856 = vunpack.c.h.b16 %v222
    %v857 = vunpack.c.l.b16 %v223
    %v858 = vunpack.c.h.b16 %v223
    %v859 = vunpack.c.l.b16 %v224
    %v860 = vunpack.c.h.b16 %v224
    %v861 = vunpack.c.l.b16 %v225
    %v862 = vunpack.c.h.b16 %v225
    %v863 = vunpack.c.l.b16 %v226
    %v864 = vunpack.c.h.b16 %v226
    %v865 = vunpack.c.l.b16 %v227
    %v866 = vunpack.c.h.b16 %v227
    %v867 = vunpack.c.l.b16 %v228
    %v868 = vunpack.c.h.b16 %v228
    %v869 = vunpack.c.l.b16 %v229
    %v870 = vunpack.c.h.b16 %v229
    %v871 = vunpack.c.l.b16 %v230
    %v872 = vunpack.c.h.b16 %v230
    %v873 = vunpack.c.l.b16 %v231
    %v874 = vunpack.c.h.b16 %v231
    %v875 = vunpack.c.l.b16 %v232
    %v876 = vunpack.c.h.b16 %v232
    %v877 = vunpack.c.l.b16 %v233
    %v878 = vunpack.c.h.b16 %v233
    %v879 = vunpack.c.l.b16 %v234
    %v880 = vunpack.c.h.b16 %v234
    %v881 = vunpack.c.l.b16 %v235
    %v882 = vunpack.c.h.b16 %v235
    %v883 = vunpack.c.l.b16 %v236
    %v884 = vunpack.c.h.b16 %v236
    %v885 = vunpack.c.l.b16 %v237
    %v886 = vunpack.c.h.b16 %v237
    %v887 = vunpack.c.l.b16 %v238
    %v888 = vunpack.c.h.b16 %v238
    %v889 = vunpack.c.l.b16 %v239
    %v890 = vunpack.c.h.b16 %v239
    %v891 = vunpack.c.l.b16 %v240
    %v892 = vunpack.c.h.b16 %v240
    %v893 = vunpack.c.l.b16 %v241
    %v894 = vunpack.c.h.b16 %v241
    %v895 = vunpack.c.l.b16 %v242
    %v896 = vunpack.c.h.b16 %v242
    %v897 = vunpack.c.l.b16 %v243
    %v898 = vunpack.c.h.b16 %v243
    %v899 = vunpack.c.l.b16 %v244
    %v900 = vunpack.c.h.b16 %v244
    %v901 = vunpack.c.l.b16 %v245
    %v902 = vunpack.c.h.b16 %v245
    %v903 = vunpack.c.l.b16 %v246
    %v904 = vunpack.c.h.b16 %v246
    %v905 = vunpack.c.l.b16 %v247
    %v906 = vunpack.c.h.b16 %v247
    %v907 = vunpack.c.l.b16 %v248
    %v908 = vunpack.c.h.b16 %v248
    %v909 = vunpack.c.l.b16 %v249
    %v910 = vunpack.c.h.b16 %v249
    %v911 = vunpack.c.l.b16 %v250
    %v912 = vunpack.c.h.b16 %v250
    %v913 = vunpack.c.l.b16 %v251
    %v914 = vunpack.c.h.b16 %v251
    %v915 = vunpack.c.l.b16 %v252
    %v916 = vunpack.c.h.b16 %v252
    %v917 = vunpack.c.l.b16 %v253
    %v918 = vunpack.c.h.b16 %v253
    %v919 = vunpack.c.l.b16 %v254
    %v920 = vunpack.c.h.b16 %v254
    %v921 = vunpack.c.l.b16 %v255
    %v922 = vunpack.c.h.b16 %v255
    %v923 = vunpack.c.l.b16 %v256
    %v924 = vunpack.c.h.b16 %v256
    %v925 = vunpack.c.l.b16 %v257
    %v926 = vunpack.c.h.b16 %v257
    %v927 = vunpack.c.l.b16 %v258
    %v928 = vunpack.c.h.b16 %v258
    %v929 = vunpack.c.l.b16 %v259
    %v930 = vunpack.c.h.b16 %v259
    %v931 = vunpack.c.l.b16 %v260
    %v932 = vunpack.c.h.b16 %v260
    %v933 = vunpack.c.l.b16 %v261
    %v934 = vunpack.c.h.b16 %v261
    %v935 = vunpack.c.l.b16 %v262
    %v936 = vunpack.c.h.b16 %v262
    %v937 = vunpack.c.l.b16 %v263
    %v938 = vunpack.c.h.b16 %v263
    %v939 = vunpack.c.l.b16 %v264
    %v940 = vunpack.c.h.b16 %v264
    %v941 = vunpack.c.l.b16 %v265
    %v942 = vunpack.c.h.b16 %v265
    %v943 = vunpack.c.l.b16 %v266
    %v944 = vunpack.c.h.b16 %v266
    %v945 = vunpack.c.l.b16 %v267
    %v946 = vunpack.c.h.b16 %v267
    %v947 = vunpack.c.l.b16 %v268
    %v948 = vunpack.c.h.b16 %v268
    %v949 = vunpack.c.l.b16 %v269
    %v950 = vunpack.c.h.b16 %v269
    %v951 = vunpack.c.l.b16 %v270
    %v952 = vunpack.c.h.b16 %v270
    %v953 = vunpack.c.l.b16 %v271
    %v954 = vunpack.c.h.b16 %v271
    %v955 = vunpack.c.l.b16 %v272
    %v956 = vunpack.c.h.b16 %v272
    %v957 = vunpack.c.l.b16 %v273
    %v958 = vunpack.c.h.b16 %v273
    %v959 = vunpack.c.l.b16 %v274
    %v960 = vunpack.c.h.b16 %v274
    %v961 = vunpack.c.l.b16 %v275
    %v962 = vunpack.c.h.b16 %v275
    %v963 = vunpack.c.l.b16 %v276
    %v964 = vunpack.c.h.b16 %v276
    %v965 = vunpack.c.l.b16 %v277
    %v966 = vunpack.c.h.b16 %v277
    %v967 = vunpack.c.l.b16 %v278
    %v968 = vunpack.c.h.b16 %v278
    %v969 = vunpack.c.l.b16 %v279
    %v970 = vunpack.c.h.b16 %v279
    %v971 = vunpack.c.l.b16 %v280
    %v972 = vunpack.c.h.b16 %v280
    %v973 = vunpack.c.l.b16 %v281
    %v974 = vunpack.c.h.b16 %v281
    %v975 = vunpack.c.l.b16 %v282
    %v976 = vunpack.c.h.b16 %v282
    %v977 = vunpack.c.l.b16 %v283
    %v978 = vunpack.c.h.b16 %v283
    %v979 = vunpack.c.l.b16 %v284
    %v980 = vunpack.c.h.b16 %v284
    %v981 = vunpack.c.l.b16 %v285
    %v982 = vunpack.c.h.b16 %v285
    %v983 = vunpack.c.l.b16 %v286
    %v984 = vunpack.c.h.b16 %v286
    %v985 = vunpack.c.l.b16 %v287
    %v986 = vunpack.c.h.b16 %v287
    %v987 = vunpack.c.l.b16 %v288
    %v988 = vunpack.c.h.b16 %v288
    %v989 = vunpack.c.l.b16 %v289
    %v990 = vunpack.c.h.b16 %v289
    %v991 = vunpack.c.l.b16 %v290
    %v992 = vunpack.c.h.b16 %v290
    %v993 = vunpack.c.l.b16 %v291
    %v994 = vunpack.c.h.b16 %v291
    %v995 = vunpack.c.l.b16 %v292
    %v996 = vunpack.c.h.b16 %v292
    %v997 = vunpack.c.l.b16 %v293
    %v998 = vunpack.c.h.b16 %v293
    %v999 = vunpack.c.l.b16 %v294
    %v1000 = vunpack.c.h.b16 %v294
    %v1001 = vunpack.c.l.b16 %v295
    %v1002 = vunpack.c.h.b16 %v295
    %v1003 = vunpack.c.l.b16 %v296
    %v1004 = vunpack.c.h.b16 %v296
    %v1005 = vunpack.c.l.b16 %v297
    %v1006 = vunpack.c.h.b16 %v297
    %v1007 = vunpack.c.l.b16 %v298
    %v1008 = vunpack.c.h.b16 %v298
    %v1009 = vunpack.c.l.b16 %v299
    %v1010 = vunpack.c.h.b16 %v299
    %v1011 = vunpack.c.l.b16 %v300
    %v1012 = vunpack.c.h.b16 %v300
    %v1013 = vunpack.c.l.b16 %v301
    %v1014 = vunpack.c.h.b16 %v301
    %v1015 = vunpack.c.l.b16 %v302
    %v1016 = vunpack.c.h.b16 %v302
    %v1017 = vunpack.c.l.b16 %v303
    %v1018 = vunpack.c.h.b16 %v303
    %v1019 = vunpack.c.l.b16 %v304
    %v1020 = vunpack.c.h.b16 %v304
    %v1021 = vunpack.c.l.b16 %v305
    %v1022 = vunpack.c.h.b16 %v305
    %v1023 = vunpack.c.l.b16 %v306
    %v1024 = vunpack.c.h.b16 %v306
    %v1025 = vunpack.c.l.b16 %v307
    %v1026 = vunpack.c.h.b16 %v307
    %v1027 = vunpack.c.l.b16 %v308
    %v1028 = vunpack.c.h.b16 %v308
    %v1029 = vpack.c.b16 %v559, %v549
    %v1030 = vpack.c.b16 %v560, %v550
    %v1031 = vpack.c.b16 %v561, %v551
    %v1032 = vpack.c.b16 %v562, %v552
    %v1033 = vpack.c.b16 %v563, %v553
    %v1034 = vpack.c.b16 %v564, %v554
    %v1035 = vpack.c.b16 %v565, %v555
    %v1036 = vpack.c.b16 %v566, %v556
    %v1037 = vpack.c.b16 %v567, %v557
    %v1038 = vpack.c.b16 %v568, %v558
    %v1039 = vpack.c.b16 %v579, %v569
    %v1040 = vpack.c.b16 %v580, %v570
    %v1041 = vpack.c.b16 %v581, %v571
    %v1042 = vpack.c.b16 %v582, %v572
    %v1043 = vpack.c.b16 %v583, %v573
    %v1044 = vpack.c.b16 %v584, %v574
    %v1045 = vpack.c.b16 %v585, %v575
    %v1046 = vpack.c.b16 %v586, %v576
    %v1047 = vpack.c.b16 %v587, %v577
    %v1048 = vpack.c.b16 %v588, %v578
    %v1049 = vpack.c.b16 %v599, %v589
    %v1050 = vpack.c.b16 %v600, %v590
    %v1051 = vpack.c.b16 %v601, %v591
    %v1052 = vpack.c.b16 %v602, %v592
    %v1053 = vpack.c.b16 %v603, %v593
    %v1054 = vpack.c.b16 %v604, %v594
    %v1055 = vpack.c.b16 %v605, %v595
    %v1056 = vpack.c.b16 %v606, %v596
    %v1057 = vpack.c.b16 %v607, %v597
    %v1058 = vpack.c.b16 %v608, %v598
    %v1059 = vpack.c.b16 %v619, %v609
    %v1060 = vpack.c.b16 %v620, %v610
    %v1061 = vpack.c.b16 %v621, %v611
    %v1062 = vpack.c.b16 %v622, %v612
    %v1063 = vpack.c.b16 %v623, %v613
    %v1064 = vpack.c.b16 %v624, %v614
    %v1065 = vpack.c.b16 %v625, %v615
    %v1066 = vpack.c.b16 %v626, %v616
    %v1067 = vpack.c.b16 %v627, %v617
    %v1068 = vpack.c.b16 %v628, %v618
    %v1069 = vpack.c.b16 %v639, %v629
    %v1070 = vpack.c.b16 %v640, %v630
    %v1071 = vpack.c.b16 %v641, %v631
    %v1072 = vpack.c.b16 %v642, %v632
    %v1073 = vpack.c.b16 %v643, %v633
    %v1074 = vpack.c.b16 %v644, %v634
    %v1075 = vpack.c.b16 %v645, %v635
    %v1076 = vpack.c.b16 %v646, %v636
    %v1077 = vpack.c.b16 %v647, %v637
    %v1078 = vpack.c.b16 %v648, %v638
    %v1079 = vpack.c.b16 %v659, %v649
    %v1080 = vpack.c.b16 %v660, %v650
    %v1081 = vpack.c.b16 %v661, %v651
    %v1082 = vpack.c.b16 %v662, %v652
    %v1083 = vpack.c.b16 %v663, %v653
    %v1084 = vpack.c.b16 %v664, %v654
    %v1085 = vpack.c.b16 %v665, %v655
    %v1086 = vpack.c.b16 %v666, %v656
    %v1087 = vpack.c.b16 %v667, %v657
    %v1088 = vpack.c.b16 %v668, %v658
    %v1089 = vpack.c.b16 %v679, %v669
    %v1090 = vpack.c.b16 %v680, %v670
    %v1091 = vpack.c.b16 %v681, %v671
    %v1092 = vpack.c.b16 %v682, %v672
    %v1093 = vpack.c.b16 %v683, %v673
    %v1094 = vpack.c.b16 %v684, %v674
    %v1095 = vpack.c.b16 %v685, %v675
    %v1096 = vpack.c.b16 %v686, %v676
    %v1097 = vpack.c.b16 %v687, %v677
    %v1098 = vpack.c.b16 %v688, %v678
    %v1099 = vpack.c.b16 %v699, %v689
    %v1100 = vpack.c.b16 %v700, %v690
    %v1101 = vpack.c.b16 %v701, %v691
    %v1102 = vpack.c.b16 %v702, %v692
    %v1103 = vpack.c.b16 %v703, %v693
    %v1104 = vpack.c.b16 %v704, %v694
    %v1105 = vpack.c.b16 %v705, %v695
    %v1106 = vpack.c.b16 %v706, %v696
    %v1107 = vpack.c.b16 %v707, %v697
    %v1108 = vpack.c.b16 %v708, %v698
    %v1109 = vpack.c.b16 %v719, %v709
    %v1110 = vpack.c.b16 %v720, %v710
    %v1111 = vpack.c.b16 %v721, %v711
    %v1112 = vpack.c.b16 %v722, %v712
    %v1113 = vpack.c.b16 %v723, %v713
    %v1114 = vpack.c.b16 %v724, %v714
    %v1115 = vpack.c.b16 %v725, %v715
    %v1116 = vpack.c.b16 %v726, %v716
    %v1117 = vpack.c.b16 %v727, %v717
    %v1118 = vpack.c.b16 %v728, %v718
    %v1119 = vpack.c.b16 %v739, %v729
    %v1120 = vpack.c.b16 %v740, %v730
    %v1121 = vpack.c.b16 %v741, %v731
    %v1122 = vpack.c.b16 %v742, %v732
    %v1123 = vpack.c.b16 %v743, %v733
    %v1124 = vpack.c.b16 %v744, %v734
    %v1125 = vpack.c.b16 %v745, %v735
    %v1126 = vpack.c.b16 %v746, %v736
    %v1127 = vpack.c.b16 %v747, %v737
    %v1128 = vpack.c.b16 %v748, %v738
    %v1129 = vpack.c.b16 %v759, %v749
    %v1130 = vpack.c.b16 %v760, %v750
    %v1131 = vpack.c.b16 %v761, %v751
    %v1132 = vpack.c.b16 %v762, %v752
    %v1133 = vpack.c.b16 %v763, %v753
    %v1134 = vpack.c.b16 %v764, %v754
    %v1135 = vpack.c.b16 %v765, %v755
    %v1136 = vpack.c.b16 %v766, %v756
    %v1137 = vpack.c.b16 %v767, %v757
    %v1138 = vpack.c.b16 %v768, %v758
    %v1139 = vpack.c.b16 %v779, %v769
    %v1140 = vpack.c.b16 %v780, %v770
    %v1141 = vpack.c.b16 %v781, %v771
    %v1142 = vpack.c.b16 %v782, %v772
    %v1143 = vpack.c.b16 %v783, %v773
    %v1144 = vpack.c.b16 %v784, %v774
    %v1145 = vpack.c.b16 %v785, %v775
    %v1146 = vpack.c.b16 %v786, %v776
    %v1147 = vpack.c.b16 %v787, %v777
    %v1148 = vpack.c.b16 %v788, %v778
    %v1149 = vpack.c.b16 %v799, %v789
    %v1150 = vpack.c.b16 %v800, %v790
    %v1151 = vpack.c.b16 %v801, %v791
    %v1152 = vpack.c.b16 %v802, %v792
    %v1153 = vpack.c.b16 %v803, %v793
    %v1154 = vpack.c.b16 %v804, %v794
    %v1155 = vpack.c.b16 %v805, %v795
    %v1156 = vpack.c.b16 %v806, %v796
    %v1157 = vpack.c.b16 %v807, %v797
    %v1158 = vpack.c.b16 %v808, %v798
    %v1159 = vpack.c.b16 %v819, %v809
    %v1160 = vpack.c.b16 %v820, %v810
    %v1161 = vpack.c.b16 %v821, %v811
    %v1162 = vpack.c.b16 %v822, %v812
    %v1163 = vpack.c.b16 %v823, %v813
    %v1164 = vpack.c.b16 %v824, %v814
    %v1165 = vpack.c.b16 %v825, %v815
    %v1166 = vpack.c.b16 %v826, %v816
    %v1167 = vpack.c.b16 %v827, %v817
    %v1168 = vpack.c.b16 %v828, %v818
    %v1169 = vpack.c.b16 %v839, %v829
    %v1170 = vpack.c.b16 %v840, %v830
    %v1171 = vpack.c.b16 %v841, %v831
    %v1172 = vpack.c.b16 %v842, %v832
    %v1173 = vpack.c.b16 %v843, %v833
    %v1174 = vpack.c.b16 %v844, %v834
    %v1175 = vpack.c.b16 %v845, %v835
    %v1176 = vpack.c.b16 %v846, %v836
    %v1177 = vpack.c.b16 %v847, %v837
    %v1178 = vpack.c.b16 %v848, %v838
    %v1179 = vpack.c.b16 %v859, %v849
    %v1180 = vpack.c.b16 %v860, %v850
    %v1181 = vpack.c.b16 %v861, %v851
    %v1182 = vpack.c.b16 %v862, %v852
    %v1183 = vpack.c.b16 %v863, %v853
    %v1184 = vpack.c.b16 %v864, %v854
    %v1185 = vpack.c.b16 %v865, %v855
    %v1186 = vpack.c.b16 %v866, %v856
    %v1187 = vpack.c.b16 %v867, %v857
    %v1188 = vpack.c.b16 %v868, %v858
    %v1189 = vpack.c.b16 %v879, %v869
    %v1190 = vpack.c.b16 %v880, %v870
    %v1191 = vpack.c.b16 %v881, %v871
    %v1192 = vpack.c.b16 %v882, %v872
    %v1193 = vpack.c.b16 %v883, %v873
    %v1194 = vpack.c.b16 %v884, %v874
    %v1195 = vpack.c.b16 %v885, %v875
    %v1196 = vpack.c.b16 %v886, %v876
    %v1197 = vpack.c.b16 %v887, %v877
    %v1198 = vpack.c.b16 %v888, %v878
    %v1199 = vpack.c.b16 %v899, %v889
    %v1200 = vpack.c.b16 %v900, %v890
    %v1201 = vpack.c.b16 %v901, %v891
    %v1202 = vpack.c.b16 %v902, %v892
    %v1203 = vpack.c.b16 %v903, %v893
    %v1204 = vpack.c.b16 %v904, %v894
    %v1205 = vpack.c.b16 %v905, %v895
    %v1206 = vpack.c.b16 %v906, %v896
    %v1207 = vpack.c.b16 %v907, %v897
    %v1208 = vpack.c.b16 %v908, %v898
    %v1209 = vpack.c.b16 %v919, %v909
    %v1210 = vpack.c.b16 %v920, %v910
    %v1211 = vpack.c.b16 %v921, %v911
    %v1212 = vpack.c.b16 %v922, %v912
    %v1213 = vpack.c.b16 %v923, %v913
    %v1214 = vpack.c.b16 %v924, %v914
    %v1215 = vpack.c.b16 %v925, %v915
    %v1216 = vpack.c.b16 %v926, %v916
    %v1217 = vpack.c.b16 %v927, %v917
    %v1218 = vpack.c.b16 %v928, %v918
    %v1219 = vpack.c.b16 %v939, %v929
    %v1220 = vpack.c.b16 %v940, %v930
    %v1221 = vpack.c.b16 %v941, %v931
    %v1222 = vpack.c.b16 %v942, %v932
    %v1223 = vpack.c.b16 %v943, %v933
    %v1224 = vpack.c.b16 %v944, %v934
    %v1225 = vpack.c.b16 %v945, %v935
    %v1226 = vpack.c.b16 %v946, %v936
    %v1227 = vpack.c.b16 %v947, %v937
    %v1228 = vpack.c.b16 %v948, %v938
    %v1229 = vpack.c.b16 %v959, %v949
    %v1230 = vpack.c.b16 %v960, %v950
    %v1231 = vpack.c.b16 %v961, %v951
    %v1232 = vpack.c.b16 %v962, %v952
    %v1233 = vpack.c.b16 %v963, %v953
    %v1234 = vpack.c.b16 %v964, %v954
    %v1235 = vpack.c.b16 %v965, %v955
    %v1236 = vpack.c.b16 %v966, %v956
    %v1237 = vpack.c.b16 %v967, %v957
    %v1238 = vpack.c.b16 %v968, %v958
    %v1239 = vpack.c.b16 %v979, %v969
    %v1240 = vpack.c.b16 %v980, %v970
    %v1241 = vpack.c.b16 %v981, %v971
    %v1242 = vpack.c.b16 %v982, %v972
    %v1243 = vpack.c.b16 %v983, %v973
    %v1244 = vpack.c.b16 %v984, %v974
    %v1245 = vpack.c.b16 %v985, %v975
    %v1246 = vpack.c.b16 %v986, %v976
    %v1247 = vpack.c.b16 %v987, %v977
    %v1248 = vpack.c.b16 %v988, %v978
    %v1249 = vpack.c.b16 %v999, %v989
    %v1250 = vpack.c.b16 %v1000, %v990
    %v1251 = vpack.c.b16 %v1001, %v991
    %v1252 = vpack.c.b16 %v1002, %v992
    %v1253 = vpack.c.b16 %v1003, %v993
    %v1254 = vpack.c.b16 %v1004, %v994
    %v1255 = vpack.c.b16 %v1005, %v995
    %v1256 = vpack.c.b16 %v1006, %v996
    %v1257 = vpack.c.b16 %v1007, %v997
    %v1258 = vpack.c.b16 %v1008, %v998
    %v1259 = vpack.c.b16 %v1019, %v1009
    %v1260 = vpack.c.b16 %v1020, %v1010
    %v1261 = vpack.c.b16 %v1021, %v1011
    %v1262 = vpack.c.b16 %v1022, %v1012
    %v1263 = vpack.c.b16 %v1023, %v1013
    %v1264 = vpack.c.b16 %v1024, %v1014
    %v1265 = vpack.c.b16 %v1025, %v1015
    %v1266 = vpack.c.b16 %v1026, %v1016
    %v1267 = vpack.c.b16 %v1027, %v1017
    %v1268 = vpack.c.b16 %v1028, %v1018
    %1509 = vmatprep.subr.bf16.mxu0 %v1030
    %1510 = vmatpush1.bf16.msra.mxu0 %v1029
    %1511 = vmatprep.subr.bf16.mxu0 %v1040
    %1512 = vmatpush1.bf16.msra.mxu0 %v1039
    %1513 = vmatprep.subr.bf16.mxu0 %v1050
    %1514 = vmatpush1.bf16.msra.mxu0 %v1049
    %1515 = vmatprep.subr.bf16.mxu0 %v1060
    %1516 = vmatpush1.bf16.msra.mxu0 %v1059
    %1517 = vmatprep.subr.bf16.mxu0 %v1070
    %1518 = vmatpush1.bf16.msra.mxu0 %v1069
    %1519 = vmatprep.subr.bf16.mxu0 %v1080
    %1520 = vmatpush1.bf16.msra.mxu0 %v1079
    %1521 = vmatprep.subr.bf16.mxu0 %v1090
    %1522 = vmatpush1.bf16.msra.mxu0 %v1089
    %1523 = vmatprep.subr.bf16.mxu0 %v1100
    %1524 = vmatpush1.bf16.msra.mxu0 %v1099
    %1525 = vmatprep.subr.bf16.mxu0 %v1110
    %1526 = vmatpush1.bf16.msra.mxu0 %v1109
    %1527 = vmatprep.subr.bf16.mxu0 %v1120
    %1528 = vmatpush1.bf16.msra.mxu0 %v1119
    %1529 = vmatprep.subr.bf16.mxu0 %v1130
    %1530 = vmatpush1.bf16.msra.mxu0 %v1129
    %1531 = vmatprep.subr.bf16.mxu0 %v1140
    %1532 = vmatpush1.bf16.msra.mxu0 %v1139
    %1533 = vmatprep.subr.bf16.mxu0 %v1150
    %1534 = vmatpush1.bf16.msra.mxu0 %v1149
    %1535 = vmatprep.subr.bf16.mxu0 %v1160
    %1536 = vmatpush1.bf16.msra.mxu0 %v1159
    %1537 = vmatprep.subr.bf16.mxu0 %v1170
    %1538 = vmatpush1.bf16.msra.mxu0 %v1169
    %1539 = vmatprep.subr.bf16.mxu0 %v1180
    %1540 = vmatpush1.bf16.msra.mxu0 %v1179
    %1541 = vmatprep.mubr.bf16.mxu0 %v67
    %1542 = vmatmul.mubr.bf16.gmra.mrb[0].mxu0 %v66
    %v1543 = vpop.f32.mrb[0].mxu0
    %v1544 = vadd.f32 0.0, %v1543
    %v1545 = vpop.f32.mrb[0].mxu0
    %v1546 = vadd.f32 0.0, %v1545
    %v1547 = vpop.f32.mrb[0].mxu0
    %v1548 = vpop.f32.mrb[0].mxu0
    %1549 = vdwg.mxu0
    %1550 = vmatprep.subr.bf16.mxu0 %v1190
    %1551 = vmatpush1.bf16.msra.mxu0 %v1189
    %1552 = vmatprep.subr.bf16.mxu0 %v1200
    %1553 = vmatpush1.bf16.msra.mxu0 %v1199
    %1554 = vmatprep.subr.bf16.mxu0 %v1210
    %1555 = vmatpush1.bf16.msra.mxu0 %v1209
    %1556 = vmatprep.subr.bf16.mxu0 %v1220
    %1557 = vmatpush1.bf16.msra.mxu0 %v1219
    %1558 = vmatprep.subr.bf16.mxu0 %v1230
    %1559 = vmatpush1.bf16.msra.mxu0 %v1229
    %1560 = vmatprep.subr.bf16.mxu0 %v1240
    %1561 = vmatpush1.bf16.msra.mxu0 %v1239
    %1562 = vmatprep.subr.bf16.mxu0 %v1250
    %1563 = vmatpush1.bf16.msra.mxu0 %v1249
    %1564 = vmatprep.subr.bf16.mxu0 %v1260
    %1565 = vmatpush1.bf16.msra.mxu0 %v1259
    %1566 = vmatprep.subr.bf16.mxu0 0
    %1567 = vmatpush1.bf16.msra.mxu0 0
    %1568 = vmatprep.subr.bf16.mxu0 0
    %1569 = vmatpush1.bf16.msra.mxu0 0
    %1570 = vmatprep.subr.bf16.mxu0 0
    %1571 = vmatpush1.bf16.msra.mxu0 0
    %1572 = vmatprep.subr.bf16.mxu0 0
    %1573 = vmatpush1.bf16.msra.mxu0 0
    %1574 = vmatprep.subr.bf16.mxu0 0
    %1575 = vmatpush1.bf16.msra.mxu0 0
    %1576 = vmatprep.subr.bf16.mxu0 0
    %1577 = vmatpush1.bf16.msra.mxu0 0
    %1578 = vmatprep.subr.bf16.mxu0 0
    %1579 = vmatpush1.bf16.msra.mxu0 0
    %1580 = vmatprep.subr.bf16.mxu0 0
    %1581 = vmatpush1.bf16.msra.mxu0 0
    %1582 = vmatprep.mubr.bf16.mxu0 0
    %1583 = vmatmul.mubr.bf16.gmra.mrb[0].mxu0 %v68
    %v1584 = vpop.f32.mrb[0].mxu0
    %v1585 = vadd.f32 %v1544, %v1584
    %v1586 = vpop.f32.mrb[0].mxu0
    %v1587 = vadd.f32 %v1546, %v1586
    %v1588 = vpop.f32.mrb[0].mxu0
    %v1589 = vpop.f32.mrb[0].mxu0
    %1590 = vdwg.mxu0
    %1591 = vmatprep.subr.bf16.mxu0 %v1032
    %1592 = vmatpush1.bf16.msra.mxu0 %v1031
    %1593 = vmatprep.subr.bf16.mxu0 %v1042
    %1594 = vmatpush1.bf16.msra.mxu0 %v1041
    %1595 = vmatprep.subr.bf16.mxu0 %v1052
    %1596 = vmatpush1.bf16.msra.mxu0 %v1051
    %1597 = vmatprep.subr.bf16.mxu0 %v1062
    %1598 = vmatpush1.bf16.msra.mxu0 %v1061
    %1599 = vmatprep.subr.bf16.mxu0 %v1072
    %1600 = vmatpush1.bf16.msra.mxu0 %v1071
    %1601 = vmatprep.subr.bf16.mxu0 %v1082
    %1602 = vmatpush1.bf16.msra.mxu0 %v1081
    %1603 = vmatprep.subr.bf16.mxu0 %v1092
    %1604 = vmatpush1.bf16.msra.mxu0 %v1091
    %1605 = vmatprep.subr.bf16.mxu0 %v1102
    %1606 = vmatpush1.bf16.msra.mxu0 %v1101
    %1607 = vmatprep.subr.bf16.mxu0 %v1112
    %1608 = vmatpush1.bf16.msra.mxu0 %v1111
    %1609 = vmatprep.subr.bf16.mxu0 %v1122
    %1610 = vmatpush1.bf16.msra.mxu0 %v1121
    %1611 = vmatprep.subr.bf16.mxu0 %v1132
    %1612 = vmatpush1.bf16.msra.mxu0 %v1131
    %1613 = vmatprep.subr.bf16.mxu0 %v1142
    %1614 = vmatpush1.bf16.msra.mxu0 %v1141
    %1615 = vmatprep.subr.bf16.mxu0 %v1152
    %1616 = vmatpush1.bf16.msra.mxu0 %v1151
    %1617 = vmatprep.subr.bf16.mxu0 %v1162
    %1618 = vmatpush1.bf16.msra.mxu0 %v1161
    %1619 = vmatprep.subr.bf16.mxu0 %v1172
    %1620 = vmatpush1.bf16.msra.mxu0 %v1171
    %1621 = vmatprep.subr.bf16.mxu0 %v1182
    %1622 = vmatpush1.bf16.msra.mxu0 %v1181
    %1623 = vmatprep.mubr.bf16.mxu0 %v67
    %1624 = vmatmul.mubr.bf16.gmra.mrb[0].mxu0 %v66
    %v1625 = vpop.f32.mrb[0].mxu0
    %v1626 = vadd.f32 0.0, %v1625
    %v1627 = vpop.f32.mrb[0].mxu0
    %v1628 = vadd.f32 0.0, %v1627
    %v1629 = vpop.f32.mrb[0].mxu0
    %v1630 = vpop.f32.mrb[0].mxu0
    %1631 = vdwg.mxu0
    %1632 = vmatprep.subr.bf16.mxu0 %v1192
    %1633 = vmatpush1.bf16.msra.mxu0 %v1191
    %1634 = vmatprep.subr.bf16.mxu0 %v1202
    %1635 = vmatpush1.bf16.msra.mxu0 %v1201
    %1636 = vmatprep.subr.bf16.mxu0 %v1212
    %1637 = vmatpush1.bf16.msra.mxu0 %v1211
    %1638 = vmatprep.subr.bf16.mxu0 %v1222
    %1639 = vmatpush1.bf16.msra.mxu0 %v1221
    %1640 = vmatprep.subr.bf16.mxu0 %v1232
    %1641 = vmatpush1.bf16.msra.mxu0 %v1231
    %1642 = vmatprep.subr.bf16.mxu0 %v1242
    %1643 = vmatpush1.bf16.msra.mxu0 %v1241
    %1644 = vmatprep.subr.bf16.mxu0 %v1252
    %1645 = vmatpush1.bf16.msra.mxu0 %v1251
    %1646 = vmatprep.subr.bf16.mxu0 %v1262
    %1647 = vmatpush1.bf16.msra.mxu0 %v1261
    %1648 = vmatprep.subr.bf16.mxu0 0
    %1649 = vmatpush1.bf16.msra.mxu0 0
    %1650 = vmatprep.subr.bf16.mxu0 0
    %1651 = vmatpush1.bf16.msra.mxu0 0
    %1652 = vmatprep.subr.bf16.mxu0 0
    %1653 = vmatpush1.bf16.msra.mxu0 0
    %1654 = vmatprep.subr.bf16.mxu0 0
    %1655 = vmatpush1.bf16.msra.mxu0 0
    %1656 = vmatprep.subr.bf16.mxu0 0
    %1657 = vmatpush1.bf16.msra.mxu0 0
    %1658 = vmatprep.subr.bf16.mxu0 0
    %1659 = vmatpush1.bf16.msra.mxu0 0
    %1660 = vmatprep.subr.bf16.mxu0 0
    %1661 = vmatpush1.bf16.msra.mxu0 0
    %1662 = vmatprep.subr.bf16.mxu0 0
    %1663 = vmatpush1.bf16.msra.mxu0 0
    %1664 = vmatprep.mubr.bf16.mxu0 0
    %1665 = vmatmul.mubr.bf16.gmra.mrb[0].mxu0 %v68
    %v1666 = vpop.f32.mrb[0].mxu0
    %v1667 = vadd.f32 %v1626, %v1666
    %v1668 = vpop.f32.mrb[0].mxu0
    %v1669 = vadd.f32 %v1628, %v1668
    %v1670 = vpop.f32.mrb[0].mxu0
    %v1671 = vpop.f32.mrb[0].mxu0
    %1672 = vdwg.mxu0
    %1673 = vmatprep.subr.bf16.mxu0 %v1034
    %1674 = vmatpush1.bf16.msra.mxu0 %v1033
    %1675 = vmatprep.subr.bf16.mxu0 %v1044
    %1676 = vmatpush1.bf16.msra.mxu0 %v1043
    %1677 = vmatprep.subr.bf16.mxu0 %v1054
    %1678 = vmatpush1.bf16.msra.mxu0 %v1053
    %1679 = vmatprep.subr.bf16.mxu0 %v1064
    %1680 = vmatpush1.bf16.msra.mxu0 %v1063
    %1681 = vmatprep.subr.bf16.mxu0 %v1074
    %1682 = vmatpush1.bf16.msra.mxu0 %v1073
    %1683 = vmatprep.subr.bf16.mxu0 %v1084
    %1684 = vmatpush1.bf16.msra.mxu0 %v1083
    %1685 = vmatprep.subr.bf16.mxu0 %v1094
    %1686 = vmatpush1.bf16.msra.mxu0 %v1093
    %1687 = vmatprep.subr.bf16.mxu0 %v1104
    %1688 = vmatpush1.bf16.msra.mxu0 %v1103
    %1689 = vmatprep.subr.bf16.mxu0 %v1114
    %1690 = vmatpush1.bf16.msra.mxu0 %v1113
    %1691 = vmatprep.subr.bf16.mxu0 %v1124
    %1692 = vmatpush1.bf16.msra.mxu0 %v1123
    %1693 = vmatprep.subr.bf16.mxu0 %v1134
    %1694 = vmatpush1.bf16.msra.mxu0 %v1133
    %1695 = vmatprep.subr.bf16.mxu0 %v1144
    %1696 = vmatpush1.bf16.msra.mxu0 %v1143
    %1697 = vmatprep.subr.bf16.mxu0 %v1154
    %1698 = vmatpush1.bf16.msra.mxu0 %v1153
    %1699 = vmatprep.subr.bf16.mxu0 %v1164
    %1700 = vmatpush1.bf16.msra.mxu0 %v1163
    %1701 = vmatprep.subr.bf16.mxu0 %v1174
    %1702 = vmatpush1.bf16.msra.mxu0 %v1173
    %1703 = vmatprep.subr.bf16.mxu0 %v1184
    %1704 = vmatpush1.bf16.msra.mxu0 %v1183
    %1705 = vmatprep.mubr.bf16.mxu0 %v67
    %1706 = vmatmul.mubr.bf16.gmra.mrb[0].mxu0 %v66
    %v1707 = vpop.f32.mrb[0].mxu0
    %v1708 = vadd.f32 0.0, %v1707
    %v1709 = vpop.f32.mrb[0].mxu0
    %v1710 = vadd.f32 0.0, %v1709
    %v1711 = vpop.f32.mrb[0].mxu0
    %v1712 = vpop.f32.mrb[0].mxu0
    %1713 = vdwg.mxu0
    %1714 = vmatprep.subr.bf16.mxu0 %v1194
    %1715 = vmatpush1.bf16.msra.mxu0 %v1193
    %1716 = vmatprep.subr.bf16.mxu0 %v1204
    %1717 = vmatpush1.bf16.msra.mxu0 %v1203
    %1718 = vmatprep.subr.bf16.mxu0 %v1214
    %1719 = vmatpush1.bf16.msra.mxu0 %v1213
    %1720 = vmatprep.subr.bf16.mxu0 %v1224
    %1721 = vmatpush1.bf16.msra.mxu0 %v1223
    %1722 = vmatprep.subr.bf16.mxu0 %v1234
    %1723 = vmatpush1.bf16.msra.mxu0 %v1233
    %1724 = vmatprep.subr.bf16.mxu0 %v1244
    %1725 = vmatpush1.bf16.msra.mxu0 %v1243
    %1726 = vmatprep.subr.bf16.mxu0 %v1254
    %1727 = vmatpush1.bf16.msra.mxu0 %v1253
    %1728 = vmatprep.subr.bf16.mxu0 %v1264
    %1729 = vmatpush1.bf16.msra.mxu0 %v1263
    %1730 = vmatprep.subr.bf16.mxu0 0
    %1731 = vmatpush1.bf16.msra.mxu0 0
    %1732 = vmatprep.subr.bf16.mxu0 0
    %1733 = vmatpush1.bf16.msra.mxu0 0
    %1734 = vmatprep.subr.bf16.mxu0 0
    %1735 = vmatpush1.bf16.msra.mxu0 0
    %1736 = vmatprep.subr.bf16.mxu0 0
    %1737 = vmatpush1.bf16.msra.mxu0 0
    %1738 = vmatprep.subr.bf16.mxu0 0
    %1739 = vmatpush1.bf16.msra.mxu0 0
    %1740 = vmatprep.subr.bf16.mxu0 0
    %1741 = vmatpush1.bf16.msra.mxu0 0
    %1742 = vmatprep.subr.bf16.mxu0 0
    %1743 = vmatpush1.bf16.msra.mxu0 0
    %1744 = vmatprep.subr.bf16.mxu0 0
    %1745 = vmatpush1.bf16.msra.mxu0 0
    %1746 = vmatprep.mubr.bf16.mxu0 0
    %1747 = vmatmul.mubr.bf16.gmra.mrb[0].mxu0 %v68
    %v1748 = vpop.f32.mrb[0].mxu0
    %v1749 = vadd.f32 %v1708, %v1748
    %v1750 = vpop.f32.mrb[0].mxu0
    %v1751 = vadd.f32 %v1710, %v1750
    %v1752 = vpop.f32.mrb[0].mxu0
    %v1753 = vpop.f32.mrb[0].mxu0
    %1754 = vdwg.mxu0
    %1755 = vmatprep.subr.bf16.mxu0 %v1036
    %1756 = vmatpush1.bf16.msra.mxu0 %v1035
    %1757 = vmatprep.subr.bf16.mxu0 %v1046
    %1758 = vmatpush1.bf16.msra.mxu0 %v1045
    %1759 = vmatprep.subr.bf16.mxu0 %v1056
    %1760 = vmatpush1.bf16.msra.mxu0 %v1055
    %1761 = vmatprep.subr.bf16.mxu0 %v1066
    %1762 = vmatpush1.bf16.msra.mxu0 %v1065
    %1763 = vmatprep.subr.bf16.mxu0 %v1076
    %1764 = vmatpush1.bf16.msra.mxu0 %v1075
    %1765 = vmatprep.subr.bf16.mxu0 %v1086
    %1766 = vmatpush1.bf16.msra.mxu0 %v1085
    %1767 = vmatprep.subr.bf16.mxu0 %v1096
    %1768 = vmatpush1.bf16.msra.mxu0 %v1095
    %1769 = vmatprep.subr.bf16.mxu0 %v1106
    %1770 = vmatpush1.bf16.msra.mxu0 %v1105
    %1771 = vmatprep.subr.bf16.mxu0 %v1116
    %1772 = vmatpush1.bf16.msra.mxu0 %v1115
    %1773 = vmatprep.subr.bf16.mxu0 %v1126
    %1774 = vmatpush1.bf16.msra.mxu0 %v1125
    %1775 = vmatprep.subr.bf16.mxu0 %v1136
    %1776 = vmatpush1.bf16.msra.mxu0 %v1135
    %1777 = vmatprep.subr.bf16.mxu0 %v1146
    %1778 = vmatpush1.bf16.msra.mxu0 %v1145
    %1779 = vmatprep.subr.bf16.mxu0 %v1156
    %1780 = vmatpush1.bf16.msra.mxu0 %v1155
    %1781 = vmatprep.subr.bf16.mxu0 %v1166
    %1782 = vmatpush1.bf16.msra.mxu0 %v1165
    %1783 = vmatprep.subr.bf16.mxu0 %v1176
    %1784 = vmatpush1.bf16.msra.mxu0 %v1175
    %1785 = vmatprep.subr.bf16.mxu0 %v1186
    %1786 = vmatpush1.bf16.msra.mxu0 %v1185
    %1787 = vmatprep.mubr.bf16.mxu0 %v67
    %1788 = vmatmul.mubr.bf16.gmra.mrb[0].mxu0 %v66
    %v1789 = vpop.f32.mrb[0].mxu0
    %v1790 = vadd.f32 0.0, %v1789
    %v1791 = vpop.f32.mrb[0].mxu0
    %v1792 = vadd.f32 0.0, %v1791
    %v1793 = vpop.f32.mrb[0].mxu0
    %v1794 = vpop.f32.mrb[0].mxu0
    %1795 = vdwg.mxu0
    %1796 = vmatprep.subr.bf16.mxu0 %v1196
    %1797 = vmatpush1.bf16.msra.mxu0 %v1195
    %1798 = vmatprep.subr.bf16.mxu0 %v1206
    %1799 = vmatpush1.bf16.msra.mxu0 %v1205
    %1800 = vmatprep.subr.bf16.mxu0 %v1216
    %1801 = vmatpush1.bf16.msra.mxu0 %v1215
    %1802 = vmatprep.subr.bf16.mxu0 %v1226
    %1803 = vmatpush1.bf16.msra.mxu0 %v1225
    %1804 = vmatprep.subr.bf16.mxu0 %v1236
    %1805 = vmatpush1.bf16.msra.mxu0 %v1235
    %1806 = vmatprep.subr.bf16.mxu0 %v1246
    %1807 = vmatpush1.bf16.msra.mxu0 %v1245
    %1808 = vmatprep.subr.bf16.mxu0 %v1256
    %1809 = vmatpush1.bf16.msra.mxu0 %v1255
    %1810 = vmatprep.subr.bf16.mxu0 %v1266
    %1811 = vmatpush1.bf16.msra.mxu0 %v1265
    %1812 = vmatprep.subr.bf16.mxu0 0
    %1813 = vmatpush1.bf16.msra.mxu0 0
    %1814 = vmatprep.subr.bf16.mxu0 0
    %1815 = vmatpush1.bf16.msra.mxu0 0
    %1816 = vmatprep.subr.bf16.mxu0 0
    %1817 = vmatpush1.bf16.msra.mxu0 0
    %1818 = vmatprep.subr.bf16.mxu0 0
    %1819 = vmatpush1.bf16.msra.mxu0 0
    %1820 = vmatprep.subr.bf16.mxu0 0
    %1821 = vmatpush1.bf16.msra.mxu0 0
    %1822 = vmatprep.subr.bf16.mxu0 0
    %1823 = vmatpush1.bf16.msra.mxu0 0
    %1824 = vmatprep.subr.bf16.mxu0 0
    %1825 = vmatpush1.bf16.msra.mxu0 0
    %1826 = vmatprep.subr.bf16.mxu0 0
    %1827 = vmatpush1.bf16.msra.mxu0 0
    %1828 = vmatprep.mubr.bf16.mxu0 0
    %1829 = vmatmul.mubr.bf16.gmra.mrb[0].mxu0 %v68
    %v1830 = vpop.f32.mrb[0].mxu0
    %v1831 = vadd.f32 %v1790, %v1830
    %v1832 = vpop.f32.mrb[0].mxu0
    %v1833 = vadd.f32 %v1792, %v1832
    %v1834 = vpop.f32.mrb[0].mxu0
    %v1835 = vpop.f32.mrb[0].mxu0
    %1836 = vdwg.mxu0
    %1837 = vmatprep.subr.bf16.mxu0 %v1038
    %1838 = vmatpush1.bf16.msra.mxu0 %v1037
    %1839 = vmatprep.subr.bf16.mxu0 %v1048
    %1840 = vmatpush1.bf16.msra.mxu0 %v1047
    %1841 = vmatprep.subr.bf16.mxu0 %v1058
    %1842 = vmatpush1.bf16.msra.mxu0 %v1057
    %1843 = vmatprep.subr.bf16.mxu0 %v1068
    %1844 = vmatpush1.bf16.msra.mxu0 %v1067
    %1845 = vmatprep.subr.bf16.mxu0 %v1078
    %1846 = vmatpush1.bf16.msra.mxu0 %v1077
    %1847 = vmatprep.subr.bf16.mxu0 %v1088
    %1848 = vmatpush1.bf16.msra.mxu0 %v1087
    %1849 = vmatprep.subr.bf16.mxu0 %v1098
    %1850 = vmatpush1.bf16.msra.mxu0 %v1097
    %1851 = vmatprep.subr.bf16.mxu0 %v1108
    %1852 = vmatpush1.bf16.msra.mxu0 %v1107
    %1853 = vmatprep.subr.bf16.mxu0 %v1118
    %1854 = vmatpush1.bf16.msra.mxu0 %v1117
    %1855 = vmatprep.subr.bf16.mxu0 %v1128
    %1856 = vmatpush1.bf16.msra.mxu0 %v1127
    %1857 = vmatprep.subr.bf16.mxu0 %v1138
    %1858 = vmatpush1.bf16.msra.mxu0 %v1137
    %1859 = vmatprep.subr.bf16.mxu0 %v1148
    %1860 = vmatpush1.bf16.msra.mxu0 %v1147
    %1861 = vmatprep.subr.bf16.mxu0 %v1158
    %1862 = vmatpush1.bf16.msra.mxu0 %v1157
    %1863 = vmatprep.subr.bf16.mxu0 %v1168
    %1864 = vmatpush1.bf16.msra.mxu0 %v1167
    %1865 = vmatprep.subr.bf16.mxu0 %v1178
    %1866 = vmatpush1.bf16.msra.mxu0 %v1177
    %1867 = vmatprep.subr.bf16.mxu0 %v1188
    %1868 = vmatpush1.bf16.msra.mxu0 %v1187
    %1869 = vmatprep.mubr.bf16.mxu0 %v67
    %1870 = vmatmul.mubr.bf16.gmra.mrb[0].mxu0 %v66
    %v1871 = vpop.f32.mrb[0].mxu0
    %v1872 = vadd.f32 0.0, %v1871
    %v1873 = vpop.f32.mrb[0].mxu0
    %v1874 = vadd.f32 0.0, %v1873
    %v1875 = vpop.f32.mrb[0].mxu0
    %v1876 = vpop.f32.mrb[0].mxu0
    %1877 = vdwg.mxu0
    %1878 = vmatprep.subr.bf16.mxu0 %v1198
    %1879 = vmatpush1.bf16.msra.mxu0 %v1197
    %1880 = vmatprep.subr.bf16.mxu0 %v1208
    %1881 = vmatpush1.bf16.msra.mxu0 %v1207
    %1882 = vmatprep.subr.bf16.mxu0 %v1218
    %1883 = vmatpush1.bf16.msra.mxu0 %v1217
    %1884 = vmatprep.subr.bf16.mxu0 %v1228
    %1885 = vmatpush1.bf16.msra.mxu0 %v1227
    %1886 = vmatprep.subr.bf16.mxu0 %v1238
    %1887 = vmatpush1.bf16.msra.mxu0 %v1237
    %1888 = vmatprep.subr.bf16.mxu0 %v1248
    %1889 = vmatpush1.bf16.msra.mxu0 %v1247
    %1890 = vmatprep.subr.bf16.mxu0 %v1258
    %1891 = vmatpush1.bf16.msra.mxu0 %v1257
    %1892 = vmatprep.subr.bf16.mxu0 %v1268
    %1893 = vmatpush1.bf16.msra.mxu0 %v1267
    %1894 = vmatprep.subr.bf16.mxu0 0
    %1895 = vmatpush1.bf16.msra.mxu0 0
    %1896 = vmatprep.subr.bf16.mxu0 0
    %1897 = vmatpush1.bf16.msra.mxu0 0
    %1898 = vmatprep.subr.bf16.mxu0 0
    %1899 = vmatpush1.bf16.msra.mxu0 0
    %1900 = vmatprep.subr.bf16.mxu0 0
    %1901 = vmatpush1.bf16.msra.mxu0 0
    %1902 = vmatprep.subr.bf16.mxu0 0
    %1903 = vmatpush1.bf16.msra.mxu0 0
    %1904 = vmatprep.subr.bf16.mxu0 0
    %1905 = vmatpush1.bf16.msra.mxu0 0
    %1906 = vmatprep.subr.bf16.mxu0 0
    %1907 = vmatpush1.bf16.msra.mxu0 0
    %1908 = vmatprep.subr.bf16.mxu0 0
    %1909 = vmatpush1.bf16.msra.mxu0 0
    %1910 = vmatprep.mubr.bf16.mxu0 0
    %1911 = vmatmul.mubr.bf16.gmra.mrb[0].mxu0 %v68
    %v1912 = vpop.f32.mrb[0].mxu0
    %v1913 = vadd.f32 %v1872, %v1912
    %v1914 = vpop.f32.mrb[0].mxu0
    %v1915 = vadd.f32 %v1874, %v1914
    %v1916 = vpop.f32.mrb[0].mxu0
    %v1917 = vpop.f32.mrb[0].mxu0
    %1918 = vdwg.mxu0
    %v1919 = vmax.f32 %v1585, 0.0
    %v1920 = vmax.f32 %v1587, 0.0
    %v1921 = vmax.f32 %v1667, 0.0
    %v1922 = vmax.f32 %v1669, 0.0
    %v1923 = vmax.f32 %v1749, 0.0
    %v1924 = vmax.f32 %v1751, 0.0
    %v1925 = vmax.f32 %v1831, 0.0
    %v1926 = vmax.f32 %v1833, 0.0
    %v1927 = vmax.f32 %v1913, 0.0
    %v1928 = vmax.f32 %v1915, 0.0
    %v1929 = vld [vmem:[%s2] sm:$0xff]
    %v1930 = vld [vmem:[%s2 + $0x8] sm:$0xff]
    %v1931 = vld [vmem:[%s2 + $0x10] sm:$0xf]
    %v1932 = vrot.slane %v1919, 4
    %v1933 = vadd.f32 %v1919, %v1932
    %v1934 = vrot.slane %v1933, 2
    %v1935 = vadd.f32 %v1933, %v1934
    %v1936 = vrot.slane %v1935, 1
    %v1937 = vadd.f32 %v1935, %v1936
    %v1938 = vrot.slane %v1920, 4
    %v1939 = vadd.f32 %v1920, %v1938
    %v1940 = vrot.slane %v1939, 2
    %v1941 = vadd.f32 %v1939, %v1940
    %v1942 = vrot.slane %v1941, 1
    %v1943 = vadd.f32 %v1941, %v1942
    %v1944 = vrot.slane %v1921, 4
    %v1945 = vadd.f32 %v1921, %v1944
    %v1946 = vrot.slane %v1945, 2
    %v1947 = vadd.f32 %v1945, %v1946
    %v1948 = vrot.slane %v1947, 1
    %v1949 = vadd.f32 %v1947, %v1948
    %v1950 = vrot.slane %v1922, 4
    %v1951 = vadd.f32 %v1922, %v1950
    %v1952 = vrot.slane %v1951, 2
    %v1953 = vadd.f32 %v1951, %v1952
    %v1954 = vrot.slane %v1953, 1
    %v1955 = vadd.f32 %v1953, %v1954
    %v1956 = vrot.slane %v1923, 4
    %v1957 = vadd.f32 %v1923, %v1956
    %v1958 = vrot.slane %v1957, 2
    %v1959 = vadd.f32 %v1957, %v1958
    %v1960 = vrot.slane %v1959, 1
    %v1961 = vadd.f32 %v1959, %v1960
    %v1962 = vrot.slane %v1924, 4
    %v1963 = vadd.f32 %v1924, %v1962
    %v1964 = vrot.slane %v1963, 2
    %v1965 = vadd.f32 %v1963, %v1964
    %v1966 = vrot.slane %v1965, 1
    %v1967 = vadd.f32 %v1965, %v1966
    %v1968 = vrot.slane %v1925, 4
    %v1969 = vadd.f32 %v1925, %v1968
    %v1970 = vrot.slane %v1969, 2
    %v1971 = vadd.f32 %v1969, %v1970
    %v1972 = vrot.slane %v1971, 1
    %v1973 = vadd.f32 %v1971, %v1972
    %v1974 = vrot.slane %v1926, 4
    %v1975 = vadd.f32 %v1926, %v1974
    %v1976 = vrot.slane %v1975, 2
    %v1977 = vadd.f32 %v1975, %v1976
    %v1978 = vrot.slane %v1977, 1
    %v1979 = vadd.f32 %v1977, %v1978
    %v1980 = vrot.slane %v1927, 4
    %v1981 = vadd.f32 %v1927, %v1980
    %v1982 = vrot.slane %v1981, 2
    %v1983 = vadd.f32 %v1981, %v1982
    %v1984 = vrot.slane %v1983, 1
    %v1985 = vadd.f32 %v1983, %v1984
    %v1986 = vrot.slane %v1928, 4
    %v1987 = vadd.f32 %v1928, %v1986
    %v1988 = vrot.slane %v1987, 2
    %v1989 = vadd.f32 %v1987, %v1988
    %v1990 = vrot.slane %v1989, 1
    %v1991 = vadd.f32 %v1989, %v1990
    %v1992 = vrcp.pop 8.0
    %v1993 = vmul.f32 %v1937, %v1992
    %v1994 = vmul.f32 %v1943, %v1992
    %v1995 = vmul.f32 %v1949, %v1992
    %v1996 = vmul.f32 %v1955, %v1992
    %v1997 = vmul.f32 %v1961, %v1992
    %v1998 = vmul.f32 %v1967, %v1992
    %v1999 = vmul.f32 %v1973, %v1992
    %v2000 = vmul.f32 %v1979, %v1992
    %v2001 = vmul.f32 %v1985, %v1992
    %v2002 = vmul.f32 %v1991, %v1992
    %v2003 = vmul.f32 %v1919, %v1919
    %v2004 = vmul.f32 %v1920, %v1920
    %v2005 = vmul.f32 %v1921, %v1921
    %v2006 = vmul.f32 %v1922, %v1922
    %v2007 = vmul.f32 %v1923, %v1923
    %v2008 = vmul.f32 %v1924, %v1924
    %v2009 = vmul.f32 %v1925, %v1925
    %v2010 = vmul.f32 %v1926, %v1926
    %v2011 = vmul.f32 %v1927, %v1927
    %v2012 = vmul.f32 %v1928, %v1928
    %v2013 = vrot.slane %v2003, 4
    %v2014 = vadd.f32 %v2003, %v2013
    %v2015 = vrot.slane %v2014, 2
    %v2016 = vadd.f32 %v2014, %v2015
    %v2017 = vrot.slane %v2016, 1
    %v2018 = vadd.f32 %v2016, %v2017
    %v2019 = vrot.slane %v2004, 4
    %v2020 = vadd.f32 %v2004, %v2019
    %v2021 = vrot.slane %v2020, 2
    %v2022 = vadd.f32 %v2020, %v2021
    %v2023 = vrot.slane %v2022, 1
    %v2024 = vadd.f32 %v2022, %v2023
    %v2025 = vrot.slane %v2005, 4
    %v2026 = vadd.f32 %v2005, %v2025
    %v2027 = vrot.slane %v2026, 2
    %v2028 = vadd.f32 %v2026, %v2027
    %v2029 = vrot.slane %v2028, 1
    %v2030 = vadd.f32 %v2028, %v2029
    %v2031 = vrot.slane %v2006, 4
    %v2032 = vadd.f32 %v2006, %v2031
    %v2033 = vrot.slane %v2032, 2
    %v2034 = vadd.f32 %v2032, %v2033
    %v2035 = vrot.slane %v2034, 1
    %v2036 = vadd.f32 %v2034, %v2035
    %v2037 = vrot.slane %v2007, 4
    %v2038 = vadd.f32 %v2007, %v2037
    %v2039 = vrot.slane %v2038, 2
    %v2040 = vadd.f32 %v2038, %v2039
    %v2041 = vrot.slane %v2040, 1
    %v2042 = vadd.f32 %v2040, %v2041
    %v2043 = vrot.slane %v2008, 4
    %v2044 = vadd.f32 %v2008, %v2043
    %v2045 = vrot.slane %v2044, 2
    %v2046 = vadd.f32 %v2044, %v2045
    %v2047 = vrot.slane %v2046, 1
    %v2048 = vadd.f32 %v2046, %v2047
    %v2049 = vrot.slane %v2009, 4
    %v2050 = vadd.f32 %v2009, %v2049
    %v2051 = vrot.slane %v2050, 2
    %v2052 = vadd.f32 %v2050, %v2051
    %v2053 = vrot.slane %v2052, 1
    %v2054 = vadd.f32 %v2052, %v2053
    %v2055 = vrot.slane %v2010, 4
    %v2056 = vadd.f32 %v2010, %v2055
    %v2057 = vrot.slane %v2056, 2
    %v2058 = vadd.f32 %v2056, %v2057
    %v2059 = vrot.slane %v2058, 1
    %v2060 = vadd.f32 %v2058, %v2059
    %v2061 = vrot.slane %v2011, 4
    %v2062 = vadd.f32 %v2011, %v2061
    %v2063 = vrot.slane %v2062, 2
    %v2064 = vadd.f32 %v2062, %v2063
    %v2065 = vrot.slane %v2064, 1
    %v2066 = vadd.f32 %v2064, %v2065
    %v2067 = vrot.slane %v2012, 4
    %v2068 = vadd.f32 %v2012, %v2067
    %v2069 = vrot.slane %v2068, 2
    %v2070 = vadd.f32 %v2068, %v2069
    %v2071 = vrot.slane %v2070, 1
    %v2072 = vadd.f32 %v2070, %v2071
    %v2073 = vmul.f32 %v2018, %v1992
    %v2074 = vmul.f32 %v2024, %v1992
    %v2075 = vmul.f32 %v2030, %v1992
    %v2076 = vmul.f32 %v2036, %v1992
    %v2077 = vmul.f32 %v2042, %v1992
    %v2078 = vmul.f32 %v2048, %v1992
    %v2079 = vmul.f32 %v2054, %v1992
    %v2080 = vmul.f32 %v2060, %v1992
    %v2081 = vmul.f32 %v2066, %v1992
    %v2082 = vmul.f32 %v2072, %v1992
    %v2083 = vmul.f32 %v1993, %v1993
    %v2084 = vmul.f32 %v1994, %v1994
    %v2085 = vmul.f32 %v1995, %v1995
    %v2086 = vmul.f32 %v1996, %v1996
    %v2087 = vmul.f32 %v1997, %v1997
    %v2088 = vmul.f32 %v1998, %v1998
    %v2089 = vmul.f32 %v1999, %v1999
    %v2090 = vmul.f32 %v2000, %v2000
    %v2091 = vmul.f32 %v2001, %v2001
    %v2092 = vmul.f32 %v2002, %v2002
    %v2093 = vsub.f32 %v2073, %v2083
    %v2094 = vsub.f32 %v2074, %v2084
    %v2095 = vsub.f32 %v2075, %v2085
    %v2096 = vsub.f32 %v2076, %v2086
    %v2097 = vsub.f32 %v2077, %v2087
    %v2098 = vsub.f32 %v2078, %v2088
    %v2099 = vsub.f32 %v2079, %v2089
    %v2100 = vsub.f32 %v2080, %v2090
    %v2101 = vsub.f32 %v2081, %v2091
    %v2102 = vsub.f32 %v2082, %v2092
    %v2103 = vmax.f32 %v2093, 0.0
    %v2104 = vmax.f32 %v2094, 0.0
    %v2105 = vmax.f32 %v2095, 0.0
    %v2106 = vmax.f32 %v2096, 0.0
    %v2107 = vmax.f32 %v2097, 0.0
    %v2108 = vmax.f32 %v2098, 0.0
    %v2109 = vmax.f32 %v2099, 0.0
    %v2110 = vmax.f32 %v2100, 0.0
    %v2111 = vmax.f32 %v2101, 0.0
    %v2112 = vmax.f32 %v2102, 0.0
    %v2113 = vsub.f32 %v1919, %v1993
    %v2114 = vsub.f32 %v1920, %v1994
    %v2115 = vsub.f32 %v1921, %v1995
    %v2116 = vsub.f32 %v1922, %v1996
    %v2117 = vsub.f32 %v1923, %v1997
    %v2118 = vsub.f32 %v1924, %v1998
    %v2119 = vsub.f32 %v1925, %v1999
    %v2120 = vsub.f32 %v1926, %v2000
    %v2121 = vsub.f32 %v1927, %v2001
    %v2122 = vsub.f32 %v1928, %v2002
    %v2126 = vlaneseq
    %v2127 = vshrl.u32 %v2126, 7
    %v2128 = vsub.s32 0, %v2127
    %v2129 = vrot.slane %v1929, %v2128
    %v2130 = vlaneseq
    %v2131 = vshrl.u32 %v2130, 7
    %v2132 = vsub.s32 2, %v2131
    %v2133 = vrot.slane %v1929, %v2132
    %v2134 = vlaneseq
    %v2135 = vshrl.u32 %v2134, 7
    %v2136 = vsub.s32 4, %v2135
    %v2137 = vrot.slane %v1929, %v2136
    %v2138 = vlaneseq
    %v2139 = vshrl.u32 %v2138, 7
    %v2140 = vsub.s32 6, %v2139
    %v2141 = vrot.slane %v1929, %v2140
    %v2142 = vlaneseq
    %v2143 = vshrl.u32 %v2142, 7
    %v2144 = vsub.s32 0, %v2143
    %v2145 = vrot.slane %v1930, %v2144
    %v2146 = vlaneseq
    %v2147 = vshrl.u32 %v2146, 7
    %v2148 = vsub.s32 2, %v2147
    %v2149 = vrot.slane %v1930, %v2148
    %v2150 = vlaneseq
    %v2151 = vshrl.u32 %v2150, 7
    %v2152 = vsub.s32 4, %v2151
    %v2153 = vrot.slane %v1930, %v2152
    %v2154 = vlaneseq
    %v2155 = vshrl.u32 %v2154, 7
    %v2156 = vsub.s32 6, %v2155
    %v2157 = vrot.slane %v1930, %v2156
    %v2158 = vlaneseq
    %v2159 = vshrl.u32 %v2158, 7
    %v2160 = vsub.s32 0, %v2159
    %v2161 = vrot.slane %v1931, %v2160
    %v2162 = vlaneseq
    %v2163 = vshrl.u32 %v2162, 7
    %v2164 = vsub.s32 2, %v2163
    %v2165 = vrot.slane %v1931, %v2164
    %v2176 = vlaneseq
    %v2177 = vshrl.u32 %v2176, 7
    %v2178 = vsub.s32 0, %v2177
    %v2179 = vrot.slane %v2129, %v2178
    %v2180 = vlaneseq
    %v2181 = vshrl.u32 %v2180, 7
    %v2182 = vsub.s32 0, %v2181
    %v2183 = vrot.slane %v2133, %v2182
    %v2184 = vlaneseq
    %v2185 = vshrl.u32 %v2184, 7
    %v2186 = vsub.s32 0, %v2185
    %v2187 = vrot.slane %v2137, %v2186
    %v2188 = vlaneseq
    %v2189 = vshrl.u32 %v2188, 7
    %v2190 = vsub.s32 0, %v2189
    %v2191 = vrot.slane %v2141, %v2190
    %v2192 = vlaneseq
    %v2193 = vshrl.u32 %v2192, 7
    %v2194 = vsub.s32 0, %v2193
    %v2195 = vrot.slane %v2145, %v2194
    %v2196 = vlaneseq
    %v2197 = vshrl.u32 %v2196, 7
    %v2198 = vsub.s32 0, %v2197
    %v2199 = vrot.slane %v2149, %v2198
    %v2200 = vlaneseq
    %v2201 = vshrl.u32 %v2200, 7
    %v2202 = vsub.s32 0, %v2201
    %v2203 = vrot.slane %v2153, %v2202
    %v2204 = vlaneseq
    %v2205 = vshrl.u32 %v2204, 7
    %v2206 = vsub.s32 0, %v2205
    %v2207 = vrot.slane %v2157, %v2206
    %v2208 = vlaneseq
    %v2209 = vshrl.u32 %v2208, 7
    %v2210 = vsub.s32 0, %v2209
    %v2211 = vrot.slane %v2161, %v2210
    %v2212 = vlaneseq
    %v2213 = vshrl.u32 %v2212, 7
    %v2214 = vsub.s32 0, %v2213
    %v2215 = vrot.slane %v2165, %v2214
    %v2216 = vmul.f32 %v2179, %v2113
    %v2217 = vmul.f32 %v2183, %v2114
    %v2218 = vmul.f32 %v2187, %v2115
    %v2219 = vmul.f32 %v2191, %v2116
    %v2220 = vmul.f32 %v2195, %v2117
    %v2221 = vmul.f32 %v2199, %v2118
    %v2222 = vmul.f32 %v2203, %v2119
    %v2223 = vmul.f32 %v2207, %v2120
    %v2224 = vmul.f32 %v2211, %v2121
    %v2225 = vmul.f32 %v2215, %v2122
    %v2226 = vadd.f32 %v2103, 1e-05
    %v2227 = vadd.f32 %v2104, 1e-05
    %v2228 = vadd.f32 %v2105, 1e-05
    %v2229 = vadd.f32 %v2106, 1e-05
    %v2230 = vadd.f32 %v2107, 1e-05
    %v2231 = vadd.f32 %v2108, 1e-05
    %v2232 = vadd.f32 %v2109, 1e-05
    %v2233 = vadd.f32 %v2110, 1e-05
    %v2234 = vadd.f32 %v2111, 1e-05
    %v2235 = vadd.f32 %v2112, 1e-05
    %v2236 = vrsqrt.pop %v2226
    %v2237 = vrsqrt.pop %v2227
    %v2238 = vrsqrt.pop %v2228
    %v2239 = vrsqrt.pop %v2229
    %v2240 = vrsqrt.pop %v2230
    %v2241 = vrsqrt.pop %v2231
    %v2242 = vrsqrt.pop %v2232
    %v2243 = vrsqrt.pop %v2233
    %v2244 = vrsqrt.pop %v2234
    %v2245 = vrsqrt.pop %v2235
    %v2246 = vmul.f32 %v2216, %v2236
    %v2247 = vmul.f32 %v2217, %v2237
    %v2248 = vmul.f32 %v2218, %v2238
    %v2249 = vmul.f32 %v2219, %v2239
    %v2250 = vmul.f32 %v2220, %v2240
    %v2251 = vmul.f32 %v2221, %v2241
    %v2252 = vmul.f32 %v2222, %v2242
    %v2253 = vmul.f32 %v2223, %v2243
    %v2254 = vmul.f32 %v2224, %v2244
    %v2255 = vmul.f32 %v2225, %v2245
    %v2256 = vlaneseq
    %v2257 = vshrl.u32 %v2256, 7
    %v2258 = vsub.s32 1, %v2257
    %v2259 = vrot.slane %v1929, %v2258
    %v2260 = vlaneseq
    %v2261 = vshrl.u32 %v2260, 7
    %v2262 = vsub.s32 3, %v2261
    %v2263 = vrot.slane %v1929, %v2262
    %v2264 = vlaneseq
    %v2265 = vshrl.u32 %v2264, 7
    %v2266 = vsub.s32 5, %v2265
    %v2267 = vrot.slane %v1929, %v2266
    %v2268 = vlaneseq
    %v2269 = vshrl.u32 %v2268, 7
    %v2270 = vsub.s32 7, %v2269
    %v2271 = vrot.slane %v1929, %v2270
    %v2272 = vlaneseq
    %v2273 = vshrl.u32 %v2272, 7
    %v2274 = vsub.s32 1, %v2273
    %v2275 = vrot.slane %v1930, %v2274
    %v2276 = vlaneseq
    %v2277 = vshrl.u32 %v2276, 7
    %v2278 = vsub.s32 3, %v2277
    %v2279 = vrot.slane %v1930, %v2278
    %v2280 = vlaneseq
    %v2281 = vshrl.u32 %v2280, 7
    %v2282 = vsub.s32 5, %v2281
    %v2283 = vrot.slane %v1930, %v2282
    %v2284 = vlaneseq
    %v2285 = vshrl.u32 %v2284, 7
    %v2286 = vsub.s32 7, %v2285
    %v2287 = vrot.slane %v1930, %v2286
    %v2288 = vlaneseq
    %v2289 = vshrl.u32 %v2288, 7
    %v2290 = vsub.s32 1, %v2289
    %v2291 = vrot.slane %v1931, %v2290
    %v2292 = vlaneseq
    %v2293 = vshrl.u32 %v2292, 7
    %v2294 = vsub.s32 3, %v2293
    %v2295 = vrot.slane %v1931, %v2294
    %v2306 = vlaneseq
    %v2307 = vshrl.u32 %v2306, 7
    %v2308 = vsub.s32 1, %v2307
    %v2309 = vrot.slane %v2259, %v2308
    %v2310 = vlaneseq
    %v2311 = vshrl.u32 %v2310, 7
    %v2312 = vsub.s32 1, %v2311
    %v2313 = vrot.slane %v2263, %v2312
    %v2314 = vlaneseq
    %v2315 = vshrl.u32 %v2314, 7
    %v2316 = vsub.s32 1, %v2315
    %v2317 = vrot.slane %v2267, %v2316
    %v2318 = vlaneseq
    %v2319 = vshrl.u32 %v2318, 7
    %v2320 = vsub.s32 1, %v2319
    %v2321 = vrot.slane %v2271, %v2320
    %v2322 = vlaneseq
    %v2323 = vshrl.u32 %v2322, 7
    %v2324 = vsub.s32 1, %v2323
    %v2325 = vrot.slane %v2275, %v2324
    %v2326 = vlaneseq
    %v2327 = vshrl.u32 %v2326, 7
    %v2328 = vsub.s32 1, %v2327
    %v2329 = vrot.slane %v2279, %v2328
    %v2330 = vlaneseq
    %v2331 = vshrl.u32 %v2330, 7
    %v2332 = vsub.s32 1, %v2331
    %v2333 = vrot.slane %v2283, %v2332
    %v2334 = vlaneseq
    %v2335 = vshrl.u32 %v2334, 7
    %v2336 = vsub.s32 1, %v2335
    %v2337 = vrot.slane %v2287, %v2336
    %v2338 = vlaneseq
    %v2339 = vshrl.u32 %v2338, 7
    %v2340 = vsub.s32 1, %v2339
    %v2341 = vrot.slane %v2291, %v2340
    %v2342 = vlaneseq
    %v2343 = vshrl.u32 %v2342, 7
    %v2344 = vsub.s32 1, %v2343
    %v2345 = vrot.slane %v2295, %v2344
    %v2346 = vadd.f32 %v2246, %v2309
    %v2347 = vadd.f32 %v2247, %v2313
    %v2348 = vadd.f32 %v2248, %v2317
    %v2349 = vadd.f32 %v2249, %v2321
    %v2350 = vadd.f32 %v2250, %v2325
    %v2351 = vadd.f32 %v2251, %v2329
    %v2352 = vadd.f32 %v2252, %v2333
    %v2353 = vadd.f32 %v2253, %v2337
    %v2354 = vadd.f32 %v2254, %v2341
    %v2355 = vadd.f32 %v2255, %v2345
    %v2356 = vld [vmem:[%s3] sm:$0xff]
    %v2357 = vld [vmem:[%s3 + $0x8] sm:$0xff]
    %v2358 = vld [vmem:[%s3 + $0x10] sm:$0xff]
    %v2359 = vld [vmem:[%s3 + $0x18] sm:$0xff]
    %v2360 = vld [vmem:[%s3 + $0x20] sm:$0xff]
    %v2361 = vld [vmem:[%s3 + $0x28] sm:$0xff]
    %v2362 = vld [vmem:[%s3 + $0x30] sm:$0xff]
    %v2363 = vld [vmem:[%s3 + $0x38] sm:$0xff]
    %v2364 = vld [vmem:[%s3 + $0x40] sm:$0xff]
    %v2365 = vld [vmem:[%s3 + $0x48] sm:$0xff]
    %v2366 = vld [vmem:[%s3 + $0x50] sm:$0xff]
    %v2367 = vld [vmem:[%s3 + $0x58] sm:$0xff]
    %v2368 = vld [vmem:[%s3 + $0x60] sm:$0xff]
    %v2369 = vld [vmem:[%s3 + $0x68] sm:$0xff]
    %v2370 = vld [vmem:[%s3 + $0x70] sm:$0xff]
    %v2371 = vld [vmem:[%s3 + $0x78] sm:$0xff]
    %v2372 = vld [vmem:[%s4] sm:$0x1]
    %v2374 = vlaneseq
    %v2375 = vshrl.u32 %v2374, 7
    %v2376 = vsub.s32 0, %v2375
    %v2377 = vrot.slane %v2372, %v2376
    %2379 = vmatprep.subr.mxu0 0.0
    %2380 = vmatpush1.msra.mxu0 %v2356
    %2381 = vmatprep.subr.mxu0 0.0
    %2382 = vmatpush1.msra.mxu0 %v2357
    %2383 = vmatprep.subr.mxu0 0.0
    %2384 = vmatpush1.msra.mxu0 %v2358
    %2385 = vmatprep.subr.mxu0 0.0
    %2386 = vmatpush1.msra.mxu0 %v2359
    %2387 = vmatprep.subr.mxu0 0.0
    %2388 = vmatpush1.msra.mxu0 %v2360
    %2389 = vmatprep.subr.mxu0 0.0
    %2390 = vmatpush1.msra.mxu0 %v2361
    %2391 = vmatprep.subr.mxu0 0.0
    %2392 = vmatpush1.msra.mxu0 %v2362
    %2393 = vmatprep.subr.mxu0 0.0
    %2394 = vmatpush1.msra.mxu0 %v2363
    %2395 = vmatprep.subr.mxu0 0.0
    %2396 = vmatpush1.msra.mxu0 %v2364
    %2397 = vmatprep.subr.mxu0 0.0
    %2398 = vmatpush1.msra.mxu0 %v2365
    %2399 = vmatprep.subr.mxu0 0.0
    %2400 = vmatpush1.msra.mxu0 %v2366
    %2401 = vmatprep.subr.mxu0 0.0
    %2402 = vmatpush1.msra.mxu0 %v2367
    %2403 = vmatprep.subr.mxu0 0.0
    %2404 = vmatpush1.msra.mxu0 %v2368
    %2405 = vmatprep.subr.mxu0 0.0
    %2406 = vmatpush1.msra.mxu0 %v2369
    %2407 = vmatprep.subr.mxu0 0.0
    %2408 = vmatpush1.msra.mxu0 %v2370
    %2409 = vmatprep.subr.mxu0 0.0
    %2410 = vmatpush1.msra.mxu0 %v2371
    %2411 = vmatprep.subr.mxu0 0.0
    %2412 = vmatpush1.msra.mxu0 0.0
    %2413 = vmatprep.subr.mxu0 0.0
    %2414 = vmatpush1.msra.mxu0 0.0
    %2415 = vmatprep.subr.mxu0 0.0
    %2416 = vmatpush1.msra.mxu0 0.0
    %2417 = vmatprep.subr.mxu0 0.0
    %2418 = vmatpush1.msra.mxu0 0.0
    %2419 = vmatprep.subr.mxu0 0.0
    %2420 = vmatpush1.msra.mxu0 0.0
    %2421 = vmatprep.subr.mxu0 0.0
    %2422 = vmatpush1.msra.mxu0 0.0
    %2423 = vmatprep.subr.mxu0 0.0
    %2424 = vmatpush1.msra.mxu0 0.0
    %2425 = vmatprep.subr.mxu0 0.0
    %2426 = vmatpush1.msra.mxu0 0.0
    %2427 = vmatprep.subr.mxu0 0.0
    %2428 = vmatpush1.msra.mxu0 0.0
    %2429 = vmatprep.subr.mxu0 0.0
    %2430 = vmatpush1.msra.mxu0 0.0
    %2431 = vmatprep.subr.mxu0 0.0
    %2432 = vmatpush1.msra.mxu0 0.0
    %2433 = vmatprep.subr.mxu0 0.0
    %2434 = vmatpush1.msra.mxu0 0.0
    %2435 = vmatprep.subr.mxu0 0.0
    %2436 = vmatpush1.msra.mxu0 0.0
    %2437 = vmatprep.subr.mxu0 0.0
    %2438 = vmatpush1.msra.mxu0 0.0
    %2439 = vmatprep.subr.mxu0 0.0
    %2440 = vmatpush1.msra.mxu0 0.0
    %2441 = vmatprep.subr.mxu0 0.0
    %2442 = vmatpush1.msra.mxu0 0.0
    %2443 = vmatprep.mubr.f32.mxu0 0.0
    %2444 = vmatmul.mubr.f32.gmra.mrb[0].mxu0 %v2346
    %v2445 = vpop.f32.mrb[0].mxu0
    %v2446 = vadd.f32 %v2377, %v2445
    %v2447 = vpop.f32.mrb[0].mxu0
    %2448 = vdwg.mxu0
    %vm2449 = vcmask 23552
    %2450 = vst.msk [vmem:[%s9] sm:$0xff] %vm2449, %v2446
    %v2451 = vpack.c.bf16 %v2347, %v2347
    %v2452 = vpack.c.bf16 %v2348, %v2348
    %v2453 = vpack.c.bf16 %v2349, %v2349
    %v2454 = vpack.c.bf16 %v2350, %v2350
    %v2455 = vpack.c.bf16 %v2351, %v2351
    %v2456 = vpack.c.bf16 %v2352, %v2352
    %v2457 = vpack.c.bf16 %v2353, %v2353
    %v2458 = vpack.c.bf16 %v2354, %v2354
    %v2459 = vpack.c.bf16 %v2355, %v2355
    %v2460 = vld [vmem:[#allocation4] sm:$0xff]
    %v2461 = vld [vmem:[#allocation4 + $0x8] sm:$0xf]
    %v2462 = vld [vmem:[#allocation4 + $0xc] sm:$0xff]
    %v2463 = vld [vmem:[#allocation4 + $0x14] sm:$0xf]
    %v2464 = vld [vmem:[#allocation4 + $0x18] sm:$0xff]
    %v2465 = vld [vmem:[#allocation4 + $0x20] sm:$0xf]
    %v2466 = vld [vmem:[#allocation4 + $0x24] sm:$0xff]
    %v2467 = vld [vmem:[#allocation4 + $0x2c] sm:$0xf]
    %v2468 = vld [vmem:[#allocation4 + $0x30] sm:$0xff]
    %v2469 = vld [vmem:[#allocation4 + $0x38] sm:$0xf]
    %v2470 = vld [vmem:[#allocation4 + $0x3c] sm:$0xff]
    %v2471 = vld [vmem:[#allocation4 + $0x44] sm:$0xf]
    %v2472 = vld [vmem:[#allocation4 + $0x48] sm:$0xff]
    %v2473 = vld [vmem:[#allocation4 + $0x50] sm:$0xf]
    %v2474 = vld [vmem:[#allocation4 + $0x54] sm:$0xff]
    %v2475 = vld [vmem:[#allocation4 + $0x5c] sm:$0xf]
    %v2476 = vld [vmem:[#allocation4 + $0x60] sm:$0xff]
    %v2477 = vld [vmem:[#allocation4 + $0x68] sm:$0xf]
    %v2478 = vld [vmem:[#allocation4 + $0x6c] sm:$0xff]
    %v2479 = vld [vmem:[#allocation4 + $0x74] sm:$0xf]
    %v2480 = vld [vmem:[#allocation4 + $0x78] sm:$0xff]
    %v2481 = vld [vmem:[#allocation4 + $0x80] sm:$0xf]
    %v2482 = vld [vmem:[#allocation4 + $0x84] sm:$0xff]
    %v2483 = vld [vmem:[#allocation4 + $0x8c] sm:$0xf]
    %v2484 = vld [vmem:[#allocation4 + $0x90] sm:$0xff]
    %v2485 = vld [vmem:[#allocation4 + $0x98] sm:$0xf]
    %v2486 = vld [vmem:[#allocation4 + $0x9c] sm:$0xff]
    %v2487 = vld [vmem:[#allocation4 + $0xa4] sm:$0xf]
    %v2488 = vld [vmem:[#allocation4 + $0xa8] sm:$0xff]
    %v2489 = vld [vmem:[#allocation4 + $0xb0] sm:$0xf]
    %v2490 = vld [vmem:[#allocation4 + $0xb4] sm:$0xff]
    %v2491 = vld [vmem:[#allocation4 + $0xbc] sm:$0xf]
    %v2492 = vld [vmem:[#allocation4 + $0xc0] sm:$0xff]
    %v2493 = vld [vmem:[#allocation4 + $0xc8] sm:$0xf]
    %v2494 = vld [vmem:[#allocation4 + $0xcc] sm:$0xff]
    %v2495 = vld [vmem:[#allocation4 + $0xd4] sm:$0xf]
    %v2496 = vld [vmem:[#allocation4 + $0xd8] sm:$0xff]
    %v2497 = vld [vmem:[#allocation4 + $0xe0] sm:$0xf]
    %v2498 = vld [vmem:[#allocation4 + $0xe4] sm:$0xff]
    %v2499 = vld [vmem:[#allocation4 + $0xec] sm:$0xf]
    %v2500 = vld [vmem:[#allocation4 + $0xf0] sm:$0xff]
    %v2501 = vld [vmem:[#allocation4 + $0xf8] sm:$0xf]
    %v2502 = vld [vmem:[#allocation4 + $0xfc] sm:$0xff]
    %v2503 = vld [vmem:[#allocation4 + $0x104] sm:$0xf]
    %v2504 = vld [vmem:[#allocation4 + $0x108] sm:$0xff]
    %v2505 = vld [vmem:[#allocation4 + $0x110] sm:$0xf]
    %v2506 = vld [vmem:[#allocation4 + $0x114] sm:$0xff]
    %v2507 = vld [vmem:[#allocation4 + $0x11c] sm:$0xf]
    %v2508 = vld [vmem:[#allocation4 + $0x120] sm:$0xff]
    %v2509 = vld [vmem:[#allocation4 + $0x128] sm:$0xf]
    %v2510 = vld [vmem:[#allocation4 + $0x12c] sm:$0xff]
    %v2511 = vld [vmem:[#allocation4 + $0x134] sm:$0xf]
    %v2512 = vld [vmem:[#allocation4 + $0x138] sm:$0xff]
    %v2513 = vld [vmem:[#allocation4 + $0x140] sm:$0xf]
    %v2514 = vld [vmem:[#allocation4 + $0x144] sm:$0xff]
    %v2515 = vld [vmem:[#allocation4 + $0x14c] sm:$0xf]
    %v2516 = vld [vmem:[#allocation4 + $0x150] sm:$0xff]
    %v2517 = vld [vmem:[#allocation4 + $0x158] sm:$0xf]
    %v2518 = vld [vmem:[#allocation4 + $0x15c] sm:$0xff]
    %v2519 = vld [vmem:[#allocation4 + $0x164] sm:$0xf]
    %v2520 = vld [vmem:[#allocation4 + $0x168] sm:$0xff]
    %v2521 = vld [vmem:[#allocation4 + $0x170] sm:$0xf]
    %v2522 = vld [vmem:[#allocation4 + $0x174] sm:$0xff]
    %v2523 = vld [vmem:[#allocation4 + $0x17c] sm:$0xf]
    %v2524 = vld [vmem:[#allocation4 + $0x180] sm:$0xff]
    %v2525 = vld [vmem:[#allocation4 + $0x188] sm:$0xf]
    %v2526 = vld [vmem:[#allocation4 + $0x18c] sm:$0xff]
    %v2527 = vld [vmem:[#allocation4 + $0x194] sm:$0xf]
    %v2528 = vld [vmem:[#allocation4 + $0x198] sm:$0xff]
    %v2529 = vld [vmem:[#allocation4 + $0x1a0] sm:$0xf]
    %v2530 = vld [vmem:[#allocation4 + $0x1a4] sm:$0xff]
    %v2531 = vld [vmem:[#allocation4 + $0x1ac] sm:$0xf]
    %v2532 = vld [vmem:[#allocation4 + $0x1b0] sm:$0xff]
    %v2533 = vld [vmem:[#allocation4 + $0x1b8] sm:$0xf]
    %v2534 = vld [vmem:[#allocation4 + $0x1bc] sm:$0xff]
    %v2535 = vld [vmem:[#allocation4 + $0x1c4] sm:$0xf]
    %v2536 = vld [vmem:[#allocation4 + $0x1c8] sm:$0xff]
    %v2537 = vld [vmem:[#allocation4 + $0x1d0] sm:$0xf]
    %v2538 = vld [vmem:[#allocation4 + $0x1d4] sm:$0xff]
    %v2539 = vld [vmem:[#allocation4 + $0x1dc] sm:$0xf]
    %v2540 = vld [vmem:[#allocation4 + $0x1e0] sm:$0xff]
    %v2541 = vld [vmem:[#allocation4 + $0x1e8] sm:$0xf]
    %v2542 = vld [vmem:[#allocation4 + $0x1ec] sm:$0xff]
    %v2543 = vld [vmem:[#allocation4 + $0x1f4] sm:$0xf]
    %v2544 = vld [vmem:[#allocation4 + $0x1f8] sm:$0xff]
    %v2545 = vld [vmem:[#allocation4 + $0x200] sm:$0xf]
    %v2546 = vld [vmem:[#allocation4 + $0x204] sm:$0xff]
    %v2547 = vld [vmem:[#allocation4 + $0x20c] sm:$0xf]
    %v2548 = vld [vmem:[#allocation4 + $0x210] sm:$0xff]
    %v2549 = vld [vmem:[#allocation4 + $0x218] sm:$0xf]
    %v2550 = vld [vmem:[#allocation4 + $0x21c] sm:$0xff]
    %v2551 = vld [vmem:[#allocation4 + $0x224] sm:$0xf]
    %v2552 = vld [vmem:[#allocation4 + $0x228] sm:$0xff]
    %v2553 = vld [vmem:[#allocation4 + $0x230] sm:$0xf]
    %v2554 = vld [vmem:[#allocation4 + $0x234] sm:$0xff]
    %v2555 = vld [vmem:[#allocation4 + $0x23c] sm:$0xf]
    %v2556 = vld [vmem:[#allocation4 + $0x240] sm:$0xff]
    %v2557 = vld [vmem:[#allocation4 + $0x248] sm:$0xf]
    %v2558 = vld [vmem:[#allocation4 + $0x24c] sm:$0xff]
    %v2559 = vld [vmem:[#allocation4 + $0x254] sm:$0xf]
    %v2560 = vld [vmem:[#allocation4 + $0x258] sm:$0xff]
    %v2561 = vld [vmem:[#allocation4 + $0x260] sm:$0xf]
    %v2562 = vld [vmem:[#allocation4 + $0x264] sm:$0xff]
    %v2563 = vld [vmem:[#allocation4 + $0x26c] sm:$0xf]
    %v2564 = vld [vmem:[#allocation4 + $0x270] sm:$0xff]
    %v2565 = vld [vmem:[#allocation4 + $0x278] sm:$0xf]
    %v2566 = vld [vmem:[#allocation4 + $0x27c] sm:$0xff]
    %v2567 = vld [vmem:[#allocation4 + $0x284] sm:$0xf]
    %v2568 = vld [vmem:[#allocation4 + $0x288] sm:$0xff]
    %v2569 = vld [vmem:[#allocation4 + $0x290] sm:$0xf]
    %v2570 = vld [vmem:[#allocation4 + $0x294] sm:$0xff]
    %v2571 = vld [vmem:[#allocation4 + $0x29c] sm:$0xf]
    %v2572 = vld [vmem:[#allocation4 + $0x2a0] sm:$0xff]
    %v2573 = vld [vmem:[#allocation4 + $0x2a8] sm:$0xf]
    %v2574 = vld [vmem:[#allocation4 + $0x2ac] sm:$0xff]
    %v2575 = vld [vmem:[#allocation4 + $0x2b4] sm:$0xf]
    %v2576 = vld [vmem:[#allocation4 + $0x2b8] sm:$0xff]
    %v2577 = vld [vmem:[#allocation4 + $0x2c0] sm:$0xf]
    %v2578 = vld [vmem:[#allocation4 + $0x2c4] sm:$0xff]
    %v2579 = vld [vmem:[#allocation4 + $0x2cc] sm:$0xf]
    %v2580 = vld [vmem:[#allocation4 + $0x2d0] sm:$0xff]
    %v2581 = vld [vmem:[#allocation4 + $0x2d8] sm:$0xf]
    %v2582 = vld [vmem:[#allocation4 + $0x2dc] sm:$0xff]
    %v2583 = vld [vmem:[#allocation4 + $0x2e4] sm:$0xf]
    %v2584 = vld [vmem:[#allocation4 + $0x2e8] sm:$0xff]
    %v2585 = vld [vmem:[#allocation4 + $0x2f0] sm:$0xf]
    %v2586 = vld [vmem:[#allocation4 + $0x2f4] sm:$0xff]
    %v2587 = vld [vmem:[#allocation4 + $0x2fc] sm:$0xf]
    %v2588 = vld [vmem:[#allocation4 + $0x300] sm:$0xff]
    %v2589 = vld [vmem:[#allocation4 + $0x308] sm:$0xf]
    %v2590 = vld [vmem:[#allocation4 + $0x30c] sm:$0xff]
    %v2591 = vld [vmem:[#allocation4 + $0x314] sm:$0xf]
    %v2592 = vld [vmem:[#allocation4 + $0x318] sm:$0xff]
    %v2593 = vld [vmem:[#allocation4 + $0x320] sm:$0xf]
    %v2594 = vld [vmem:[#allocation4 + $0x324] sm:$0xff]
    %v2595 = vld [vmem:[#allocation4 + $0x32c] sm:$0xf]
    %v2596 = vld [vmem:[#allocation4 + $0x330] sm:$0xff]
    %v2597 = vld [vmem:[#allocation4 + $0x338] sm:$0xf]
    %v2598 = vld [vmem:[#allocation4 + $0x33c] sm:$0xff]
    %v2599 = vld [vmem:[#allocation4 + $0x344] sm:$0xf]
    %v2600 = vld [vmem:[#allocation4 + $0x348] sm:$0xff]
    %v2601 = vld [vmem:[#allocation4 + $0x350] sm:$0xf]
    %v2602 = vld [vmem:[#allocation4 + $0x354] sm:$0xff]
    %v2603 = vld [vmem:[#allocation4 + $0x35c] sm:$0xf]
    %v2604 = vld [vmem:[#allocation4 + $0x360] sm:$0xff]
    %v2605 = vld [vmem:[#allocation4 + $0x368] sm:$0xf]
    %v2606 = vld [vmem:[#allocation4 + $0x36c] sm:$0xff]
    %v2607 = vld [vmem:[#allocation4 + $0x374] sm:$0xf]
    %v2608 = vld [vmem:[#allocation4 + $0x378] sm:$0xff]
    %v2609 = vld [vmem:[#allocation4 + $0x380] sm:$0xf]
    %v2610 = vld [vmem:[#allocation4 + $0x384] sm:$0xff]
    %v2611 = vld [vmem:[#allocation4 + $0x38c] sm:$0xf]
    %v2612 = vld [vmem:[#allocation4 + $0x390] sm:$0xff]
    %v2613 = vld [vmem:[#allocation4 + $0x398] sm:$0xf]
    %v2614 = vld [vmem:[#allocation4 + $0x39c] sm:$0xff]
    %v2615 = vld [vmem:[#allocation4 + $0x3a4] sm:$0xf]
    %v2616 = vld [vmem:[#allocation4 + $0x3a8] sm:$0xff]
    %v2617 = vld [vmem:[#allocation4 + $0x3b0] sm:$0xf]
    %v2618 = vld [vmem:[#allocation4 + $0x3b4] sm:$0xff]
    %v2619 = vld [vmem:[#allocation4 + $0x3bc] sm:$0xf]
    %v2620 = vld [vmem:[#allocation4 + $0x3c0] sm:$0xff]
    %v2621 = vld [vmem:[#allocation4 + $0x3c8] sm:$0xf]
    %v2622 = vld [vmem:[#allocation4 + $0x3cc] sm:$0xff]
    %v2623 = vld [vmem:[#allocation4 + $0x3d4] sm:$0xf]
    %v2624 = vld [vmem:[#allocation4 + $0x3d8] sm:$0xff]
    %v2625 = vld [vmem:[#allocation4 + $0x3e0] sm:$0xf]
    %v2626 = vld [vmem:[#allocation4 + $0x3e4] sm:$0xff]
    %v2627 = vld [vmem:[#allocation4 + $0x3ec] sm:$0xf]
    %v2628 = vld [vmem:[#allocation4 + $0x3f0] sm:$0xff]
    %v2629 = vld [vmem:[#allocation4 + $0x3f8] sm:$0xf]
    %v2630 = vld [vmem:[#allocation4 + $0x3fc] sm:$0xff]
    %v2631 = vld [vmem:[#allocation4 + $0x404] sm:$0xf]
    %v2632 = vld [vmem:[#allocation4 + $0x408] sm:$0xff]
    %v2633 = vld [vmem:[#allocation4 + $0x410] sm:$0xf]
    %v2634 = vld [vmem:[#allocation4 + $0x414] sm:$0xff]
    %v2635 = vld [vmem:[#allocation4 + $0x41c] sm:$0xf]
    %v2636 = vld [vmem:[#allocation4 + $0x420] sm:$0xff]
    %v2637 = vld [vmem:[#allocation4 + $0x428] sm:$0xf]
    %v2638 = vld [vmem:[#allocation4 + $0x42c] sm:$0xff]
    %v2639 = vld [vmem:[#allocation4 + $0x434] sm:$0xf]
    %v2640 = vld [vmem:[#allocation4 + $0x438] sm:$0xff]
    %v2641 = vld [vmem:[#allocation4 + $0x440] sm:$0xf]
    %v2642 = vld [vmem:[#allocation4 + $0x444] sm:$0xff]
    %v2643 = vld [vmem:[#allocation4 + $0x44c] sm:$0xf]
    %v2644 = vld [vmem:[#allocation4 + $0x450] sm:$0xff]
    %v2645 = vld [vmem:[#allocation4 + $0x458] sm:$0xf]
    %v2646 = vld [vmem:[#allocation4 + $0x45c] sm:$0xff]
    %v2647 = vld [vmem:[#allocation4 + $0x464] sm:$0xf]
    %v2648 = vld [vmem:[#allocation4 + $0x468] sm:$0xff]
    %v2649 = vld [vmem:[#allocation4 + $0x470] sm:$0xf]
    %v2650 = vld [vmem:[#allocation4 + $0x474] sm:$0xff]
    %v2651 = vld [vmem:[#allocation4 + $0x47c] sm:$0xf]
    %v2652 = vld [vmem:[#allocation4 + $0x480] sm:$0xff]
    %v2653 = vld [vmem:[#allocation4 + $0x488] sm:$0xf]
    %v2654 = vld [vmem:[#allocation4 + $0x48c] sm:$0xff]
    %v2655 = vld [vmem:[#allocation4 + $0x494] sm:$0xf]
    %v2656 = vld [vmem:[#allocation4 + $0x498] sm:$0xff]
    %v2657 = vld [vmem:[#allocation4 + $0x4a0] sm:$0xf]
    %v2658 = vld [vmem:[#allocation4 + $0x4a4] sm:$0xff]
    %v2659 = vld [vmem:[#allocation4 + $0x4ac] sm:$0xf]
    %v2660 = vld [vmem:[#allocation4 + $0x4b0] sm:$0xff]
    %v2661 = vld [vmem:[#allocation4 + $0x4b8] sm:$0xf]
    %v2662 = vld [vmem:[#allocation4 + $0x4bc] sm:$0xff]
    %v2663 = vld [vmem:[#allocation4 + $0x4c4] sm:$0xf]
    %v2664 = vld [vmem:[#allocation4 + $0x4c8] sm:$0xff]
    %v2665 = vld [vmem:[#allocation4 + $0x4d0] sm:$0xf]
    %v2666 = vld [vmem:[#allocation4 + $0x4d4] sm:$0xff]
    %v2667 = vld [vmem:[#allocation4 + $0x4dc] sm:$0xf]
    %v2668 = vld [vmem:[#allocation4 + $0x4e0] sm:$0xff]
    %v2669 = vld [vmem:[#allocation4 + $0x4e8] sm:$0xf]
    %v2670 = vld [vmem:[#allocation4 + $0x4ec] sm:$0xff]
    %v2671 = vld [vmem:[#allocation4 + $0x4f4] sm:$0xf]
    %v2672 = vld [vmem:[#allocation4 + $0x4f8] sm:$0xff]
    %v2673 = vld [vmem:[#allocation4 + $0x500] sm:$0xf]
    %v2674 = vld [vmem:[#allocation4 + $0x504] sm:$0xff]
    %v2675 = vld [vmem:[#allocation4 + $0x50c] sm:$0xf]
    %v2676 = vld [vmem:[#allocation4 + $0x510] sm:$0xff]
    %v2677 = vld [vmem:[#allocation4 + $0x518] sm:$0xf]
    %v2678 = vld [vmem:[#allocation4 + $0x51c] sm:$0xff]
    %v2679 = vld [vmem:[#allocation4 + $0x524] sm:$0xf]
    %v2680 = vld [vmem:[#allocation4 + $0x528] sm:$0xff]
    %v2681 = vld [vmem:[#allocation4 + $0x530] sm:$0xf]
    %v2682 = vld [vmem:[#allocation4 + $0x534] sm:$0xff]
    %v2683 = vld [vmem:[#allocation4 + $0x53c] sm:$0xf]
    %v2684 = vld [vmem:[#allocation4 + $0x540] sm:$0xff]
    %v2685 = vld [vmem:[#allocation4 + $0x548] sm:$0xf]
    %v2686 = vld [vmem:[#allocation4 + $0x54c] sm:$0xff]
    %v2687 = vld [vmem:[#allocation4 + $0x554] sm:$0xf]
    %v2688 = vld [vmem:[#allocation4 + $0x558] sm:$0xff]
    %v2689 = vld [vmem:[#allocation4 + $0x560] sm:$0xf]
    %v2690 = vld [vmem:[#allocation4 + $0x564] sm:$0xff]
    %v2691 = vld [vmem:[#allocation4 + $0x56c] sm:$0xf]
    %v2692 = vld [vmem:[#allocation4 + $0x570] sm:$0xff]
    %v2693 = vld [vmem:[#allocation4 + $0x578] sm:$0xf]
    %v2694 = vld [vmem:[#allocation4 + $0x57c] sm:$0xff]
    %v2695 = vld [vmem:[#allocation4 + $0x584] sm:$0xf]
    %v2696 = vld [vmem:[#allocation4 + $0x588] sm:$0xff]
    %v2697 = vld [vmem:[#allocation4 + $0x590] sm:$0xf]
    %v2698 = vld [vmem:[#allocation4 + $0x594] sm:$0xff]
    %v2699 = vld [vmem:[#allocation4 + $0x59c] sm:$0xf]
    %v2700 = vld [vmem:[#allocation4 + $0x5a0] sm:$0xff]
    %v2701 = vld [vmem:[#allocation4 + $0x5a8] sm:$0xf]
    %v2702 = vld [vmem:[#allocation4 + $0x5ac] sm:$0xff]
    %v2703 = vld [vmem:[#allocation4 + $0x5b4] sm:$0xf]
    %v2704 = vld [vmem:[#allocation4 + $0x5b8] sm:$0xff]
    %v2705 = vld [vmem:[#allocation4 + $0x5c0] sm:$0xf]
    %v2706 = vld [vmem:[#allocation4 + $0x5c4] sm:$0xff]
    %v2707 = vld [vmem:[#allocation4 + $0x5cc] sm:$0xf]
    %v2708 = vld [vmem:[#allocation4 + $0x5d0] sm:$0xff]
    %v2709 = vld [vmem:[#allocation4 + $0x5d8] sm:$0xf]
    %v2710 = vld [vmem:[#allocation4 + $0x5dc] sm:$0xff]
    %v2711 = vld [vmem:[#allocation4 + $0x5e4] sm:$0xf]
    %v2712 = vld [vmem:[#allocation4 + $0x5e8] sm:$0xff]
    %v2713 = vld [vmem:[#allocation4 + $0x5f0] sm:$0xf]
    %v2714 = vld [vmem:[#allocation4 + $0x5f4] sm:$0xff]
    %v2715 = vld [vmem:[#allocation4 + $0x5fc] sm:$0xf]
    %v2716 = vld [vmem:[#allocation4 + $0x600] sm:$0xff]
    %v2717 = vld [vmem:[#allocation4 + $0x608] sm:$0xf]
    %v2718 = vld [vmem:[#allocation4 + $0x60c] sm:$0xff]
    %v2719 = vld [vmem:[#allocation4 + $0x614] sm:$0xf]
    %v2720 = vld [vmem:[#allocation4 + $0x618] sm:$0xff]
    %v2721 = vld [vmem:[#allocation4 + $0x620] sm:$0xf]
    %v2722 = vld [vmem:[#allocation4 + $0x624] sm:$0xff]
    %v2723 = vld [vmem:[#allocation4 + $0x62c] sm:$0xf]
    %v2724 = vld [vmem:[#allocation4 + $0x630] sm:$0xff]
    %v2725 = vld [vmem:[#allocation4 + $0x638] sm:$0xf]
    %v2726 = vld [vmem:[#allocation4 + $0x63c] sm:$0xff]
    %v2727 = vld [vmem:[#allocation4 + $0x644] sm:$0xf]
    %v2728 = vld [vmem:[#allocation4 + $0x648] sm:$0xff]
    %v2729 = vld [vmem:[#allocation4 + $0x650] sm:$0xf]
    %v2730 = vld [vmem:[#allocation4 + $0x654] sm:$0xff]
    %v2731 = vld [vmem:[#allocation4 + $0x65c] sm:$0xf]
    %v2732 = vld [vmem:[#allocation4 + $0x660] sm:$0xff]
    %v2733 = vld [vmem:[#allocation4 + $0x668] sm:$0xf]
    %v2734 = vld [vmem:[#allocation4 + $0x66c] sm:$0xff]
    %v2735 = vld [vmem:[#allocation4 + $0x674] sm:$0xf]
    %v2736 = vld [vmem:[#allocation4 + $0x678] sm:$0xff]
    %v2737 = vld [vmem:[#allocation4 + $0x680] sm:$0xf]
    %v2738 = vld [vmem:[#allocation4 + $0x684] sm:$0xff]
    %v2739 = vld [vmem:[#allocation4 + $0x68c] sm:$0xf]
    %v2740 = vld [vmem:[#allocation4 + $0x690] sm:$0xff]
    %v2741 = vld [vmem:[#allocation4 + $0x698] sm:$0xf]
    %v2742 = vld [vmem:[#allocation4 + $0x69c] sm:$0xff]
    %v2743 = vld [vmem:[#allocation4 + $0x6a4] sm:$0xf]
    %v2744 = vld [vmem:[#allocation4 + $0x6a8] sm:$0xff]
    %v2745 = vld [vmem:[#allocation4 + $0x6b0] sm:$0xf]
    %v2746 = vld [vmem:[#allocation4 + $0x6b4] sm:$0xff]
    %v2747 = vld [vmem:[#allocation4 + $0x6bc] sm:$0xf]
    %v2748 = vld [vmem:[%s6] sm:$0x77]
    %v2749 = vld [vmem:[%s6 + $0x8] sm:$0x7]
    %v2752 = vlaneseq
    %v2753 = vshrl.u32 %v2752, 7
    %v2754 = vsub.s32 0, %v2753
    %v2755 = vrot.slane %v2748, %v2754
    %v2756 = vlaneseq
    %v2757 = vshrl.u32 %v2756, 7
    %v2758 = vsub.s32 4, %v2757
    %v2759 = vrot.slane %v2748, %v2758
    %v2760 = vlaneseq
    %v2761 = vshrl.u32 %v2760, 7
    %v2762 = vsub.s32 0, %v2761
    %v2763 = vrot.slane %v2749, %v2762
    %v2767 = vlaneseq
    %v2768 = vshrl.u32 %v2767, 7
    %v2769 = vsub.s32 0, %v2768
    %v2770 = vrot.slane %v2755, %v2769
    %v2771 = vlaneseq
    %v2772 = vshrl.u32 %v2771, 7
    %v2773 = vsub.s32 0, %v2772
    %v2774 = vrot.slane %v2759, %v2773
    %v2775 = vlaneseq
    %v2776 = vshrl.u32 %v2775, 7
    %v2777 = vsub.s32 0, %v2776
    %v2778 = vrot.slane %v2763, %v2777
    %v3067 = vunpack.c.l.b16 %v2460
    %v3068 = vunpack.c.h.b16 %v2460
    %v3069 = vunpack.c.l.b16 %v2461
    %v3070 = vunpack.c.l.b16 %v2462
    %v3071 = vunpack.c.h.b16 %v2462
    %v3072 = vunpack.c.l.b16 %v2463
    %v3073 = vunpack.c.l.b16 %v2464
    %v3074 = vunpack.c.h.b16 %v2464
    %v3075 = vunpack.c.l.b16 %v2465
    %v3076 = vunpack.c.l.b16 %v2466
    %v3077 = vunpack.c.h.b16 %v2466
    %v3078 = vunpack.c.l.b16 %v2467
    %v3079 = vunpack.c.l.b16 %v2468
    %v3080 = vunpack.c.h.b16 %v2468
    %v3081 = vunpack.c.l.b16 %v2469
    %v3082 = vunpack.c.l.b16 %v2470
    %v3083 = vunpack.c.h.b16 %v2470
    %v3084 = vunpack.c.l.b16 %v2471
    %v3085 = vunpack.c.l.b16 %v2472
    %v3086 = vunpack.c.h.b16 %v2472
    %v3087 = vunpack.c.l.b16 %v2473
    %v3088 = vunpack.c.l.b16 %v2474
    %v3089 = vunpack.c.h.b16 %v2474
    %v3090 = vunpack.c.l.b16 %v2475
    %v3091 = vunpack.c.l.b16 %v2476
    %v3092 = vunpack.c.h.b16 %v2476
    %v3093 = vunpack.c.l.b16 %v2477
    %v3094 = vunpack.c.l.b16 %v2478
    %v3095 = vunpack.c.h.b16 %v2478
    %v3096 = vunpack.c.l.b16 %v2479
    %v3097 = vunpack.c.l.b16 %v2480
    %v3098 = vunpack.c.h.b16 %v2480
    %v3099 = vunpack.c.l.b16 %v2481
    %v3100 = vunpack.c.l.b16 %v2482
    %v3101 = vunpack.c.h.b16 %v2482
    %v3102 = vunpack.c.l.b16 %v2483
    %v3103 = vunpack.c.l.b16 %v2484
    %v3104 = vunpack.c.h.b16 %v2484
    %v3105 = vunpack.c.l.b16 %v2485
    %v3106 = vunpack.c.l.b16 %v2486
    %v3107 = vunpack.c.h.b16 %v2486
    %v3108 = vunpack.c.l.b16 %v2487
    %v3109 = vunpack.c.l.b16 %v2488
    %v3110 = vunpack.c.h.b16 %v2488
    %v3111 = vunpack.c.l.b16 %v2489
    %v3112 = vunpack.c.l.b16 %v2490
    %v3113 = vunpack.c.h.b16 %v2490
    %v3114 = vunpack.c.l.b16 %v2491
    %v3115 = vunpack.c.l.b16 %v2492
    %v3116 = vunpack.c.h.b16 %v2492
    %v3117 = vunpack.c.l.b16 %v2493
    %v3118 = vunpack.c.l.b16 %v2494
    %v3119 = vunpack.c.h.b16 %v2494
    %v3120 = vunpack.c.l.b16 %v2495
    %v3121 = vunpack.c.l.b16 %v2496
    %v3122 = vunpack.c.h.b16 %v2496
    %v3123 = vunpack.c.l.b16 %v2497
    %v3124 = vunpack.c.l.b16 %v2498
    %v3125 = vunpack.c.h.b16 %v2498
    %v3126 = vunpack.c.l.b16 %v2499
    %v3127 = vunpack.c.l.b16 %v2500
    %v3128 = vunpack.c.h.b16 %v2500
    %v3129 = vunpack.c.l.b16 %v2501
    %v3130 = vunpack.c.l.b16 %v2502
    %v3131 = vunpack.c.h.b16 %v2502
    %v3132 = vunpack.c.l.b16 %v2503
    %v3133 = vunpack.c.l.b16 %v2504
    %v3134 = vunpack.c.h.b16 %v2504
    %v3135 = vunpack.c.l.b16 %v2505
    %v3136 = vunpack.c.l.b16 %v2506
    %v3137 = vunpack.c.h.b16 %v2506
    %v3138 = vunpack.c.l.b16 %v2507
    %v3139 = vunpack.c.l.b16 %v2508
    %v3140 = vunpack.c.h.b16 %v2508
    %v3141 = vunpack.c.l.b16 %v2509
    %v3142 = vunpack.c.l.b16 %v2510
    %v3143 = vunpack.c.h.b16 %v2510
    %v3144 = vunpack.c.l.b16 %v2511
    %v3145 = vunpack.c.l.b16 %v2512
    %v3146 = vunpack.c.h.b16 %v2512
    %v3147 = vunpack.c.l.b16 %v2513
    %v3148 = vunpack.c.l.b16 %v2514
    %v3149 = vunpack.c.h.b16 %v2514
    %v3150 = vunpack.c.l.b16 %v2515
    %v3151 = vunpack.c.l.b16 %v2516
    %v3152 = vunpack.c.h.b16 %v2516
    %v3153 = vunpack.c.l.b16 %v2517
    %v3154 = vunpack.c.l.b16 %v2518
    %v3155 = vunpack.c.h.b16 %v2518
    %v3156 = vunpack.c.l.b16 %v2519
    %v3157 = vunpack.c.l.b16 %v2520
    %v3158 = vunpack.c.h.b16 %v2520
    %v3159 = vunpack.c.l.b16 %v2521
    %v3160 = vunpack.c.l.b16 %v2522
    %v3161 = vunpack.c.h.b16 %v2522
    %v3162 = vunpack.c.l.b16 %v2523
    %v3163 = vunpack.c.l.b16 %v2524
    %v3164 = vunpack.c.h.b16 %v2524
    %v3165 = vunpack.c.l.b16 %v2525
    %v3166 = vunpack.c.l.b16 %v2526
    %v3167 = vunpack.c.h.b16 %v2526
    %v3168 = vunpack.c.l.b16 %v2527
    %v3169 = vunpack.c.l.b16 %v2528
    %v3170 = vunpack.c.h.b16 %v2528
    %v3171 = vunpack.c.l.b16 %v2529
    %v3172 = vunpack.c.l.b16 %v2530
    %v3173 = vunpack.c.h.b16 %v2530
    %v3174 = vunpack.c.l.b16 %v2531
    %v3175 = vunpack.c.l.b16 %v2532
    %v3176 = vunpack.c.h.b16 %v2532
    %v3177 = vunpack.c.l.b16 %v2533
    %v3178 = vunpack.c.l.b16 %v2534
    %v3179 = vunpack.c.h.b16 %v2534
    %v3180 = vunpack.c.l.b16 %v2535
    %v3181 = vunpack.c.l.b16 %v2536
    %v3182 = vunpack.c.h.b16 %v2536
    %v3183 = vunpack.c.l.b16 %v2537
    %v3184 = vunpack.c.l.b16 %v2538
    %v3185 = vunpack.c.h.b16 %v2538
    %v3186 = vunpack.c.l.b16 %v2539
    %v3187 = vunpack.c.l.b16 %v2540
    %v3188 = vunpack.c.h.b16 %v2540
    %v3189 = vunpack.c.l.b16 %v2541
    %v3190 = vunpack.c.l.b16 %v2542
    %v3191 = vunpack.c.h.b16 %v2542
    %v3192 = vunpack.c.l.b16 %v2543
    %v3193 = vunpack.c.l.b16 %v2544
    %v3194 = vunpack.c.h.b16 %v2544
    %v3195 = vunpack.c.l.b16 %v2545
    %v3196 = vunpack.c.l.b16 %v2546
    %v3197 = vunpack.c.h.b16 %v2546
    %v3198 = vunpack.c.l.b16 %v2547
    %v3199 = vunpack.c.l.b16 %v2548
    %v3200 = vunpack.c.h.b16 %v2548
    %v3201 = vunpack.c.l.b16 %v2549
    %v3202 = vunpack.c.l.b16 %v2550
    %v3203 = vunpack.c.h.b16 %v2550
    %v3204 = vunpack.c.l.b16 %v2551
    %v3205 = vunpack.c.l.b16 %v2552
    %v3206 = vunpack.c.h.b16 %v2552
    %v3207 = vunpack.c.l.b16 %v2553
    %v3208 = vunpack.c.l.b16 %v2554
    %v3209 = vunpack.c.h.b16 %v2554
    %v3210 = vunpack.c.l.b16 %v2555
    %v3211 = vunpack.c.l.b16 %v2556
    %v3212 = vunpack.c.h.b16 %v2556
    %v3213 = vunpack.c.l.b16 %v2557
    %v3214 = vunpack.c.l.b16 %v2558
    %v3215 = vunpack.c.h.b16 %v2558
    %v3216 = vunpack.c.l.b16 %v2559
    %v3217 = vunpack.c.l.b16 %v2560
    %v3218 = vunpack.c.h.b16 %v2560
    %v3219 = vunpack.c.l.b16 %v2561
    %v3220 = vunpack.c.l.b16 %v2562
    %v3221 = vunpack.c.h.b16 %v2562
    %v3222 = vunpack.c.l.b16 %v2563
    %v3223 = vunpack.c.l.b16 %v2564
    %v3224 = vunpack.c.h.b16 %v2564
    %v3225 = vunpack.c.l.b16 %v2565
    %v3226 = vunpack.c.l.b16 %v2566
    %v3227 = vunpack.c.h.b16 %v2566
    %v3228 = vunpack.c.l.b16 %v2567
    %v3229 = vunpack.c.l.b16 %v2568
    %v3230 = vunpack.c.h.b16 %v2568
    %v3231 = vunpack.c.l.b16 %v2569
    %v3232 = vunpack.c.l.b16 %v2570
    %v3233 = vunpack.c.h.b16 %v2570
    %v3234 = vunpack.c.l.b16 %v2571
    %v3235 = vunpack.c.l.b16 %v2572
    %v3236 = vunpack.c.h.b16 %v2572
    %v3237 = vunpack.c.l.b16 %v2573
    %v3238 = vunpack.c.l.b16 %v2574
    %v3239 = vunpack.c.h.b16 %v2574
    %v3240 = vunpack.c.l.b16 %v2575
    %v3241 = vunpack.c.l.b16 %v2576
    %v3242 = vunpack.c.h.b16 %v2576
    %v3243 = vunpack.c.l.b16 %v2577
    %v3244 = vunpack.c.l.b16 %v2578
    %v3245 = vunpack.c.h.b16 %v2578
    %v3246 = vunpack.c.l.b16 %v2579
    %v3247 = vunpack.c.l.b16 %v2580
    %v3248 = vunpack.c.h.b16 %v2580
    %v3249 = vunpack.c.l.b16 %v2581
    %v3250 = vunpack.c.l.b16 %v2582
    %v3251 = vunpack.c.h.b16 %v2582
    %v3252 = vunpack.c.l.b16 %v2583
    %v3253 = vunpack.c.l.b16 %v2584
    %v3254 = vunpack.c.h.b16 %v2584
    %v3255 = vunpack.c.l.b16 %v2585
    %v3256 = vunpack.c.l.b16 %v2586
    %v3257 = vunpack.c.h.b16 %v2586
    %v3258 = vunpack.c.l.b16 %v2587
    %v3259 = vunpack.c.l.b16 %v2588
    %v3260 = vunpack.c.h.b16 %v2588
    %v3261 = vunpack.c.l.b16 %v2589
    %v3262 = vunpack.c.l.b16 %v2590
    %v3263 = vunpack.c.h.b16 %v2590
    %v3264 = vunpack.c.l.b16 %v2591
    %v3265 = vunpack.c.l.b16 %v2592
    %v3266 = vunpack.c.h.b16 %v2592
    %v3267 = vunpack.c.l.b16 %v2593
    %v3268 = vunpack.c.l.b16 %v2594
    %v3269 = vunpack.c.h.b16 %v2594
    %v3270 = vunpack.c.l.b16 %v2595
    %v3271 = vunpack.c.l.b16 %v2596
    %v3272 = vunpack.c.h.b16 %v2596
    %v3273 = vunpack.c.l.b16 %v2597
    %v3274 = vunpack.c.l.b16 %v2598
    %v3275 = vunpack.c.h.b16 %v2598
    %v3276 = vunpack.c.l.b16 %v2599
    %v3277 = vunpack.c.l.b16 %v2600
    %v3278 = vunpack.c.h.b16 %v2600
    %v3279 = vunpack.c.l.b16 %v2601
    %v3280 = vunpack.c.l.b16 %v2602
    %v3281 = vunpack.c.h.b16 %v2602
    %v3282 = vunpack.c.l.b16 %v2603
    %v3283 = vunpack.c.l.b16 %v2604
    %v3284 = vunpack.c.h.b16 %v2604
    %v3285 = vunpack.c.l.b16 %v2605
    %v3286 = vunpack.c.l.b16 %v2606
    %v3287 = vunpack.c.h.b16 %v2606
    %v3288 = vunpack.c.l.b16 %v2607
    %v3289 = vunpack.c.l.b16 %v2608
    %v3290 = vunpack.c.h.b16 %v2608
    %v3291 = vunpack.c.l.b16 %v2609
    %v3292 = vunpack.c.l.b16 %v2610
    %v3293 = vunpack.c.h.b16 %v2610
    %v3294 = vunpack.c.l.b16 %v2611
    %v3295 = vunpack.c.l.b16 %v2612
    %v3296 = vunpack.c.h.b16 %v2612
    %v3297 = vunpack.c.l.b16 %v2613
    %v3298 = vunpack.c.l.b16 %v2614
    %v3299 = vunpack.c.h.b16 %v2614
    %v3300 = vunpack.c.l.b16 %v2615
    %v3301 = vunpack.c.l.b16 %v2616
    %v3302 = vunpack.c.h.b16 %v2616
    %v3303 = vunpack.c.l.b16 %v2617
    %v3304 = vunpack.c.l.b16 %v2618
    %v3305 = vunpack.c.h.b16 %v2618
    %v3306 = vunpack.c.l.b16 %v2619
    %v3307 = vunpack.c.l.b16 %v2620
    %v3308 = vunpack.c.h.b16 %v2620
    %v3309 = vunpack.c.l.b16 %v2621
    %v3310 = vunpack.c.l.b16 %v2622
    %v3311 = vunpack.c.h.b16 %v2622
    %v3312 = vunpack.c.l.b16 %v2623
    %v3313 = vunpack.c.l.b16 %v2624
    %v3314 = vunpack.c.h.b16 %v2624
    %v3315 = vunpack.c.l.b16 %v2625
    %v3316 = vunpack.c.l.b16 %v2626
    %v3317 = vunpack.c.h.b16 %v2626
    %v3318 = vunpack.c.l.b16 %v2627
    %v3319 = vunpack.c.l.b16 %v2628
    %v3320 = vunpack.c.h.b16 %v2628
    %v3321 = vunpack.c.l.b16 %v2629
    %v3322 = vunpack.c.l.b16 %v2630
    %v3323 = vunpack.c.h.b16 %v2630
    %v3324 = vunpack.c.l.b16 %v2631
    %v3325 = vunpack.c.l.b16 %v2632
    %v3326 = vunpack.c.h.b16 %v2632
    %v3327 = vunpack.c.l.b16 %v2633
    %v3328 = vunpack.c.l.b16 %v2634
    %v3329 = vunpack.c.h.b16 %v2634
    %v3330 = vunpack.c.l.b16 %v2635
    %v3331 = vunpack.c.l.b16 %v2636
    %v3332 = vunpack.c.h.b16 %v2636
    %v3333 = vunpack.c.l.b16 %v2637
    %v3334 = vunpack.c.l.b16 %v2638
    %v3335 = vunpack.c.h.b16 %v2638
    %v3336 = vunpack.c.l.b16 %v2639
    %v3337 = vunpack.c.l.b16 %v2640
    %v3338 = vunpack.c.h.b16 %v2640
    %v3339 = vunpack.c.l.b16 %v2641
    %v3340 = vunpack.c.l.b16 %v2642
    %v3341 = vunpack.c.h.b16 %v2642
    %v3342 = vunpack.c.l.b16 %v2643
    %v3343 = vunpack.c.l.b16 %v2644
    %v3344 = vunpack.c.h.b16 %v2644
    %v3345 = vunpack.c.l.b16 %v2645
    %v3346 = vunpack.c.l.b16 %v2646
    %v3347 = vunpack.c.h.b16 %v2646
    %v3348 = vunpack.c.l.b16 %v2647
    %v3349 = vunpack.c.l.b16 %v2648
    %v3350 = vunpack.c.h.b16 %v2648
    %v3351 = vunpack.c.l.b16 %v2649
    %v3352 = vunpack.c.l.b16 %v2650
    %v3353 = vunpack.c.h.b16 %v2650
    %v3354 = vunpack.c.l.b16 %v2651
    %v3355 = vunpack.c.l.b16 %v2652
    %v3356 = vunpack.c.h.b16 %v2652
    %v3357 = vunpack.c.l.b16 %v2653
    %v3358 = vunpack.c.l.b16 %v2654
    %v3359 = vunpack.c.h.b16 %v2654
    %v3360 = vunpack.c.l.b16 %v2655
    %v3361 = vunpack.c.l.b16 %v2656
    %v3362 = vunpack.c.h.b16 %v2656
    %v3363 = vunpack.c.l.b16 %v2657
    %v3364 = vunpack.c.l.b16 %v2658
    %v3365 = vunpack.c.h.b16 %v2658
    %v3366 = vunpack.c.l.b16 %v2659
    %v3367 = vunpack.c.l.b16 %v2660
    %v3368 = vunpack.c.h.b16 %v2660
    %v3369 = vunpack.c.l.b16 %v2661
    %v3370 = vunpack.c.l.b16 %v2662
    %v3371 = vunpack.c.h.b16 %v2662
    %v3372 = vunpack.c.l.b16 %v2663
    %v3373 = vunpack.c.l.b16 %v2664
    %v3374 = vunpack.c.h.b16 %v2664
    %v3375 = vunpack.c.l.b16 %v2665
    %v3376 = vunpack.c.l.b16 %v2666
    %v3377 = vunpack.c.h.b16 %v2666
    %v3378 = vunpack.c.l.b16 %v2667
    %v3379 = vunpack.c.l.b16 %v2668
    %v3380 = vunpack.c.h.b16 %v2668
    %v3381 = vunpack.c.l.b16 %v2669
    %v3382 = vunpack.c.l.b16 %v2670
    %v3383 = vunpack.c.h.b16 %v2670
    %v3384 = vunpack.c.l.b16 %v2671
    %v3385 = vunpack.c.l.b16 %v2672
    %v3386 = vunpack.c.h.b16 %v2672
    %v3387 = vunpack.c.l.b16 %v2673
    %v3388 = vunpack.c.l.b16 %v2674
    %v3389 = vunpack.c.h.b16 %v2674
    %v3390 = vunpack.c.l.b16 %v2675
    %v3391 = vunpack.c.l.b16 %v2676
    %v3392 = vunpack.c.h.b16 %v2676
    %v3393 = vunpack.c.l.b16 %v2677
    %v3394 = vunpack.c.l.b16 %v2678
    %v3395 = vunpack.c.h.b16 %v2678
    %v3396 = vunpack.c.l.b16 %v2679
    %v3397 = vunpack.c.l.b16 %v2680
    %v3398 = vunpack.c.h.b16 %v2680
    %v3399 = vunpack.c.l.b16 %v2681
    %v3400 = vunpack.c.l.b16 %v2682
    %v3401 = vunpack.c.h.b16 %v2682
    %v3402 = vunpack.c.l.b16 %v2683
    %v3403 = vunpack.c.l.b16 %v2684
    %v3404 = vunpack.c.h.b16 %v2684
    %v3405 = vunpack.c.l.b16 %v2685
    %v3406 = vunpack.c.l.b16 %v2686
    %v3407 = vunpack.c.h.b16 %v2686
    %v3408 = vunpack.c.l.b16 %v2687
    %v3409 = vunpack.c.l.b16 %v2688
    %v3410 = vunpack.c.h.b16 %v2688
    %v3411 = vunpack.c.l.b16 %v2689
    %v3412 = vunpack.c.l.b16 %v2690
    %v3413 = vunpack.c.h.b16 %v2690
    %v3414 = vunpack.c.l.b16 %v2691
    %v3415 = vunpack.c.l.b16 %v2692
    %v3416 = vunpack.c.h.b16 %v2692
    %v3417 = vunpack.c.l.b16 %v2693
    %v3418 = vunpack.c.l.b16 %v2694
    %v3419 = vunpack.c.h.b16 %v2694
    %v3420 = vunpack.c.l.b16 %v2695
    %v3421 = vunpack.c.l.b16 %v2696
    %v3422 = vunpack.c.h.b16 %v2696
    %v3423 = vunpack.c.l.b16 %v2697
    %v3424 = vunpack.c.l.b16 %v2698
    %v3425 = vunpack.c.h.b16 %v2698
    %v3426 = vunpack.c.l.b16 %v2699
    %v3427 = vunpack.c.l.b16 %v2700
    %v3428 = vunpack.c.h.b16 %v2700
    %v3429 = vunpack.c.l.b16 %v2701
    %v3430 = vunpack.c.l.b16 %v2702
    %v3431 = vunpack.c.h.b16 %v2702
    %v3432 = vunpack.c.l.b16 %v2703
    %v3433 = vunpack.c.l.b16 %v2704
    %v3434 = vunpack.c.h.b16 %v2704
    %v3435 = vunpack.c.l.b16 %v2705
    %v3436 = vunpack.c.l.b16 %v2706
    %v3437 = vunpack.c.h.b16 %v2706
    %v3438 = vunpack.c.l.b16 %v2707
    %v3439 = vunpack.c.l.b16 %v2708
    %v3440 = vunpack.c.h.b16 %v2708
    %v3441 = vunpack.c.l.b16 %v2709
    %v3442 = vunpack.c.l.b16 %v2710
    %v3443 = vunpack.c.h.b16 %v2710
    %v3444 = vunpack.c.l.b16 %v2711
    %v3445 = vunpack.c.l.b16 %v2712
    %v3446 = vunpack.c.h.b16 %v2712
    %v3447 = vunpack.c.l.b16 %v2713
    %v3448 = vunpack.c.l.b16 %v2714
    %v3449 = vunpack.c.h.b16 %v2714
    %v3450 = vunpack.c.l.b16 %v2715
    %v3451 = vunpack.c.l.b16 %v2716
    %v3452 = vunpack.c.h.b16 %v2716
    %v3453 = vunpack.c.l.b16 %v2717
    %v3454 = vunpack.c.l.b16 %v2718
    %v3455 = vunpack.c.h.b16 %v2718
    %v3456 = vunpack.c.l.b16 %v2719
    %v3457 = vunpack.c.l.b16 %v2720
    %v3458 = vunpack.c.h.b16 %v2720
    %v3459 = vunpack.c.l.b16 %v2721
    %v3460 = vunpack.c.l.b16 %v2722
    %v3461 = vunpack.c.h.b16 %v2722
    %v3462 = vunpack.c.l.b16 %v2723
    %v3463 = vunpack.c.l.b16 %v2724
    %v3464 = vunpack.c.h.b16 %v2724
    %v3465 = vunpack.c.l.b16 %v2725
    %v3466 = vunpack.c.l.b16 %v2726
    %v3467 = vunpack.c.h.b16 %v2726
    %v3468 = vunpack.c.l.b16 %v2727
    %v3469 = vunpack.c.l.b16 %v2728
    %v3470 = vunpack.c.h.b16 %v2728
    %v3471 = vunpack.c.l.b16 %v2729
    %v3472 = vunpack.c.l.b16 %v2730
    %v3473 = vunpack.c.h.b16 %v2730
    %v3474 = vunpack.c.l.b16 %v2731
    %v3475 = vunpack.c.l.b16 %v2732
    %v3476 = vunpack.c.h.b16 %v2732
    %v3477 = vunpack.c.l.b16 %v2733
    %v3478 = vunpack.c.l.b16 %v2734
    %v3479 = vunpack.c.h.b16 %v2734
    %v3480 = vunpack.c.l.b16 %v2735
    %v3481 = vunpack.c.l.b16 %v2736
    %v3482 = vunpack.c.h.b16 %v2736
    %v3483 = vunpack.c.l.b16 %v2737
    %v3484 = vunpack.c.l.b16 %v2738
    %v3485 = vunpack.c.h.b16 %v2738
    %v3486 = vunpack.c.l.b16 %v2739
    %v3487 = vunpack.c.l.b16 %v2740
    %v3488 = vunpack.c.h.b16 %v2740
    %v3489 = vunpack.c.l.b16 %v2741
    %v3490 = vunpack.c.l.b16 %v2742
    %v3491 = vunpack.c.h.b16 %v2742
    %v3492 = vunpack.c.l.b16 %v2743
    %v3493 = vunpack.c.l.b16 %v2744
    %v3494 = vunpack.c.h.b16 %v2744
    %v3495 = vunpack.c.l.b16 %v2745
    %v3496 = vunpack.c.l.b16 %v2746
    %v3497 = vunpack.c.h.b16 %v2746
    %v3498 = vunpack.c.l.b16 %v2747
    %v3499 = vpack.c.b16 %v3070, %v3067
    %v3500 = vpack.c.b16 %v3071, %v3068
    %v3501 = vpack.c.b16 %v3072, %v3069
    %v3502 = vpack.c.b16 %v3076, %v3073
    %v3503 = vpack.c.b16 %v3077, %v3074
    %v3504 = vpack.c.b16 %v3078, %v3075
    %v3505 = vpack.c.b16 %v3082, %v3079
    %v3506 = vpack.c.b16 %v3083, %v3080
    %v3507 = vpack.c.b16 %v3084, %v3081
    %v3508 = vpack.c.b16 %v3088, %v3085
    %v3509 = vpack.c.b16 %v3089, %v3086
    %v3510 = vpack.c.b16 %v3090, %v3087
    %v3511 = vpack.c.b16 %v3094, %v3091
    %v3512 = vpack.c.b16 %v3095, %v3092
    %v3513 = vpack.c.b16 %v3096, %v3093
    %v3514 = vpack.c.b16 %v3100, %v3097
    %v3515 = vpack.c.b16 %v3101, %v3098
    %v3516 = vpack.c.b16 %v3102, %v3099
    %v3517 = vpack.c.b16 %v3106, %v3103
    %v3518 = vpack.c.b16 %v3107, %v3104
    %v3519 = vpack.c.b16 %v3108, %v3105
    %v3520 = vpack.c.b16 %v3112, %v3109
    %v3521 = vpack.c.b16 %v3113, %v3110
    %v3522 = vpack.c.b16 %v3114, %v3111
    %v3523 = vpack.c.b16 %v3118, %v3115
    %v3524 = vpack.c.b16 %v3119, %v3116
    %v3525 = vpack.c.b16 %v3120, %v3117
    %v3526 = vpack.c.b16 %v3124, %v3121
    %v3527 = vpack.c.b16 %v3125, %v3122
    %v3528 = vpack.c.b16 %v3126, %v3123
    %v3529 = vpack.c.b16 %v3130, %v3127
    %v3530 = vpack.c.b16 %v3131, %v3128
    %v3531 = vpack.c.b16 %v3132, %v3129
    %v3532 = vpack.c.b16 %v3136, %v3133
    %v3533 = vpack.c.b16 %v3137, %v3134
    %v3534 = vpack.c.b16 %v3138, %v3135
    %v3535 = vpack.c.b16 %v3142, %v3139
    %v3536 = vpack.c.b16 %v3143, %v3140
    %v3537 = vpack.c.b16 %v3144, %v3141
    %v3538 = vpack.c.b16 %v3148, %v3145
    %v3539 = vpack.c.b16 %v3149, %v3146
    %v3540 = vpack.c.b16 %v3150, %v3147
    %v3541 = vpack.c.b16 %v3154, %v3151
    %v3542 = vpack.c.b16 %v3155, %v3152
    %v3543 = vpack.c.b16 %v3156, %v3153
    %v3544 = vpack.c.b16 %v3160, %v3157
    %v3545 = vpack.c.b16 %v3161, %v3158
    %v3546 = vpack.c.b16 %v3162, %v3159
    %v3547 = vpack.c.b16 %v3166, %v3163
    %v3548 = vpack.c.b16 %v3167, %v3164
    %v3549 = vpack.c.b16 %v3168, %v3165
    %v3550 = vpack.c.b16 %v3172, %v3169
    %v3551 = vpack.c.b16 %v3173, %v3170
    %v3552 = vpack.c.b16 %v3174, %v3171
    %v3553 = vpack.c.b16 %v3178, %v3175
    %v3554 = vpack.c.b16 %v3179, %v3176
    %v3555 = vpack.c.b16 %v3180, %v3177
    %v3556 = vpack.c.b16 %v3184, %v3181
    %v3557 = vpack.c.b16 %v3185, %v3182
    %v3558 = vpack.c.b16 %v3186, %v3183
    %v3559 = vpack.c.b16 %v3190, %v3187
    %v3560 = vpack.c.b16 %v3191, %v3188
    %v3561 = vpack.c.b16 %v3192, %v3189
    %v3562 = vpack.c.b16 %v3196, %v3193
    %v3563 = vpack.c.b16 %v3197, %v3194
    %v3564 = vpack.c.b16 %v3198, %v3195
    %v3565 = vpack.c.b16 %v3202, %v3199
    %v3566 = vpack.c.b16 %v3203, %v3200
    %v3567 = vpack.c.b16 %v3204, %v3201
    %v3568 = vpack.c.b16 %v3208, %v3205
    %v3569 = vpack.c.b16 %v3209, %v3206
    %v3570 = vpack.c.b16 %v3210, %v3207
    %v3571 = vpack.c.b16 %v3214, %v3211
    %v3572 = vpack.c.b16 %v3215, %v3212
    %v3573 = vpack.c.b16 %v3216, %v3213
    %v3574 = vpack.c.b16 %v3220, %v3217
    %v3575 = vpack.c.b16 %v3221, %v3218
    %v3576 = vpack.c.b16 %v3222, %v3219
    %v3577 = vpack.c.b16 %v3226, %v3223
    %v3578 = vpack.c.b16 %v3227, %v3224
    %v3579 = vpack.c.b16 %v3228, %v3225
    %v3580 = vpack.c.b16 %v3232, %v3229
    %v3581 = vpack.c.b16 %v3233, %v3230
    %v3582 = vpack.c.b16 %v3234, %v3231
    %v3583 = vpack.c.b16 %v3238, %v3235
    %v3584 = vpack.c.b16 %v3239, %v3236
    %v3585 = vpack.c.b16 %v3240, %v3237
    %v3586 = vpack.c.b16 %v3244, %v3241
    %v3587 = vpack.c.b16 %v3245, %v3242
    %v3588 = vpack.c.b16 %v3246, %v3243
    %v3589 = vpack.c.b16 %v3250, %v3247
    %v3590 = vpack.c.b16 %v3251, %v3248
    %v3591 = vpack.c.b16 %v3252, %v3249
    %v3592 = vpack.c.b16 %v3256, %v3253
    %v3593 = vpack.c.b16 %v3257, %v3254
    %v3594 = vpack.c.b16 %v3258, %v3255
    %v3595 = vpack.c.b16 %v3262, %v3259
    %v3596 = vpack.c.b16 %v3263, %v3260
    %v3597 = vpack.c.b16 %v3264, %v3261
    %v3598 = vpack.c.b16 %v3268, %v3265
    %v3599 = vpack.c.b16 %v3269, %v3266
    %v3600 = vpack.c.b16 %v3270, %v3267
    %v3601 = vpack.c.b16 %v3274, %v3271
    %v3602 = vpack.c.b16 %v3275, %v3272
    %v3603 = vpack.c.b16 %v3276, %v3273
    %v3604 = vpack.c.b16 %v3280, %v3277
    %v3605 = vpack.c.b16 %v3281, %v3278
    %v3606 = vpack.c.b16 %v3282, %v3279
    %v3607 = vpack.c.b16 %v3286, %v3283
    %v3608 = vpack.c.b16 %v3287, %v3284
    %v3609 = vpack.c.b16 %v3288, %v3285
    %v3610 = vpack.c.b16 %v3292, %v3289
    %v3611 = vpack.c.b16 %v3293, %v3290
    %v3612 = vpack.c.b16 %v3294, %v3291
    %v3613 = vpack.c.b16 %v3298, %v3295
    %v3614 = vpack.c.b16 %v3299, %v3296
    %v3615 = vpack.c.b16 %v3300, %v3297
    %v3616 = vpack.c.b16 %v3304, %v3301
    %v3617 = vpack.c.b16 %v3305, %v3302
    %v3618 = vpack.c.b16 %v3306, %v3303
    %v3619 = vpack.c.b16 %v3310, %v3307
    %v3620 = vpack.c.b16 %v3311, %v3308
    %v3621 = vpack.c.b16 %v3312, %v3309
    %v3622 = vpack.c.b16 %v3316, %v3313
    %v3623 = vpack.c.b16 %v3317, %v3314
    %v3624 = vpack.c.b16 %v3318, %v3315
    %v3625 = vpack.c.b16 %v3322, %v3319
    %v3626 = vpack.c.b16 %v3323, %v3320
    %v3627 = vpack.c.b16 %v3324, %v3321
    %v3628 = vpack.c.b16 %v3328, %v3325
    %v3629 = vpack.c.b16 %v3329, %v3326
    %v3630 = vpack.c.b16 %v3330, %v3327
    %v3631 = vpack.c.b16 %v3334, %v3331
    %v3632 = vpack.c.b16 %v3335, %v3332
    %v3633 = vpack.c.b16 %v3336, %v3333
    %v3634 = vpack.c.b16 %v3340, %v3337
    %v3635 = vpack.c.b16 %v3341, %v3338
    %v3636 = vpack.c.b16 %v3342, %v3339
    %v3637 = vpack.c.b16 %v3346, %v3343
    %v3638 = vpack.c.b16 %v3347, %v3344
    %v3639 = vpack.c.b16 %v3348, %v3345
    %v3640 = vpack.c.b16 %v3352, %v3349
    %v3641 = vpack.c.b16 %v3353, %v3350
    %v3642 = vpack.c.b16 %v3354, %v3351
    %v3643 = vpack.c.b16 %v3358, %v3355
    %v3644 = vpack.c.b16 %v3359, %v3356
    %v3645 = vpack.c.b16 %v3360, %v3357
    %v3646 = vpack.c.b16 %v3364, %v3361
    %v3647 = vpack.c.b16 %v3365, %v3362
    %v3648 = vpack.c.b16 %v3366, %v3363
    %v3649 = vpack.c.b16 %v3370, %v3367
    %v3650 = vpack.c.b16 %v3371, %v3368
    %v3651 = vpack.c.b16 %v3372, %v3369
    %v3652 = vpack.c.b16 %v3376, %v3373
    %v3653 = vpack.c.b16 %v3377, %v3374
    %v3654 = vpack.c.b16 %v3378, %v3375
    %v3655 = vpack.c.b16 %v3382, %v3379
    %v3656 = vpack.c.b16 %v3383, %v3380
    %v3657 = vpack.c.b16 %v3384, %v3381
    %v3658 = vpack.c.b16 %v3388, %v3385
    %v3659 = vpack.c.b16 %v3389, %v3386
    %v3660 = vpack.c.b16 %v3390, %v3387
    %v3661 = vpack.c.b16 %v3394, %v3391
    %v3662 = vpack.c.b16 %v3395, %v3392
    %v3663 = vpack.c.b16 %v3396, %v3393
    %v3664 = vpack.c.b16 %v3400, %v3397
    %v3665 = vpack.c.b16 %v3401, %v3398
    %v3666 = vpack.c.b16 %v3402, %v3399
    %v3667 = vpack.c.b16 %v3406, %v3403
    %v3668 = vpack.c.b16 %v3407, %v3404
    %v3669 = vpack.c.b16 %v3408, %v3405
    %v3670 = vpack.c.b16 %v3412, %v3409
    %v3671 = vpack.c.b16 %v3413, %v3410
    %v3672 = vpack.c.b16 %v3414, %v3411
    %v3673 = vpack.c.b16 %v3418, %v3415
    %v3674 = vpack.c.b16 %v3419, %v3416
    %v3675 = vpack.c.b16 %v3420, %v3417
    %v3676 = vpack.c.b16 %v3424, %v3421
    %v3677 = vpack.c.b16 %v3425, %v3422
    %v3678 = vpack.c.b16 %v3426, %v3423
    %v3679 = vpack.c.b16 %v3430, %v3427
    %v3680 = vpack.c.b16 %v3431, %v3428
    %v3681 = vpack.c.b16 %v3432, %v3429
    %v3682 = vpack.c.b16 %v3436, %v3433
    %v3683 = vpack.c.b16 %v3437, %v3434
    %v3684 = vpack.c.b16 %v3438, %v3435
    %v3685 = vpack.c.b16 %v3442, %v3439
    %v3686 = vpack.c.b16 %v3443, %v3440
    %v3687 = vpack.c.b16 %v3444, %v3441
    %v3688 = vpack.c.b16 %v3448, %v3445
    %v3689 = vpack.c.b16 %v3449, %v3446
    %v3690 = vpack.c.b16 %v3450, %v3447
    %v3691 = vpack.c.b16 %v3454, %v3451
    %v3692 = vpack.c.b16 %v3455, %v3452
    %v3693 = vpack.c.b16 %v3456, %v3453
    %v3694 = vpack.c.b16 %v3460, %v3457
    %v3695 = vpack.c.b16 %v3461, %v3458
    %v3696 = vpack.c.b16 %v3462, %v3459
    %v3697 = vpack.c.b16 %v3466, %v3463
    %v3698 = vpack.c.b16 %v3467, %v3464
    %v3699 = vpack.c.b16 %v3468, %v3465
    %v3700 = vpack.c.b16 %v3472, %v3469
    %v3701 = vpack.c.b16 %v3473, %v3470
    %v3702 = vpack.c.b16 %v3474, %v3471
    %v3703 = vpack.c.b16 %v3478, %v3475
    %v3704 = vpack.c.b16 %v3479, %v3476
    %v3705 = vpack.c.b16 %v3480, %v3477
    %v3706 = vpack.c.b16 %v3484, %v3481
    %v3707 = vpack.c.b16 %v3485, %v3482
    %v3708 = vpack.c.b16 %v3486, %v3483
    %v3709 = vpack.c.b16 %v3490, %v3487
    %v3710 = vpack.c.b16 %v3491, %v3488
    %v3711 = vpack.c.b16 %v3492, %v3489
    %v3712 = vpack.c.b16 %v3496, %v3493
    %v3713 = vpack.c.b16 %v3497, %v3494
    %v3714 = vpack.c.b16 %v3498, %v3495
    %3931 = vmatprep.subr.bf16.mxu0 %v3500
    %3932 = vmatpush1.bf16.msra.mxu0 %v3499
    %3933 = vmatprep.subr.bf16.mxu0 %v3503
    %3934 = vmatpush1.bf16.msra.mxu0 %v3502
    %3935 = vmatprep.subr.bf16.mxu0 %v3506
    %3936 = vmatpush1.bf16.msra.mxu0 %v3505
    %3937 = vmatprep.subr.bf16.mxu0 %v3509
    %3938 = vmatpush1.bf16.msra.mxu0 %v3508
    %3939 = vmatprep.subr.bf16.mxu0 %v3512
    %3940 = vmatpush1.bf16.msra.mxu0 %v3511
    %3941 = vmatprep.subr.bf16.mxu0 %v3515
    %3942 = vmatpush1.bf16.msra.mxu0 %v3514
    %3943 = vmatprep.subr.bf16.mxu0 %v3518
    %3944 = vmatpush1.bf16.msra.mxu0 %v3517
    %3945 = vmatprep.subr.bf16.mxu0 %v3521
    %3946 = vmatpush1.bf16.msra.mxu0 %v3520
    %3947 = vmatprep.subr.bf16.mxu0 %v3524
    %3948 = vmatpush1.bf16.msra.mxu0 %v3523
    %3949 = vmatprep.subr.bf16.mxu0 %v3527
    %3950 = vmatpush1.bf16.msra.mxu0 %v3526
    %3951 = vmatprep.subr.bf16.mxu0 %v3530
    %3952 = vmatpush1.bf16.msra.mxu0 %v3529
    %3953 = vmatprep.subr.bf16.mxu0 %v3533
    %3954 = vmatpush1.bf16.msra.mxu0 %v3532
    %3955 = vmatprep.subr.bf16.mxu0 %v3536
    %3956 = vmatpush1.bf16.msra.mxu0 %v3535
    %3957 = vmatprep.subr.bf16.mxu0 %v3539
    %3958 = vmatpush1.bf16.msra.mxu0 %v3538
    %3959 = vmatprep.subr.bf16.mxu0 %v3542
    %3960 = vmatpush1.bf16.msra.mxu0 %v3541
    %3961 = vmatprep.subr.bf16.mxu0 %v3545
    %3962 = vmatpush1.bf16.msra.mxu0 %v3544
    %3963 = vmatprep.mubr.bf16.mxu0 %v2452
    %3964 = vmatmul.mubr.bf16.gmra.mrb[0].mxu0 %v2451
    %v3965 = vpop.f32.mrb[0].mxu0
    %v3966 = vadd.f32 %v2770, %v3965
    %v3967 = vpop.f32.mrb[0].mxu0
    %v3968 = vadd.f32 %v2774, %v3967
    %v3969 = vpop.f32.mrb[0].mxu0
    %v3970 = vpop.f32.mrb[0].mxu0
    %3971 = vdwg.mxu0
    %3972 = vmatprep.subr.bf16.mxu0 %v3548
    %3973 = vmatpush1.bf16.msra.mxu0 %v3547
    %3974 = vmatprep.subr.bf16.mxu0 %v3551
    %3975 = vmatpush1.bf16.msra.mxu0 %v3550
    %3976 = vmatprep.subr.bf16.mxu0 %v3554
    %3977 = vmatpush1.bf16.msra.mxu0 %v3553
    %3978 = vmatprep.subr.bf16.mxu0 %v3557
    %3979 = vmatpush1.bf16.msra.mxu0 %v3556
    %3980 = vmatprep.subr.bf16.mxu0 %v3560
    %3981 = vmatpush1.bf16.msra.mxu0 %v3559
    %3982 = vmatprep.subr.bf16.mxu0 %v3563
    %3983 = vmatpush1.bf16.msra.mxu0 %v3562
    %3984 = vmatprep.subr.bf16.mxu0 %v3566
    %3985 = vmatpush1.bf16.msra.mxu0 %v3565
    %3986 = vmatprep.subr.bf16.mxu0 %v3569
    %3987 = vmatpush1.bf16.msra.mxu0 %v3568
    %3988 = vmatprep.subr.bf16.mxu0 %v3572
    %3989 = vmatpush1.bf16.msra.mxu0 %v3571
    %3990 = vmatprep.subr.bf16.mxu0 %v3575
    %3991 = vmatpush1.bf16.msra.mxu0 %v3574
    %3992 = vmatprep.subr.bf16.mxu0 %v3578
    %3993 = vmatpush1.bf16.msra.mxu0 %v3577
    %3994 = vmatprep.subr.bf16.mxu0 %v3581
    %3995 = vmatpush1.bf16.msra.mxu0 %v3580
    %3996 = vmatprep.subr.bf16.mxu0 %v3584
    %3997 = vmatpush1.bf16.msra.mxu0 %v3583
    %3998 = vmatprep.subr.bf16.mxu0 %v3587
    %3999 = vmatpush1.bf16.msra.mxu0 %v3586
    %4000 = vmatprep.subr.bf16.mxu0 %v3590
    %4001 = vmatpush1.bf16.msra.mxu0 %v3589
    %4002 = vmatprep.subr.bf16.mxu0 %v3593
    %4003 = vmatpush1.bf16.msra.mxu0 %v3592
    %4004 = vmatprep.mubr.bf16.mxu0 %v2454
    %4005 = vmatmul.mubr.bf16.gmra.mrb[0].mxu0 %v2453
    %v4006 = vpop.f32.mrb[0].mxu0
    %v4007 = vadd.f32 %v3966, %v4006
    %v4008 = vpop.f32.mrb[0].mxu0
    %v4009 = vadd.f32 %v3968, %v4008
    %v4010 = vpop.f32.mrb[0].mxu0
    %v4011 = vpop.f32.mrb[0].mxu0
    %4012 = vdwg.mxu0
    %4013 = vmatprep.subr.bf16.mxu0 %v3596
    %4014 = vmatpush1.bf16.msra.mxu0 %v3595
    %4015 = vmatprep.subr.bf16.mxu0 %v3599
    %4016 = vmatpush1.bf16.msra.mxu0 %v3598
    %4017 = vmatprep.subr.bf16.mxu0 %v3602
    %4018 = vmatpush1.bf16.msra.mxu0 %v3601
    %4019 = vmatprep.subr.bf16.mxu0 %v3605
    %4020 = vmatpush1.bf16.msra.mxu0 %v3604
    %4021 = vmatprep.subr.bf16.mxu0 %v3608
    %4022 = vmatpush1.bf16.msra.mxu0 %v3607
    %4023 = vmatprep.subr.bf16.mxu0 %v3611
    %4024 = vmatpush1.bf16.msra.mxu0 %v3610
    %4025 = vmatprep.subr.bf16.mxu0 %v3614
    %4026 = vmatpush1.bf16.msra.mxu0 %v3613
    %4027 = vmatprep.subr.bf16.mxu0 %v3617
    %4028 = vmatpush1.bf16.msra.mxu0 %v3616
    %4029 = vmatprep.subr.bf16.mxu0 %v3620
    %4030 = vmatpush1.bf16.msra.mxu0 %v3619
    %4031 = vmatprep.subr.bf16.mxu0 %v3623
    %4032 = vmatpush1.bf16.msra.mxu0 %v3622
    %4033 = vmatprep.subr.bf16.mxu0 %v3626
    %4034 = vmatpush1.bf16.msra.mxu0 %v3625
    %4035 = vmatprep.subr.bf16.mxu0 %v3629
    %4036 = vmatpush1.bf16.msra.mxu0 %v3628
    %4037 = vmatprep.subr.bf16.mxu0 %v3632
    %4038 = vmatpush1.bf16.msra.mxu0 %v3631
    %4039 = vmatprep.subr.bf16.mxu0 %v3635
    %4040 = vmatpush1.bf16.msra.mxu0 %v3634
    %4041 = vmatprep.subr.bf16.mxu0 %v3638
    %4042 = vmatpush1.bf16.msra.mxu0 %v3637
    %4043 = vmatprep.subr.bf16.mxu0 %v3641
    %4044 = vmatpush1.bf16.msra.mxu0 %v3640
    %4045 = vmatprep.mubr.bf16.mxu0 %v2456
    %4046 = vmatmul.mubr.bf16.gmra.mrb[0].mxu0 %v2455
    %v4047 = vpop.f32.mrb[0].mxu0
    %v4048 = vadd.f32 %v4007, %v4047
    %v4049 = vpop.f32.mrb[0].mxu0
    %v4050 = vadd.f32 %v4009, %v4049
    %v4051 = vpop.f32.mrb[0].mxu0
    %v4052 = vpop.f32.mrb[0].mxu0
    %4053 = vdwg.mxu0
    %4054 = vmatprep.subr.bf16.mxu0 %v3644
    %4055 = vmatpush1.bf16.msra.mxu0 %v3643
    %4056 = vmatprep.subr.bf16.mxu0 %v3647
    %4057 = vmatpush1.bf16.msra.mxu0 %v3646
    %4058 = vmatprep.subr.bf16.mxu0 %v3650
    %4059 = vmatpush1.bf16.msra.mxu0 %v3649
    %4060 = vmatprep.subr.bf16.mxu0 %v3653
    %4061 = vmatpush1.bf16.msra.mxu0 %v3652
    %4062 = vmatprep.subr.bf16.mxu0 %v3656
    %4063 = vmatpush1.bf16.msra.mxu0 %v3655
    %4064 = vmatprep.subr.bf16.mxu0 %v3659
    %4065 = vmatpush1.bf16.msra.mxu0 %v3658
    %4066 = vmatprep.subr.bf16.mxu0 %v3662
    %4067 = vmatpush1.bf16.msra.mxu0 %v3661
    %4068 = vmatprep.subr.bf16.mxu0 %v3665
    %4069 = vmatpush1.bf16.msra.mxu0 %v3664
    %4070 = vmatprep.subr.bf16.mxu0 %v3668
    %4071 = vmatpush1.bf16.msra.mxu0 %v3667
    %4072 = vmatprep.subr.bf16.mxu0 %v3671
    %4073 = vmatpush1.bf16.msra.mxu0 %v3670
    %4074 = vmatprep.subr.bf16.mxu0 %v3674
    %4075 = vmatpush1.bf16.msra.mxu0 %v3673
    %4076 = vmatprep.subr.bf16.mxu0 %v3677
    %4077 = vmatpush1.bf16.msra.mxu0 %v3676
    %4078 = vmatprep.subr.bf16.mxu0 %v3680
    %4079 = vmatpush1.bf16.msra.mxu0 %v3679
    %4080 = vmatprep.subr.bf16.mxu0 %v3683
    %4081 = vmatpush1.bf16.msra.mxu0 %v3682
    %4082 = vmatprep.subr.bf16.mxu0 %v3686
    %4083 = vmatpush1.bf16.msra.mxu0 %v3685
    %4084 = vmatprep.subr.bf16.mxu0 %v3689
    %4085 = vmatpush1.bf16.msra.mxu0 %v3688
    %4086 = vmatprep.mubr.bf16.mxu0 %v2458
    %4087 = vmatmul.mubr.bf16.gmra.mrb[0].mxu0 %v2457
    %v4088 = vpop.f32.mrb[0].mxu0
    %v4089 = vadd.f32 %v4048, %v4088
    %v4090 = vpop.f32.mrb[0].mxu0
    %v4091 = vadd.f32 %v4050, %v4090
    %v4092 = vpop.f32.mrb[0].mxu0
    %v4093 = vpop.f32.mrb[0].mxu0
    %4094 = vdwg.mxu0
    %4095 = vmatprep.subr.bf16.mxu0 %v3692
    %4096 = vmatpush1.bf16.msra.mxu0 %v3691
    %4097 = vmatprep.subr.bf16.mxu0 %v3695
    %4098 = vmatpush1.bf16.msra.mxu0 %v3694
    %4099 = vmatprep.subr.bf16.mxu0 %v3698
    %4100 = vmatpush1.bf16.msra.mxu0 %v3697
    %4101 = vmatprep.subr.bf16.mxu0 %v3701
    %4102 = vmatpush1.bf16.msra.mxu0 %v3700
    %4103 = vmatprep.subr.bf16.mxu0 %v3704
    %4104 = vmatpush1.bf16.msra.mxu0 %v3703
    %4105 = vmatprep.subr.bf16.mxu0 %v3707
    %4106 = vmatpush1.bf16.msra.mxu0 %v3706
    %4107 = vmatprep.subr.bf16.mxu0 %v3710
    %4108 = vmatpush1.bf16.msra.mxu0 %v3709
    %4109 = vmatprep.subr.bf16.mxu0 %v3713
    %4110 = vmatpush1.bf16.msra.mxu0 %v3712
    %4111 = vmatprep.subr.bf16.mxu0 0
    %4112 = vmatpush1.bf16.msra.mxu0 0
    %4113 = vmatprep.subr.bf16.mxu0 0
    %4114 = vmatpush1.bf16.msra.mxu0 0
    %4115 = vmatprep.subr.bf16.mxu0 0
    %4116 = vmatpush1.bf16.msra.mxu0 0
    %4117 = vmatprep.subr.bf16.mxu0 0
    %4118 = vmatpush1.bf16.msra.mxu0 0
    %4119 = vmatprep.subr.bf16.mxu0 0
    %4120 = vmatpush1.bf16.msra.mxu0 0
    %4121 = vmatprep.subr.bf16.mxu0 0
    %4122 = vmatpush1.bf16.msra.mxu0 0
    %4123 = vmatprep.subr.bf16.mxu0 0
    %4124 = vmatpush1.bf16.msra.mxu0 0
    %4125 = vmatprep.subr.bf16.mxu0 0
    %4126 = vmatpush1.bf16.msra.mxu0 0
    %4127 = vmatprep.mubr.bf16.mxu0 0
    %4128 = vmatmul.mubr.bf16.gmra.mrb[0].mxu0 %v2459
    %v4129 = vpop.f32.mrb[0].mxu0
    %v4130 = vadd.f32 %v4089, %v4129
    %v4131 = vpop.f32.mrb[0].mxu0
    %v4132 = vadd.f32 %v4091, %v4131
    %v4133 = vpop.f32.mrb[0].mxu0
    %v4134 = vpop.f32.mrb[0].mxu0
    %4135 = vdwg.mxu0
    %4136 = vmatprep.subr.bf16.mxu0 0
    %4137 = vmatpush1.bf16.msra.mxu0 %v3501
    %4138 = vmatprep.subr.bf16.mxu0 0
    %4139 = vmatpush1.bf16.msra.mxu0 %v3504
    %4140 = vmatprep.subr.bf16.mxu0 0
    %4141 = vmatpush1.bf16.msra.mxu0 %v3507
    %4142 = vmatprep.subr.bf16.mxu0 0
    %4143 = vmatpush1.bf16.msra.mxu0 %v3510
    %4144 = vmatprep.subr.bf16.mxu0 0
    %4145 = vmatpush1.bf16.msra.mxu0 %v3513
    %4146 = vmatprep.subr.bf16.mxu0 0
    %4147 = vmatpush1.bf16.msra.mxu0 %v3516
    %4148 = vmatprep.subr.bf16.mxu0 0
    %4149 = vmatpush1.bf16.msra.mxu0 %v3519
    %4150 = vmatprep.subr.bf16.mxu0 0
    %4151 = vmatpush1.bf16.msra.mxu0 %v3522
    %4152 = vmatprep.subr.bf16.mxu0 0
    %4153 = vmatpush1.bf16.msra.mxu0 %v3525
    %4154 = vmatprep.subr.bf16.mxu0 0
    %4155 = vmatpush1.bf16.msra.mxu0 %v3528
    %4156 = vmatprep.subr.bf16.mxu0 0
    %4157 = vmatpush1.bf16.msra.mxu0 %v3531
    %4158 = vmatprep.subr.bf16.mxu0 0
    %4159 = vmatpush1.bf16.msra.mxu0 %v3534
    %4160 = vmatprep.subr.bf16.mxu0 0
    %4161 = vmatpush1.bf16.msra.mxu0 %v3537
    %4162 = vmatprep.subr.bf16.mxu0 0
    %4163 = vmatpush1.bf16.msra.mxu0 %v3540
    %4164 = vmatprep.subr.bf16.mxu0 0
    %4165 = vmatpush1.bf16.msra.mxu0 %v3543
    %4166 = vmatprep.subr.bf16.mxu0 0
    %4167 = vmatpush1.bf16.msra.mxu0 %v3546
    %4168 = vmatprep.mubr.bf16.mxu0 %v2452
    %4169 = vmatmul.mubr.bf16.gmra.mrb[0].mxu0 %v2451
    %v4170 = vpop.f32.mrb[0].mxu0
    %v4171 = vadd.f32 %v2778, %v4170
    %v4172 = vpop.f32.mrb[0].mxu0
    %v4173 = vpop.f32.mrb[0].mxu0
    %v4174 = vpop.f32.mrb[0].mxu0
    %4175 = vdwg.mxu0
    %4176 = vmatprep.subr.bf16.mxu0 0
    %4177 = vmatpush1.bf16.msra.mxu0 %v3549
    %4178 = vmatprep.subr.bf16.mxu0 0
    %4179 = vmatpush1.bf16.msra.mxu0 %v3552
    %4180 = vmatprep.subr.bf16.mxu0 0
    %4181 = vmatpush1.bf16.msra.mxu0 %v3555
    %4182 = vmatprep.subr.bf16.mxu0 0
    %4183 = vmatpush1.bf16.msra.mxu0 %v3558
    %4184 = vmatprep.subr.bf16.mxu0 0
    %4185 = vmatpush1.bf16.msra.mxu0 %v3561
    %4186 = vmatprep.subr.bf16.mxu0 0
    %4187 = vmatpush1.bf16.msra.mxu0 %v3564
    %4188 = vmatprep.subr.bf16.mxu0 0
    %4189 = vmatpush1.bf16.msra.mxu0 %v3567
    %4190 = vmatprep.subr.bf16.mxu0 0
    %4191 = vmatpush1.bf16.msra.mxu0 %v3570
    %4192 = vmatprep.subr.bf16.mxu0 0
    %4193 = vmatpush1.bf16.msra.mxu0 %v3573
    %4194 = vmatprep.subr.bf16.mxu0 0
    %4195 = vmatpush1.bf16.msra.mxu0 %v3576
    %4196 = vmatprep.subr.bf16.mxu0 0
    %4197 = vmatpush1.bf16.msra.mxu0 %v3579
    %4198 = vmatprep.subr.bf16.mxu0 0
    %4199 = vmatpush1.bf16.msra.mxu0 %v3582
    %4200 = vmatprep.subr.bf16.mxu0 0
    %4201 = vmatpush1.bf16.msra.mxu0 %v3585
    %4202 = vmatprep.subr.bf16.mxu0 0
    %4203 = vmatpush1.bf16.msra.mxu0 %v3588
    %4204 = vmatprep.subr.bf16.mxu0 0
    %4205 = vmatpush1.bf16.msra.mxu0 %v3591
    %4206 = vmatprep.subr.bf16.mxu0 0
    %4207 = vmatpush1.bf16.msra.mxu0 %v3594
    %4208 = vmatprep.mubr.bf16.mxu0 %v2454
    %4209 = vmatmul.mubr.bf16.gmra.mrb[0].mxu0 %v2453
    %v4210 = vpop.f32.mrb[0].mxu0
    %v4211 = vadd.f32 %v4171, %v4210
    %v4212 = vpop.f32.mrb[0].mxu0
    %v4213 = vpop.f32.mrb[0].mxu0
    %v4214 = vpop.f32.mrb[0].mxu0
    %4215 = vdwg.mxu0
    %4216 = vmatprep.subr.bf16.mxu0 0
    %4217 = vmatpush1.bf16.msra.mxu0 %v3597
    %4218 = vmatprep.subr.bf16.mxu0 0
    %4219 = vmatpush1.bf16.msra.mxu0 %v3600
    %4220 = vmatprep.subr.bf16.mxu0 0
    %4221 = vmatpush1.bf16.msra.mxu0 %v3603
    %4222 = vmatprep.subr.bf16.mxu0 0
    %4223 = vmatpush1.bf16.msra.mxu0 %v3606
    %4224 = vmatprep.subr.bf16.mxu0 0
    %4225 = vmatpush1.bf16.msra.mxu0 %v3609
    %4226 = vmatprep.subr.bf16.mxu0 0
    %4227 = vmatpush1.bf16.msra.mxu0 %v3612
    %4228 = vmatprep.subr.bf16.mxu0 0
    %4229 = vmatpush1.bf16.msra.mxu0 %v3615
    %4230 = vmatprep.subr.bf16.mxu0 0
    %4231 = vmatpush1.bf16.msra.mxu0 %v3618
    %4232 = vmatprep.subr.bf16.mxu0 0
    %4233 = vmatpush1.bf16.msra.mxu0 %v3621
    %4234 = vmatprep.subr.bf16.mxu0 0
    %4235 = vmatpush1.bf16.msra.mxu0 %v3624
    %4236 = vmatprep.subr.bf16.mxu0 0
    %4237 = vmatpush1.bf16.msra.mxu0 %v3627
    %4238 = vmatprep.subr.bf16.mxu0 0
    %4239 = vmatpush1.bf16.msra.mxu0 %v3630
    %4240 = vmatprep.subr.bf16.mxu0 0
    %4241 = vmatpush1.bf16.msra.mxu0 %v3633
    %4242 = vmatprep.subr.bf16.mxu0 0
    %4243 = vmatpush1.bf16.msra.mxu0 %v3636
    %4244 = vmatprep.subr.bf16.mxu0 0
    %4245 = vmatpush1.bf16.msra.mxu0 %v3639
    %4246 = vmatprep.subr.bf16.mxu0 0
    %4247 = vmatpush1.bf16.msra.mxu0 %v3642
    %4248 = vmatprep.mubr.bf16.mxu0 %v2456
    %4249 = vmatmul.mubr.bf16.gmra.mrb[0].mxu0 %v2455
    %v4250 = vpop.f32.mrb[0].mxu0
    %v4251 = vadd.f32 %v4211, %v4250
    %v4252 = vpop.f32.mrb[0].mxu0
    %v4253 = vpop.f32.mrb[0].mxu0
    %v4254 = vpop.f32.mrb[0].mxu0
    %4255 = vdwg.mxu0
    %4256 = vmatprep.subr.bf16.mxu0 0
    %4257 = vmatpush1.bf16.msra.mxu0 %v3645
    %4258 = vmatprep.subr.bf16.mxu0 0
    %4259 = vmatpush1.bf16.msra.mxu0 %v3648
    %4260 = vmatprep.subr.bf16.mxu0 0
    %4261 = vmatpush1.bf16.msra.mxu0 %v3651
    %4262 = vmatprep.subr.bf16.mxu0 0
    %4263 = vmatpush1.bf16.msra.mxu0 %v3654
    %4264 = vmatprep.subr.bf16.mxu0 0
    %4265 = vmatpush1.bf16.msra.mxu0 %v3657
    %4266 = vmatprep.subr.bf16.mxu0 0
    %4267 = vmatpush1.bf16.msra.mxu0 %v3660
    %4268 = vmatprep.subr.bf16.mxu0 0
    %4269 = vmatpush1.bf16.msra.mxu0 %v3663
    %4270 = vmatprep.subr.bf16.mxu0 0
    %4271 = vmatpush1.bf16.msra.mxu0 %v3666
    %4272 = vmatprep.subr.bf16.mxu0 0
    %4273 = vmatpush1.bf16.msra.mxu0 %v3669
    %4274 = vmatprep.subr.bf16.mxu0 0
    %4275 = vmatpush1.bf16.msra.mxu0 %v3672
    %4276 = vmatprep.subr.bf16.mxu0 0
    %4277 = vmatpush1.bf16.msra.mxu0 %v3675
    %4278 = vmatprep.subr.bf16.mxu0 0
    %4279 = vmatpush1.bf16.msra.mxu0 %v3678
    %4280 = vmatprep.subr.bf16.mxu0 0
    %4281 = vmatpush1.bf16.msra.mxu0 %v3681
    %4282 = vmatprep.subr.bf16.mxu0 0
    %4283 = vmatpush1.bf16.msra.mxu0 %v3684
    %4284 = vmatprep.subr.bf16.mxu0 0
    %4285 = vmatpush1.bf16.msra.mxu0 %v3687
    %4286 = vmatprep.subr.bf16.mxu0 0
    %4287 = vmatpush1.bf16.msra.mxu0 %v3690
    %4288 = vmatprep.mubr.bf16.mxu0 %v2458
    %4289 = vmatmul.mubr.bf16.gmra.mrb[0].mxu0 %v2457
    %v4290 = vpop.f32.mrb[0].mxu0
    %v4291 = vadd.f32 %v4251, %v4290
    %v4292 = vpop.f32.mrb[0].mxu0
    %v4293 = vpop.f32.mrb[0].mxu0
    %v4294 = vpop.f32.mrb[0].mxu0
    %4295 = vdwg.mxu0
    %4296 = vmatprep.subr.bf16.mxu0 0
    %4297 = vmatpush1.bf16.msra.mxu0 %v3693
    %4298 = vmatprep.subr.bf16.mxu0 0
    %4299 = vmatpush1.bf16.msra.mxu0 %v3696
    %4300 = vmatprep.subr.bf16.mxu0 0
    %4301 = vmatpush1.bf16.msra.mxu0 %v3699
    %4302 = vmatprep.subr.bf16.mxu0 0
    %4303 = vmatpush1.bf16.msra.mxu0 %v3702
    %4304 = vmatprep.subr.bf16.mxu0 0
    %4305 = vmatpush1.bf16.msra.mxu0 %v3705
    %4306 = vmatprep.subr.bf16.mxu0 0
    %4307 = vmatpush1.bf16.msra.mxu0 %v3708
    %4308 = vmatprep.subr.bf16.mxu0 0
    %4309 = vmatpush1.bf16.msra.mxu0 %v3711
    %4310 = vmatprep.subr.bf16.mxu0 0
    %4311 = vmatpush1.bf16.msra.mxu0 %v3714
    %4312 = vmatprep.subr.bf16.mxu0 0
    %4313 = vmatpush1.bf16.msra.mxu0 0
    %4314 = vmatprep.subr.bf16.mxu0 0
    %4315 = vmatpush1.bf16.msra.mxu0 0
    %4316 = vmatprep.subr.bf16.mxu0 0
    %4317 = vmatpush1.bf16.msra.mxu0 0
    %4318 = vmatprep.subr.bf16.mxu0 0
    %4319 = vmatpush1.bf16.msra.mxu0 0
    %4320 = vmatprep.subr.bf16.mxu0 0
    %4321 = vmatpush1.bf16.msra.mxu0 0
    %4322 = vmatprep.subr.bf16.mxu0 0
    %4323 = vmatpush1.bf16.msra.mxu0 0
    %4324 = vmatprep.subr.bf16.mxu0 0
    %4325 = vmatpush1.bf16.msra.mxu0 0
    %4326 = vmatprep.subr.bf16.mxu0 0
    %4327 = vmatpush1.bf16.msra.mxu0 0
    %4328 = vmatprep.mubr.bf16.mxu0 0
    %4329 = vmatmul.mubr.bf16.gmra.mrb[0].mxu0 %v2459
    %v4330 = vpop.f32.mrb[0].mxu0
    %v4331 = vadd.f32 %v4291, %v4330
    %v4332 = vpop.f32.mrb[0].mxu0
    %v4333 = vpop.f32.mrb[0].mxu0
    %v4334 = vpop.f32.mrb[0].mxu0
    %4335 = vdwg.mxu0
    %v4336 = vmax.f32 %v4130, 0.0
    %v4337 = vmax.f32 %v4132, 0.0
    %v4338 = vmax.f32 %v4331, 0.0
    %v4339 = vrot.slane %v4336, 4
    %v4340 = vadd.f32 %v4336, %v4339
    %v4341 = vrot.slane %v4340, 2
    %v4342 = vadd.f32 %v4340, %v4341
    %v4343 = vrot.slane %v4342, 1
    %v4344 = vadd.f32 %v4342, %v4343
    %v4345 = vrot.slane %v4337, 4
    %v4346 = vadd.f32 %v4337, %v4345
    %v4347 = vrot.slane %v4346, 2
    %v4348 = vadd.f32 %v4346, %v4347
    %v4349 = vrot.slane %v4348, 1
    %v4350 = vadd.f32 %v4348, %v4349
    %v4351 = vrot.slane %v4338, 4
    %v4352 = vadd.f32 %v4338, %v4351
    %v4353 = vrot.slane %v4352, 2
    %v4354 = vadd.f32 %v4352, %v4353
    %v4355 = vrot.slane %v4354, 1
    %v4356 = vadd.f32 %v4354, %v4355
    %v4357 = vmul.f32 %v4344, %v1992
    %v4358 = vmul.f32 %v4350, %v1992
    %v4359 = vmul.f32 %v4356, %v1992
    %v4360 = vmul.f32 %v4336, %v4336
    %v4361 = vmul.f32 %v4337, %v4337
    %v4362 = vmul.f32 %v4338, %v4338
    %v4363 = vrot.slane %v4360, 4
    %v4364 = vadd.f32 %v4360, %v4363
    %v4365 = vrot.slane %v4364, 2
    %v4366 = vadd.f32 %v4364, %v4365
    %v4367 = vrot.slane %v4366, 1
    %v4368 = vadd.f32 %v4366, %v4367
    %v4369 = vrot.slane %v4361, 4
    %v4370 = vadd.f32 %v4361, %v4369
    %v4371 = vrot.slane %v4370, 2
    %v4372 = vadd.f32 %v4370, %v4371
    %v4373 = vrot.slane %v4372, 1
    %v4374 = vadd.f32 %v4372, %v4373
    %v4375 = vrot.slane %v4362, 4
    %v4376 = vadd.f32 %v4362, %v4375
    %v4377 = vrot.slane %v4376, 2
    %v4378 = vadd.f32 %v4376, %v4377
    %v4379 = vrot.slane %v4378, 1
    %v4380 = vadd.f32 %v4378, %v4379
    %v4381 = vmul.f32 %v4368, %v1992
    %v4382 = vmul.f32 %v4374, %v1992
    %v4383 = vmul.f32 %v4380, %v1992
    %v4384 = vmul.f32 %v4357, %v4357
    %v4385 = vmul.f32 %v4358, %v4358
    %v4386 = vmul.f32 %v4359, %v4359
    %v4387 = vsub.f32 %v4381, %v4384
    %v4388 = vsub.f32 %v4382, %v4385
    %v4389 = vsub.f32 %v4383, %v4386
    %v4390 = vmax.f32 %v4387, 0.0
    %v4391 = vmax.f32 %v4388, 0.0
    %v4392 = vmax.f32 %v4389, 0.0
    %v4393 = vsub.f32 %v4336, %v4357
    %v4394 = vsub.f32 %v4337, %v4358
    %v4395 = vsub.f32 %v4338, %v4359
    %v4396 = vlaneseq
    %v4397 = vshrl.u32 %v4396, 7
    %v4398 = vsub.s32 1, %v4397
    %v4399 = vrot.slane %v2748, %v4398
    %v4400 = vlaneseq
    %v4401 = vshrl.u32 %v4400, 7
    %v4402 = vsub.s32 5, %v4401
    %v4403 = vrot.slane %v2748, %v4402
    %v4404 = vlaneseq
    %v4405 = vshrl.u32 %v4404, 7
    %v4406 = vsub.s32 1, %v4405
    %v4407 = vrot.slane %v2749, %v4406
    %v4411 = vlaneseq
    %v4412 = vshrl.u32 %v4411, 7
    %v4413 = vsub.s32 1, %v4412
    %v4414 = vrot.slane %v4399, %v4413
    %v4415 = vlaneseq
    %v4416 = vshrl.u32 %v4415, 7
    %v4417 = vsub.s32 1, %v4416
    %v4418 = vrot.slane %v4403, %v4417
    %v4419 = vlaneseq
    %v4420 = vshrl.u32 %v4419, 7
    %v4421 = vsub.s32 1, %v4420
    %v4422 = vrot.slane %v4407, %v4421
    %v4423 = vmul.f32 %v4414, %v4393
    %v4424 = vmul.f32 %v4418, %v4394
    %v4425 = vmul.f32 %v4422, %v4395
    %v4426 = vadd.f32 %v4390, 1e-05
    %v4427 = vadd.f32 %v4391, 1e-05
    %v4428 = vadd.f32 %v4392, 1e-05
    %v4429 = vrsqrt.pop %v4426
    %v4430 = vrsqrt.pop %v4427
    %v4431 = vrsqrt.pop %v4428
    %v4432 = vmul.f32 %v4423, %v4429
    %v4433 = vmul.f32 %v4424, %v4430
    %v4434 = vmul.f32 %v4425, %v4431
    %v4435 = vlaneseq
    %v4436 = vshrl.u32 %v4435, 7
    %v4437 = vsub.s32 2, %v4436
    %v4438 = vrot.slane %v2748, %v4437
    %v4439 = vlaneseq
    %v4440 = vshrl.u32 %v4439, 7
    %v4441 = vsub.s32 6, %v4440
    %v4442 = vrot.slane %v2748, %v4441
    %v4443 = vlaneseq
    %v4444 = vshrl.u32 %v4443, 7
    %v4445 = vsub.s32 2, %v4444
    %v4446 = vrot.slane %v2749, %v4445
    %v4450 = vlaneseq
    %v4451 = vshrl.u32 %v4450, 7
    %v4452 = vsub.s32 2, %v4451
    %v4453 = vrot.slane %v4438, %v4452
    %v4454 = vlaneseq
    %v4455 = vshrl.u32 %v4454, 7
    %v4456 = vsub.s32 2, %v4455
    %v4457 = vrot.slane %v4442, %v4456
    %v4458 = vlaneseq
    %v4459 = vshrl.u32 %v4458, 7
    %v4460 = vsub.s32 2, %v4459
    %v4461 = vrot.slane %v4446, %v4460
    %v4462 = vadd.f32 %v4432, %v4453
    %v4463 = vadd.f32 %v4433, %v4457
    %v4464 = vadd.f32 %v4434, %v4461
    %v4465 = vld [vmem:[%s7] sm:$0xff]
    %v4466 = vld [vmem:[%s7 + $0x8] sm:$0xff]
    %v4467 = vld [vmem:[%s7 + $0x10] sm:$0xff]
    %v4468 = vld [vmem:[%s7 + $0x18] sm:$0xff]
    %v4469 = vld [vmem:[%s7 + $0x20] sm:$0xff]
    %v4470 = vld [vmem:[%s7 + $0x28] sm:$0xff]
    %v4471 = vld [vmem:[%s7 + $0x30] sm:$0xff]
    %v4472 = vld [vmem:[%s7 + $0x38] sm:$0xff]
    %v4473 = vld [vmem:[%s7 + $0x40] sm:$0xff]
    %v4474 = vld [vmem:[%s7 + $0x48] sm:$0xff]
    %v4475 = vld [vmem:[%s7 + $0x50] sm:$0xff]
    %v4476 = vld [vmem:[%s7 + $0x58] sm:$0xff]
    %v4477 = vld [vmem:[%s7 + $0x60] sm:$0xff]
    %v4478 = vld [vmem:[%s7 + $0x68] sm:$0xff]
    %v4479 = vld [vmem:[%s7 + $0x70] sm:$0xff]
    %v4480 = vld [vmem:[%s7 + $0x78] sm:$0xff]
    %v4481 = vld [vmem:[%s7 + $0x80] sm:$0xff]
    %v4482 = vld [vmem:[%s7 + $0x88] sm:$0xff]
    %v4483 = vld [vmem:[%s7 + $0x90] sm:$0xff]
    %v4484 = vld [vmem:[%s7 + $0x98] sm:$0xff]
    %v4485 = vld [vmem:[%s7 + $0xa0] sm:$0xff]
    %v4486 = vld [vmem:[%s7 + $0xa8] sm:$0xff]
    %v4487 = vld [vmem:[%s7 + $0xb0] sm:$0xff]
    %v4488 = vld [vmem:[%s7 + $0xb8] sm:$0xff]
    %v4489 = vld [vmem:[%s7 + $0xc0] sm:$0xff]
    %v4490 = vld [vmem:[%s7 + $0xc8] sm:$0xff]
    %v4491 = vld [vmem:[%s7 + $0xd0] sm:$0xff]
    %v4492 = vld [vmem:[%s7 + $0xd8] sm:$0xff]
    %v4493 = vld [vmem:[%s7 + $0xe0] sm:$0xff]
    %v4494 = vld [vmem:[%s7 + $0xe8] sm:$0xff]
    %v4495 = vld [vmem:[%s7 + $0xf0] sm:$0xff]
    %v4496 = vld [vmem:[%s7 + $0xf8] sm:$0xff]
    %v4497 = vld [vmem:[%s7 + $0x100] sm:$0xff]
    %v4498 = vld [vmem:[%s7 + $0x108] sm:$0xff]
    %v4499 = vld [vmem:[%s7 + $0x110] sm:$0xff]
    %v4500 = vld [vmem:[%s7 + $0x118] sm:$0xff]
    %v4501 = vld [vmem:[%s7 + $0x120] sm:$0xff]
    %v4502 = vld [vmem:[%s7 + $0x128] sm:$0xff]
    %v4503 = vld [vmem:[%s7 + $0x130] sm:$0xff]
    %v4504 = vld [vmem:[%s7 + $0x138] sm:$0xff]
    %v4505 = vld [vmem:[%s7 + $0x140] sm:$0xff]
    %v4506 = vld [vmem:[%s7 + $0x148] sm:$0xff]
    %v4507 = vld [vmem:[%s7 + $0x150] sm:$0xff]
    %v4508 = vld [vmem:[%s7 + $0x158] sm:$0xff]
    %v4509 = vld [vmem:[%s7 + $0x160] sm:$0xff]
    %v4510 = vld [vmem:[%s7 + $0x168] sm:$0xff]
    %v4511 = vld [vmem:[%s7 + $0x170] sm:$0xff]
    %v4512 = vld [vmem:[%s7 + $0x178] sm:$0xff]
    %v4513 = vld [vmem:[%s8] sm:$0x1]
    %v4515 = vlaneseq
    %v4516 = vshrl.u32 %v4515, 7
    %v4517 = vsub.s32 0, %v4516
    %v4518 = vrot.slane %v4513, %v4517
    %4520 = vmatprep.subr.mxu0 0.0
    %4521 = vmatpush1.msra.mxu0 %v4465
    %4522 = vmatprep.subr.mxu0 0.0
    %4523 = vmatpush1.msra.mxu0 %v4466
    %4524 = vmatprep.subr.mxu0 0.0
    %4525 = vmatpush1.msra.mxu0 %v4467
    %4526 = vmatprep.subr.mxu0 0.0
    %4527 = vmatpush1.msra.mxu0 %v4468
    %4528 = vmatprep.subr.mxu0 0.0
    %4529 = vmatpush1.msra.mxu0 %v4469
    %4530 = vmatprep.subr.mxu0 0.0
    %4531 = vmatpush1.msra.mxu0 %v4470
    %4532 = vmatprep.subr.mxu0 0.0
    %4533 = vmatpush1.msra.mxu0 %v4471
    %4534 = vmatprep.subr.mxu0 0.0
    %4535 = vmatpush1.msra.mxu0 %v4472
    %4536 = vmatprep.subr.mxu0 0.0
    %4537 = vmatpush1.msra.mxu0 %v4473
    %4538 = vmatprep.subr.mxu0 0.0
    %4539 = vmatpush1.msra.mxu0 %v4474
    %4540 = vmatprep.subr.mxu0 0.0
    %4541 = vmatpush1.msra.mxu0 %v4475
    %4542 = vmatprep.subr.mxu0 0.0
    %4543 = vmatpush1.msra.mxu0 %v4476
    %4544 = vmatprep.subr.mxu0 0.0
    %4545 = vmatpush1.msra.mxu0 %v4477
    %4546 = vmatprep.subr.mxu0 0.0
    %4547 = vmatpush1.msra.mxu0 %v4478
    %4548 = vmatprep.subr.mxu0 0.0
    %4549 = vmatpush1.msra.mxu0 %v4479
    %4550 = vmatprep.subr.mxu0 0.0
    %4551 = vmatpush1.msra.mxu0 %v4480
    %4552 = vmatprep.subr.mxu0 0.0
    %4553 = vmatpush1.msra.mxu0 %v4481
    %4554 = vmatprep.subr.mxu0 0.0
    %4555 = vmatpush1.msra.mxu0 %v4482
    %4556 = vmatprep.subr.mxu0 0.0
    %4557 = vmatpush1.msra.mxu0 %v4483
    %4558 = vmatprep.subr.mxu0 0.0
    %4559 = vmatpush1.msra.mxu0 %v4484
    %4560 = vmatprep.subr.mxu0 0.0
    %4561 = vmatpush1.msra.mxu0 %v4485
    %4562 = vmatprep.subr.mxu0 0.0
    %4563 = vmatpush1.msra.mxu0 %v4486
    %4564 = vmatprep.subr.mxu0 0.0
    %4565 = vmatpush1.msra.mxu0 %v4487
    %4566 = vmatprep.subr.mxu0 0.0
    %4567 = vmatpush1.msra.mxu0 %v4488
    %4568 = vmatprep.subr.mxu0 0.0
    %4569 = vmatpush1.msra.mxu0 %v4489
    %4570 = vmatprep.subr.mxu0 0.0
    %4571 = vmatpush1.msra.mxu0 %v4490
    %4572 = vmatprep.subr.mxu0 0.0
    %4573 = vmatpush1.msra.mxu0 %v4491
    %4574 = vmatprep.subr.mxu0 0.0
    %4575 = vmatpush1.msra.mxu0 %v4492
    %4576 = vmatprep.subr.mxu0 0.0
    %4577 = vmatpush1.msra.mxu0 %v4493
    %4578 = vmatprep.subr.mxu0 0.0
    %4579 = vmatpush1.msra.mxu0 %v4494
    %4580 = vmatprep.subr.mxu0 0.0
    %4581 = vmatpush1.msra.mxu0 %v4495
    %4582 = vmatprep.subr.mxu0 0.0
    %4583 = vmatpush1.msra.mxu0 %v4496
    %4584 = vmatprep.mubr.f32.mxu0 %v4463
    %4585 = vmatmul.mubr.f32.gmra.mrb[0].mxu0 %v4462
    %v4586 = vpop.f32.mrb[0].mxu0
    %v4587 = vadd.f32 %v4518, %v4586
    %v4588 = vpop.f32.mrb[0].mxu0
    %4589 = vdwg.mxu0
    %4590 = vmatprep.subr.mxu0 0.0
    %4591 = vmatpush1.msra.mxu0 %v4497
    %4592 = vmatprep.subr.mxu0 0.0
    %4593 = vmatpush1.msra.mxu0 %v4498
    %4594 = vmatprep.subr.mxu0 0.0
    %4595 = vmatpush1.msra.mxu0 %v4499
    %4596 = vmatprep.subr.mxu0 0.0
    %4597 = vmatpush1.msra.mxu0 %v4500
    %4598 = vmatprep.subr.mxu0 0.0
    %4599 = vmatpush1.msra.mxu0 %v4501
    %4600 = vmatprep.subr.mxu0 0.0
    %4601 = vmatpush1.msra.mxu0 %v4502
    %4602 = vmatprep.subr.mxu0 0.0
    %4603 = vmatpush1.msra.mxu0 %v4503
    %4604 = vmatprep.subr.mxu0 0.0
    %4605 = vmatpush1.msra.mxu0 %v4504
    %4606 = vmatprep.subr.mxu0 0.0
    %4607 = vmatpush1.msra.mxu0 %v4505
    %4608 = vmatprep.subr.mxu0 0.0
    %4609 = vmatpush1.msra.mxu0 %v4506
    %4610 = vmatprep.subr.mxu0 0.0
    %4611 = vmatpush1.msra.mxu0 %v4507
    %4612 = vmatprep.subr.mxu0 0.0
    %4613 = vmatpush1.msra.mxu0 %v4508
    %4614 = vmatprep.subr.mxu0 0.0
    %4615 = vmatpush1.msra.mxu0 %v4509
    %4616 = vmatprep.subr.mxu0 0.0
    %4617 = vmatpush1.msra.mxu0 %v4510
    %4618 = vmatprep.subr.mxu0 0.0
    %4619 = vmatpush1.msra.mxu0 %v4511
    %4620 = vmatprep.subr.mxu0 0.0
    %4621 = vmatpush1.msra.mxu0 %v4512
    %4622 = vmatprep.subr.mxu0 0.0
    %4623 = vmatpush1.msra.mxu0 0.0
    %4624 = vmatprep.subr.mxu0 0.0
    %4625 = vmatpush1.msra.mxu0 0.0
    %4626 = vmatprep.subr.mxu0 0.0
    %4627 = vmatpush1.msra.mxu0 0.0
    %4628 = vmatprep.subr.mxu0 0.0
    %4629 = vmatpush1.msra.mxu0 0.0
    %4630 = vmatprep.subr.mxu0 0.0
    %4631 = vmatpush1.msra.mxu0 0.0
    %4632 = vmatprep.subr.mxu0 0.0
    %4633 = vmatpush1.msra.mxu0 0.0
    %4634 = vmatprep.subr.mxu0 0.0
    %4635 = vmatpush1.msra.mxu0 0.0
    %4636 = vmatprep.subr.mxu0 0.0
    %4637 = vmatpush1.msra.mxu0 0.0
    %4638 = vmatprep.subr.mxu0 0.0
    %4639 = vmatpush1.msra.mxu0 0.0
    %4640 = vmatprep.subr.mxu0 0.0
    %4641 = vmatpush1.msra.mxu0 0.0
    %4642 = vmatprep.subr.mxu0 0.0
    %4643 = vmatpush1.msra.mxu0 0.0
    %4644 = vmatprep.subr.mxu0 0.0
    %4645 = vmatpush1.msra.mxu0 0.0
    %4646 = vmatprep.subr.mxu0 0.0
    %4647 = vmatpush1.msra.mxu0 0.0
    %4648 = vmatprep.subr.mxu0 0.0
    %4649 = vmatpush1.msra.mxu0 0.0
    %4650 = vmatprep.subr.mxu0 0.0
    %4651 = vmatpush1.msra.mxu0 0.0
    %4652 = vmatprep.subr.mxu0 0.0
    %4653 = vmatpush1.msra.mxu0 0.0
    %4654 = vmatprep.mubr.f32.mxu0 0.0
    %4655 = vmatmul.mubr.f32.gmra.mrb[0].mxu0 %v4464
    %v4656 = vpop.f32.mrb[0].mxu0
    %v4657 = vadd.f32 %v4587, %v4656
    %v4658 = vpop.f32.mrb[0].mxu0
    %4659 = vdwg.mxu0
    %vm4660 = vcmask 97280
    %4661 = vst.msk [vmem:[%s10] sm:$0xff] %vm4660, %v4657
    // Predicated region
    $region46: #{predictor_pallas.1} parent=1 // pred_check
      _
    $region47: #{predictor_pallas.1} parent=1 // pred_check_branch
      %4663 = sbr.rel (0) target = $region49
    $region48: #{predictor_pallas.1} parent=1 // pred_region
      _
    $region49: #{predictor_pallas.1} parent=1 // pred_fallthru
      _
    // Predicated region
    $region50: #{predictor_pallas.1} parent=1 // pred_check
      _
    $region51: #{predictor_pallas.1} parent=1 // pred_check_branch
      %4665 = sbr.rel (0) target = $region53
    $region52: #{predictor_pallas.1} parent=1 // pred_region
      _
    $region53: #{predictor_pallas.1} parent=1 // pred_fallthru
      _
    // Predicated region
    $region54: #{predictor_pallas.1} parent=1 // pred_check
      _
    $region55: #{predictor_pallas.1} parent=1 // pred_check_branch
      %4667 = sbr.rel (0) target = $region57
    $region56: #{predictor_pallas.1} parent=1 // pred_region
      _
    $region57: #{predictor_pallas.1} parent=1 // pred_fallthru
      _
    // Predicated region
    $region58: #{predictor_pallas.1} parent=1 // pred_check
      _
    $region59: #{predictor_pallas.1} parent=1 // pred_check_branch
      %4669 = sbr.rel (0) target = $region61
    $region60: #{predictor_pallas.1} parent=1 // pred_region
      _
    $region61: #{predictor_pallas.1} parent=1 // pred_fallthru
      _
    %4670 = vsyncpa [#allocation3], 1
    %4671 = vsyncpa [#allocation5], 1

</llo_original>
